<compile_context>
chip_gen: v6e
topology: v6e:2x2x1
jax: 0.10.0
libtpu: 0.0.40
codegen_flags: <defaults>
</compile_context>

<pallas_src>
import functools
import math

import jax
import jax.numpy as jnp
from jax import lax
from jax.experimental import pallas as pl
from jax.experimental.pallas import tpu as pltpu


def _round_up(n, m):
    return ((n + m - 1) // m) * m


def _multidae_kernel(n_layers, act_dtype, x_ref, *refs):
    """refs = (w0,b0, ..., w_{L-2},b_{L-2}, w_last_chunk, b_last_chunk,
               out_ref, h_pre_scratch)."""
    out_ref = refs[-2]
    h_pre = refs[-1]                                   # bf16 VMEM scratch
    w_last = refs[2 * (n_layers - 1)]                  # bf16 [d_pre, tn]
    b_last = refs[2 * (n_layers - 1) + 1]              # f32  [1, tn]

    # Encoder + middle layers: computed once per batch tile, cached in VMEM.
    @pl.when(pl.program_id(1) == 0)
    def _():
        x = x_ref[...].astype(jnp.float32)
        # F.normalize(input, p=2, eps=1e-12):
        #   x / max(||x||_2, eps) == x * rsqrt(max(||x||_2^2, eps^2))  (EUP rsqrt)
        ssq = jnp.sum(x * x, axis=-1, keepdims=True)
        h = (x * lax.rsqrt(jnp.maximum(ssq, 1e-24))).astype(jnp.bfloat16)
        # TODO(synk): nn.Dropout is identity at inference; training-mode dropout
        # would use pltpu.prng_seed / pltpu.stateful_bernoulli here.
        for i in range(n_layers - 1):
            w = refs[2 * i][...]                               # bf16 [d_in, d_out]
            b = refs[2 * i + 1][...].astype(act_dtype)         # [1, d_out]
            acc = jnp.dot(h, w, preferred_element_type=jnp.float32)
            h = jnp.tanh(acc.astype(act_dtype) + b).astype(jnp.bfloat16)
        h_pre[...] = h

    # Last layer (no tanh): one lane-dense output chunk per grid step.
    acc = jnp.dot(h_pre[...], w_last[...], preferred_element_type=jnp.float32)
    out_ref[...] = (acc + b_last[...].astype(jnp.float32)).astype(out_ref.dtype)


def multidae_forward(x, weights, biases, *, batch_tile=None, last_chunk=2048,
                     input_dtype=jnp.bfloat16, strip_padding=True):
    """x: [B, dims[0]]; weights[i]: [d_in, d_out] (already transposed from the
    PyTorch [out, in] layout); biases[i]: [d_out]. Returns bf16 logits.

    input_dtype=bf16 is exact for 0/1 or small-integer implicit-feedback count
    vectors; pass jnp.float32 for general real-valued inputs."""
    n_layers = len(weights)
    B, d0 = x.shape
    dims = [weights[0].shape[0]] + [w.shape[1] for w in weights]
    assert d0 == dims[0]

    # ---- chip-aware defaults ----
    try:
        kind = jax.devices()[0].device_kind.lower()
    except Exception:
        kind = ""
    old_gen = any(t in kind for t in ("v2", "v3", "v4", "v5"))
    if batch_tile is None:
        batch_tile = 128 if old_gen else 256      # 256x256 MXU on v6e/v7x
    act_dtype = jnp.float32 if old_gen else jnp.bfloat16  # v5e: no bf16 VPU/EUP

    try:
        vmem_cap = int(pltpu.get_tpu_info().vmem_capacity_bytes)
        vmem_limit = int(0.85 * vmem_cap)
    except Exception:
        vmem_limit = 64 * 1024 * 1024

    # ---- lane-align feature dims; chunk the last (n_items-wide) layer ----
    pdims = [_round_up(d, 128) for d in dims]
    tn = min(_round_up(last_chunk, 128), pdims[-1])
    pdims[-1] = _round_up(pdims[-1], tn)
    n_chunks = pdims[-1] // tn

    # ---- batch tile chosen to minimize pad waste for awkward B ----
    n_btiles = max(1, math.ceil(B / batch_tile))
    tb = _round_up(math.ceil(B / n_btiles), 8)
    Bp = n_btiles * tb

    xp = x.astype(input_dtype)
    if pdims[0] != dims[0] or Bp != B:
        # Zero rows / columns change neither the L2 norm nor the matmuls.
        xp = jnp.pad(xp, ((0, Bp - B), (0, pdims[0] - dims[0])))

    wps, bps = [], []
    for li, (w, b) in enumerate(zip(weights, biases)):
        d_in, d_out = w.shape
        wp = jnp.pad(w, ((0, pdims[li] - d_in), (0, pdims[li + 1] - d_out)))
        bp = jnp.pad(b.reshape(1, -1), ((0, 0), (0, pdims[li + 1] - d_out)))
        wps.append(wp.astype(jnp.bfloat16))      # halve HBM weight traffic
        bps.append(bp.astype(jnp.float32))

    grid = (Bp // tb, n_chunks)

    flops = 2 * Bp * sum(a * b for a, b in zip(pdims[:-1], pdims[1:]))
    transcendentals = Bp * (1 + sum(pdims[1:-1]))     # rsqrt + tanh
    bytes_accessed = (
        xp.size * xp.dtype.itemsize
        + sum(w.size * 2 for w in wps)
        + sum(b.size * 4 for b in bps)
        + Bp * pdims[-1] * 2)                         # bf16 logits writeback

    def build(single_buffer_resident):
        def res_spec(shape):
            # Constant index_map => loaded once, stays resident in VMEM.
            if single_buffer_resident:
                return pl.BlockSpec(shape, lambda i, j: (0, 0),
                                    pipeline_mode=pl.Buffered(1))
            return pl.BlockSpec(shape, lambda i, j: (0, 0))

        in_specs = [pl.BlockSpec((tb, pdims[0]), lambda i, j: (i, 0))]
        for li in range(n_layers - 1):
            in_specs.append(res_spec(wps[li].shape))
            in_specs.append(res_spec(bps[li].shape))
        # Last-layer weight/bias streamed per output chunk (double-buffered so
        # the weight DMA overlaps the MXU; bounds VMEM at production n_items).
        in_specs.append(pl.BlockSpec((pdims[-2], tn), lambda i, j: (0, j)))
        in_specs.append(pl.BlockSpec((1, tn), lambda i, j: (0, j)))
        out_specs = pl.BlockSpec((tb, tn), lambda i, j: (i, j))

        return pl.pallas_call(
            functools.partial(_multidae_kernel, n_layers, act_dtype),
            out_shape=jax.ShapeDtypeStruct((Bp, pdims[-1]), jnp.bfloat16),
            grid=grid,
            in_specs=in_specs,
            out_specs=out_specs,
            scratch_shapes=[pltpu.VMEM((tb, pdims[-2]), jnp.bfloat16)],
            compiler_params=pltpu.CompilerParams(
                dimension_semantics=("parallel", "arbitrary"),
                vmem_limit_bytes=vmem_limit),
            cost_estimate=pl.CostEstimate(
                flops=flops,
                transcendentals=transcendentals,
                bytes_accessed=bytes_accessed),
        )

    operands = [xp]
    for wp, bp in zip(wps, bps):
        operands += [wp, bp]

    try:
        out = build(True)(*operands)
    except Exception:
        # pipeline_mode=pl.Buffered(1) unsupported on this jax build; fall back
        # to default (double) buffering for the resident weights.
        out = build(False)(*operands)

    if strip_padding and (Bp != B or pdims[-1] != dims[-1]):
        # Only slice when padding actually occurred; at production sizes prefer
        # consuming the padded logits downstream to avoid an extra full-matrix
        # HBM read+write.
        out = out[:B, :dims[-1]]
    return out


def init_multidae_params(key, p_dims, q_dims=None):
    """Deterministic init mirroring MultiDAE.init_weights()."""
    if q_dims:
        assert q_dims[0] == p_dims[-1]
        assert q_dims[-1] == p_dims[0]
    else:
        q_dims = p_dims[::-1]
    dims = q_dims + p_dims[1:]

    weights_t, biases = [], []
    for d_in, d_out in zip(dims[:-1], dims[1:]):
        key, kw, kb = jax.random.split(key, 3)
        std = (2.0 / (d_in + d_out)) ** 0.5
        # PyTorch stores weight as [out, in]; sample then transpose to [in, out].
        w = std * jax.random.normal(kw, (d_out, d_in), dtype=jnp.float32)
        b = 0.001 * jax.random.normal(kb, (d_out,), dtype=jnp.float32)
        weights_t.append(jnp.transpose(w))  # [in, out]
        biases.append(b)                    # [out]
    return dims, weights_t, biases


def _reference_forward(x, weights, biases):
    """Pure-JAX f32 reference for sanity checking."""
    ssq = jnp.sum(x * x, axis=-1, keepdims=True)
    h = x / jnp.maximum(jnp.sqrt(ssq), 1e-12)
    n = len(weights)
    for i, (w, b) in enumerate(zip(weights, biases)):
        h = jnp.dot(h, w, precision=lax.Precision.HIGHEST) + b[None, :]
        if i != n - 1:
            h = jnp.tanh(h)
    return h


if __name__ == "__main__":
    key = jax.random.PRNGKey(0)

    # Small MultiDAE: p_dims = [latent, hidden, n_items]
    p_dims = [32, 64, 256]
    batch = 200  # deliberately not a tile multiple

    key, k_init, k_x = jax.random.split(key, 3)
    dims, weights, biases = init_multidae_params(k_init, p_dims)

    # Input: implicit-feedback vector over n_items = p_dims[-1]
    x = jax.random.uniform(k_x, (batch, dims[0]), dtype=jnp.float32)

    ref = _reference_forward(x, weights, biases)

    # Config 1: chip-aware defaults (single last-layer chunk at this size).
    out = multidae_forward(x, weights, biases)
    out = jax.block_until_ready(out)
    assert out.shape == (batch, p_dims[-1]), out.shape
    assert jnp.allclose(out.astype(jnp.float32), ref, atol=2e-2, rtol=2e-2)

    # Config 2: force small batch tile + 2 last-layer chunks to exercise the
    # streamed-chunk / scratch-reuse path and the padding strip.
    out2 = multidae_forward(x, weights, biases, batch_tile=128, last_chunk=128)
    out2 = jax.block_until_ready(out2)
    assert out2.shape == (batch, p_dims[-1]), out2.shape
    assert jnp.allclose(out2.astype(jnp.float32), ref, atol=2e-2, rtol=2e-2)

    print("KERNEL_OK")
</pallas_src>

<mosaic_0001>
module attributes {stable_mosaic.version = 11 : i64} {
  func.func @_multidae_kernel(%arg0: i32, %arg1: i32, %arg2: memref<200x256xbf16, #tpu.memory_space<vmem>>, %arg3: memref<256x128xbf16, #tpu.memory_space<vmem>>, %arg4: memref<1x128xf32, #tpu.memory_space<vmem>>, %arg5: memref<128x128xbf16, #tpu.memory_space<vmem>>, %arg6: memref<1x128xf32, #tpu.memory_space<vmem>>, %arg7: memref<128x128xbf16, #tpu.memory_space<vmem>>, %arg8: memref<1x128xf32, #tpu.memory_space<vmem>>, %arg9: memref<128x256xbf16, #tpu.memory_space<vmem>>, %arg10: memref<1x256xf32, #tpu.memory_space<vmem>>, %arg11: memref<200x256xbf16, #tpu.memory_space<vmem>>, %arg12: memref<200x128xbf16, #tpu.memory_space<vmem>>) attributes {dimension_semantics = [#tpu.dimension_semantics<parallel>, #tpu.dimension_semantics<arbitrary>], iteration_bounds = array<i64: 1, 1>, scalar_prefetch = 0 : i64, scratch_operands = 1 : i64, tpu.core_type = #tpu.core_type<tc>, window_params = [{transform_indices = @transform_0, window_bounds = array<i64: 200, 256>}, {pipeline_mode = #tpu.pipeline_mode<synchronous>, transform_indices = @transform_1, window_bounds = array<i64: 256, 128>}, {pipeline_mode = #tpu.pipeline_mode<synchronous>, transform_indices = @transform_2, window_bounds = array<i64: 1, 128>}, {pipeline_mode = #tpu.pipeline_mode<synchronous>, transform_indices = @transform_3, window_bounds = array<i64: 128, 128>}, {pipeline_mode = #tpu.pipeline_mode<synchronous>, transform_indices = @transform_4, window_bounds = array<i64: 1, 128>}, {pipeline_mode = #tpu.pipeline_mode<synchronous>, transform_indices = @transform_5, window_bounds = array<i64: 128, 128>}, {pipeline_mode = #tpu.pipeline_mode<synchronous>, transform_indices = @transform_6, window_bounds = array<i64: 1, 128>}, {transform_indices = @transform_7, window_bounds = array<i64: 128, 256>}, {transform_indices = @transform_8, window_bounds = array<i64: 1, 256>}, {transform_indices = @transform_9, window_bounds = array<i64: 200, 256>}]} {
    %c0_i32 = arith.constant 0 : i32
    %0 = arith.cmpi eq, %arg1, %c0_i32 : i32
    %1 = arith.extui %0 : i1 to i32
    %c0_i32_0 = arith.constant 0 : i32
    %2 = arith.cmpi ne, %1, %c0_i32_0 : i32
    scf.if %2 {
      %c0_8 = arith.constant 0 : index
      %c0_9 = arith.constant 0 : index
      %11 = vector.load %arg2[%c0_8, %c0_9] : memref<200x256xbf16, #tpu.memory_space<vmem>>, vector<200x256xbf16>
      %12 = arith.extf %11 : vector<200x256xbf16> to vector<200x256xf32>
      %13 = arith.mulf %12, %12 : vector<200x256xf32>
      %cst_10 = arith.constant dense<0.000000e+00> : vector<200xf32>
      %14 = vector.multi_reduction <add>, %13, %cst_10 [1] : vector<200x256xf32> to vector<200xf32>
      %15 = vector.shape_cast %14 : vector<200xf32> to vector<200x1xf32>
      %cst_11 = arith.constant 1.000000e-24 : f32
      %16 = vector.broadcast %cst_11 : f32 to vector<200x1xf32>
      %17 = arith.maximumf %15, %16 : vector<200x1xf32>
      %18 = math.rsqrt %17 : vector<200x1xf32>
      %19 = vector.broadcast %18 : vector<200x1xf32> to vector<200x256xf32>
      %20 = arith.mulf %12, %19 : vector<200x256xf32>
      %21 = arith.truncf %20 : vector<200x256xf32> to vector<200x256xbf16>
      %c0_12 = arith.constant 0 : index
      %c0_13 = arith.constant 0 : index
      %22 = vector.load %arg3[%c0_12, %c0_13] : memref<256x128xbf16, #tpu.memory_space<vmem>>, vector<256x128xbf16>
      %c0_14 = arith.constant 0 : index
      %c0_15 = arith.constant 0 : index
      %23 = vector.load %arg4[%c0_14, %c0_15] : memref<1x128xf32, #tpu.memory_space<vmem>>, vector<1x128xf32>
      %24 = arith.truncf %23 : vector<1x128xf32> to vector<1x128xbf16>
      %cst_16 = arith.constant dense<0.000000e+00> : vector<200x128xf32>
      %25 = tpu.matmul %21, %22, %cst_16 {dimension_numbers = #tpu.dot_dimension_numbers<[1], [0], [0], [1], [0, 0, 1, 1], [], []>} : vector<200x256xbf16>, vector<256x128xbf16>, vector<200x128xf32> -> vector<200x128xf32>
      %26 = arith.truncf %25 : vector<200x128xf32> to vector<200x128xbf16>
      %27 = vector.broadcast %24 : vector<1x128xbf16> to vector<200x128xbf16>
      %28 = arith.addf %26, %27 : vector<200x128xbf16>
      %29 = math.tanh %28 : vector<200x128xbf16>
      %c0_17 = arith.constant 0 : index
      %c0_18 = arith.constant 0 : index
      %30 = vector.load %arg5[%c0_17, %c0_18] : memref<128x128xbf16, #tpu.memory_space<vmem>>, vector<128x128xbf16>
      %c0_19 = arith.constant 0 : index
      %c0_20 = arith.constant 0 : index
      %31 = vector.load %arg6[%c0_19, %c0_20] : memref<1x128xf32, #tpu.memory_space<vmem>>, vector<1x128xf32>
      %32 = arith.truncf %31 : vector<1x128xf32> to vector<1x128xbf16>
      %cst_21 = arith.constant dense<0.000000e+00> : vector<200x128xf32>
      %33 = tpu.matmul %29, %30, %cst_21 {dimension_numbers = #tpu.dot_dimension_numbers<[1], [0], [0], [1], [0, 0, 1, 1], [], []>} : vector<200x128xbf16>, vector<128x128xbf16>, vector<200x128xf32> -> vector<200x128xf32>
      %34 = arith.truncf %33 : vector<200x128xf32> to vector<200x128xbf16>
      %35 = vector.broadcast %32 : vector<1x128xbf16> to vector<200x128xbf16>
      %36 = arith.addf %34, %35 : vector<200x128xbf16>
      %37 = math.tanh %36 : vector<200x128xbf16>
      %c0_22 = arith.constant 0 : index
      %c0_23 = arith.constant 0 : index
      %38 = vector.load %arg7[%c0_22, %c0_23] : memref<128x128xbf16, #tpu.memory_space<vmem>>, vector<128x128xbf16>
      %c0_24 = arith.constant 0 : index
      %c0_25 = arith.constant 0 : index
      %39 = vector.load %arg8[%c0_24, %c0_25] : memref<1x128xf32, #tpu.memory_space<vmem>>, vector<1x128xf32>
      %40 = arith.truncf %39 : vector<1x128xf32> to vector<1x128xbf16>
      %cst_26 = arith.constant dense<0.000000e+00> : vector<200x128xf32>
      %41 = tpu.matmul %37, %38, %cst_26 {dimension_numbers = #tpu.dot_dimension_numbers<[1], [0], [0], [1], [0, 0, 1, 1], [], []>} : vector<200x128xbf16>, vector<128x128xbf16>, vector<200x128xf32> -> vector<200x128xf32>
      %42 = arith.truncf %41 : vector<200x128xf32> to vector<200x128xbf16>
      %43 = vector.broadcast %40 : vector<1x128xbf16> to vector<200x128xbf16>
      %44 = arith.addf %42, %43 : vector<200x128xbf16>
      %45 = math.tanh %44 : vector<200x128xbf16>
      %c0_27 = arith.constant 0 : index
      %c0_28 = arith.constant 0 : index
      %46 = vector.load %arg12[%c0_27, %c0_28] : memref<200x128xbf16, #tpu.memory_space<vmem>>, vector<200x128xbf16>
      tpu.vector_store %arg12[%c0_27, %c0_28], %45 {strides = array<i32>} : memref<200x128xbf16, #tpu.memory_space<vmem>>, vector<200x128xbf16>,
    } else {
    }
    %c0 = arith.constant 0 : index
    %c0_1 = arith.constant 0 : index
    %3 = vector.load %arg12[%c0, %c0_1] : memref<200x128xbf16, #tpu.memory_space<vmem>>, vector<200x128xbf16>
    %c0_2 = arith.constant 0 : index
    %c0_3 = arith.constant 0 : index
    %4 = vector.load %arg9[%c0_2, %c0_3] : memref<128x256xbf16, #tpu.memory_space<vmem>>, vector<128x256xbf16>
    %cst = arith.constant dense<0.000000e+00> : vector<200x256xf32>
    %5 = tpu.matmul %3, %4, %cst {dimension_numbers = #tpu.dot_dimension_numbers<[1], [0], [0], [1], [0, 0, 1, 1], [], []>} : vector<200x128xbf16>, vector<128x256xbf16>, vector<200x256xf32> -> vector<200x256xf32>
    %c0_4 = arith.constant 0 : index
    %c0_5 = arith.constant 0 : index
    %6 = vector.load %arg10[%c0_4, %c0_5] : memref<1x256xf32, #tpu.memory_space<vmem>>, vector<1x256xf32>
    %7 = vector.broadcast %6 : vector<1x256xf32> to vector<200x256xf32>
    %8 = arith.addf %5, %7 : vector<200x256xf32>
    %9 = arith.truncf %8 : vector<200x256xf32> to vector<200x256xbf16>
    %c0_6 = arith.constant 0 : index
    %c0_7 = arith.constant 0 : index
    %10 = vector.load %arg11[%c0_6, %c0_7] : memref<200x256xbf16, #tpu.memory_space<vmem>>, vector<200x256xbf16>
    tpu.vector_store %arg11[%c0_6, %c0_7], %9 {strides = array<i32>} : memref<200x256xbf16, #tpu.memory_space<vmem>>, vector<200x256xbf16>,
    return
  }
  func.func @transform_0(%arg0: i32, %arg1: i32) -> (i32, i32) {
    %c0_i32 = arith.constant 0 : i32
    %c0_i32_0 = arith.constant 0 : i32
    return %arg0, %c0_i32 : i32, i32
  }
  func.func @transform_1(%arg0: i32, %arg1: i32) -> (i32, i32) {
    %c0_i32 = arith.constant 0 : i32
    %c0_i32_0 = arith.constant 0 : i32
    %c0_i32_1 = arith.constant 0 : i32
    return %c0_i32, %c0_i32_0 : i32, i32
  }
  func.func @transform_2(%arg0: i32, %arg1: i32) -> (i32, i32) {
    %c0_i32 = arith.constant 0 : i32
    %c0_i32_0 = arith.constant 0 : i32
    %c0_i32_1 = arith.constant 0 : i32
    return %c0_i32, %c0_i32_0 : i32, i32
  }
  func.func @transform_3(%arg0: i32, %arg1: i32) -> (i32, i32) {
    %c0_i32 = arith.constant 0 : i32
    %c0_i32_0 = arith.constant 0 : i32
    %c0_i32_1 = arith.constant 0 : i32
    return %c0_i32, %c0_i32_0 : i32, i32
  }
  func.func @transform_4(%arg0: i32, %arg1: i32) -> (i32, i32) {
    %c0_i32 = arith.constant 0 : i32
    %c0_i32_0 = arith.constant 0 : i32
    %c0_i32_1 = arith.constant 0 : i32
    return %c0_i32, %c0_i32_0 : i32, i32
  }
  func.func @transform_5(%arg0: i32, %arg1: i32) -> (i32, i32) {
    %c0_i32 = arith.constant 0 : i32
    %c0_i32_0 = arith.constant 0 : i32
    %c0_i32_1 = arith.constant 0 : i32
    return %c0_i32, %c0_i32_0 : i32, i32
  }
  func.func @transform_6(%arg0: i32, %arg1: i32) -> (i32, i32) {
    %c0_i32 = arith.constant 0 : i32
    %c0_i32_0 = arith.constant 0 : i32
    %c0_i32_1 = arith.constant 0 : i32
    return %c0_i32, %c0_i32_0 : i32, i32
  }
  func.func @transform_7(%arg0: i32, %arg1: i32) -> (i32, i32) {
    %c0_i32 = arith.constant 0 : i32
    %c0_i32_0 = arith.constant 0 : i32
    return %c0_i32, %arg1 : i32, i32
  }
  func.func @transform_8(%arg0: i32, %arg1: i32) -> (i32, i32) {
    %c0_i32 = arith.constant 0 : i32
    %c0_i32_0 = arith.constant 0 : i32
    return %c0_i32, %arg1 : i32, i32
  }
  func.func @transform_9(%arg0: i32, %arg1: i32) -> (i32, i32) {
    %c0_i32 = arith.constant 0 : i32
    return %arg0, %arg1 : i32, i32
  }
}

module attributes {stable_mosaic.version = 11 : i64} {
  func.func @_multidae_kernel(%arg0: i32, %arg1: i32, %arg2: memref<200x256xbf16, #tpu.memory_space<vmem>>, %arg3: memref<256x128xbf16, #tpu.memory_space<vmem>>, %arg4: memref<1x128xf32, #tpu.memory_space<vmem>>, %arg5: memref<128x128xbf16, #tpu.memory_space<vmem>>, %arg6: memref<1x128xf32, #tpu.memory_space<vmem>>, %arg7: memref<128x128xbf16, #tpu.memory_space<vmem>>, %arg8: memref<1x128xf32, #tpu.memory_space<vmem>>, %arg9: memref<128x256xbf16, #tpu.memory_space<vmem>>, %arg10: memref<1x256xf32, #tpu.memory_space<vmem>>, %arg11: memref<200x256xbf16, #tpu.memory_space<vmem>>, %arg12: memref<200x128xbf16, #tpu.memory_space<vmem>>) attributes {dimension_semantics = [#tpu.dimension_semantics<parallel>, #tpu.dimension_semantics<arbitrary>], iteration_bounds = array<i64: 1, 1>, scalar_prefetch = 0 : i64, scratch_operands = 1 : i64, tpu.core_type = #tpu.core_type<tc>, window_params = [{transform_indices = @transform_0, window_bounds = array<i64: 200, 256>}, {pipeline_mode = #tpu.pipeline_mode<synchronous>, transform_indices = @transform_1, window_bounds = array<i64: 256, 128>}, {pipeline_mode = #tpu.pipeline_mode<synchronous>, transform_indices = @transform_2, window_bounds = array<i64: 1, 128>}, {pipeline_mode = #tpu.pipeline_mode<synchronous>, transform_indices = @transform_3, window_bounds = array<i64: 128, 128>}, {pipeline_mode = #tpu.pipeline_mode<synchronous>, transform_indices = @transform_4, window_bounds = array<i64: 1, 128>}, {pipeline_mode = #tpu.pipeline_mode<synchronous>, transform_indices = @transform_5, window_bounds = array<i64: 128, 128>}, {pipeline_mode = #tpu.pipeline_mode<synchronous>, transform_indices = @transform_6, window_bounds = array<i64: 1, 128>}, {transform_indices = @transform_7, window_bounds = array<i64: 128, 256>}, {transform_indices = @transform_8, window_bounds = array<i64: 1, 256>}, {transform_indices = @transform_9, window_bounds = array<i64: 200, 256>}]} {
    %c0_i32 = arith.constant 0 : i32
    %0 = arith.cmpi eq, %arg1, %c0_i32 : i32
    %1 = arith.extui %0 : i1 to i32
    %c0_i32_0 = arith.constant 0 : i32
    %2 = arith.cmpi ne, %1, %c0_i32_0 : i32
    scf.if %2 {
      %c0_8 = arith.constant 0 : index
      %c0_9 = arith.constant 0 : index
      %11 = vector.load %arg2[%c0_8, %c0_9] : memref<200x256xbf16, #tpu.memory_space<vmem>>, vector<200x256xbf16>
      %12 = arith.extf %11 : vector<200x256xbf16> to vector<200x256xf32>
      %13 = arith.mulf %12, %12 : vector<200x256xf32>
      %cst_10 = arith.constant dense<0.000000e+00> : vector<200xf32>
      %14 = vector.multi_reduction <add>, %13, %cst_10 [1] : vector<200x256xf32> to vector<200xf32>
      %15 = vector.shape_cast %14 : vector<200xf32> to vector<200x1xf32>
      %cst_11 = arith.constant 1.000000e-24 : f32
      %16 = vector.broadcast %cst_11 : f32 to vector<200x1xf32>
      %17 = arith.maximumf %15, %16 : vector<200x1xf32>
      %18 = math.rsqrt %17 : vector<200x1xf32>
      %19 = vector.broadcast %18 : vector<200x1xf32> to vector<200x256xf32>
      %20 = arith.mulf %12, %19 : vector<200x256xf32>
      %21 = arith.truncf %20 : vector<200x256xf32> to vector<200x256xbf16>
      %c0_12 = arith.constant 0 : index
      %c0_13 = arith.constant 0 : index
      %22 = vector.load %arg3[%c0_12, %c0_13] : memref<256x128xbf16, #tpu.memory_space<vmem>>, vector<256x128xbf16>
      %c0_14 = arith.constant 0 : index
      %c0_15 = arith.constant 0 : index
      %23 = vector.load %arg4[%c0_14, %c0_15] : memref<1x128xf32, #tpu.memory_space<vmem>>, vector<1x128xf32>
      %24 = arith.truncf %23 : vector<1x128xf32> to vector<1x128xbf16>
      %cst_16 = arith.constant dense<0.000000e+00> : vector<200x128xf32>
      %25 = tpu.matmul %21, %22, %cst_16 {dimension_numbers = #tpu.dot_dimension_numbers<[1], [0], [0], [1], [0, 0, 1, 1], [], []>} : vector<200x256xbf16>, vector<256x128xbf16>, vector<200x128xf32> -> vector<200x128xf32>
      %26 = arith.truncf %25 : vector<200x128xf32> to vector<200x128xbf16>
      %27 = vector.broadcast %24 : vector<1x128xbf16> to vector<200x128xbf16>
      %28 = arith.addf %26, %27 : vector<200x128xbf16>
      %29 = math.tanh %28 : vector<200x128xbf16>
      %c0_17 = arith.constant 0 : index
      %c0_18 = arith.constant 0 : index
      %30 = vector.load %arg5[%c0_17, %c0_18] : memref<128x128xbf16, #tpu.memory_space<vmem>>, vector<128x128xbf16>
      %c0_19 = arith.constant 0 : index
      %c0_20 = arith.constant 0 : index
      %31 = vector.load %arg6[%c0_19, %c0_20] : memref<1x128xf32, #tpu.memory_space<vmem>>, vector<1x128xf32>
      %32 = arith.truncf %31 : vector<1x128xf32> to vector<1x128xbf16>
      %cst_21 = arith.constant dense<0.000000e+00> : vector<200x128xf32>
      %33 = tpu.matmul %29, %30, %cst_21 {dimension_numbers = #tpu.dot_dimension_numbers<[1], [0], [0], [1], [0, 0, 1, 1], [], []>} : vector<200x128xbf16>, vector<128x128xbf16>, vector<200x128xf32> -> vector<200x128xf32>
      %34 = arith.truncf %33 : vector<200x128xf32> to vector<200x128xbf16>
      %35 = vector.broadcast %32 : vector<1x128xbf16> to vector<200x128xbf16>
      %36 = arith.addf %34, %35 : vector<200x128xbf16>
      %37 = math.tanh %36 : vector<200x128xbf16>
      %c0_22 = arith.constant 0 : index
      %c0_23 = arith.constant 0 : index
      %38 = vector.load %arg7[%c0_22, %c0_23] : memref<128x128xbf16, #tpu.memory_space<vmem>>, vector<128x128xbf16>
      %c0_24 = arith.constant 0 : index
      %c0_25 = arith.constant 0 : index
      %39 = vector.load %arg8[%c0_24, %c0_25] : memref<1x128xf32, #tpu.memory_space<vmem>>, vector<1x128xf32>
      %40 = arith.truncf %39 : vector<1x128xf32> to vector<1x128xbf16>
      %cst_26 = arith.constant dense<0.000000e+00> : vector<200x128xf32>
      %41 = tpu.matmul %37, %38, %cst_26 {dimension_numbers = #tpu.dot_dimension_numbers<[1], [0], [0], [1], [0, 0, 1, 1], [], []>} : vector<200x128xbf16>, vector<128x128xbf16>, vector<200x128xf32> -> vector<200x128xf32>
      %42 = arith.truncf %41 : vector<200x128xf32> to vector<200x128xbf16>
      %43 = vector.broadcast %40 : vector<1x128xbf16> to vector<200x128xbf16>
      %44 = arith.addf %42, %43 : vector<200x128xbf16>
      %45 = math.tanh %44 : vector<200x128xbf16>
      %c0_27 = arith.constant 0 : index
      %c0_28 = arith.constant 0 : index
      %46 = vector.load %arg12[%c0_27, %c0_28] : memref<200x128xbf16, #tpu.memory_space<vmem>>, vector<200x128xbf16>
      tpu.vector_store %arg12[%c0_27, %c0_28], %45 {strides = array<i32>} : memref<200x128xbf16, #tpu.memory_space<vmem>>, vector<200x128xbf16>,
    } else {
    }
    %c0 = arith.constant 0 : index
    %c0_1 = arith.constant 0 : index
    %3 = vector.load %arg12[%c0, %c0_1] : memref<200x128xbf16, #tpu.memory_space<vmem>>, vector<200x128xbf16>
    %c0_2 = arith.constant 0 : index
    %c0_3 = arith.constant 0 : index
    %4 = vector.load %arg9[%c0_2, %c0_3] : memref<128x256xbf16, #tpu.memory_space<vmem>>, vector<128x256xbf16>
    %cst = arith.constant dense<0.000000e+00> : vector<200x256xf32>
    %5 = tpu.matmul %3, %4, %cst {dimension_numbers = #tpu.dot_dimension_numbers<[1], [0], [0], [1], [0, 0, 1, 1], [], []>} : vector<200x128xbf16>, vector<128x256xbf16>, vector<200x256xf32> -> vector<200x256xf32>
    %c0_4 = arith.constant 0 : index
    %c0_5 = arith.constant 0 : index
    %6 = vector.load %arg10[%c0_4, %c0_5] : memref<1x256xf32, #tpu.memory_space<vmem>>, vector<1x256xf32>
    %7 = vector.broadcast %6 : vector<1x256xf32> to vector<200x256xf32>
    %8 = arith.addf %5, %7 : vector<200x256xf32>
    %9 = arith.truncf %8 : vector<200x256xf32> to vector<200x256xbf16>
    %c0_6 = arith.constant 0 : index
    %c0_7 = arith.constant 0 : index
    %10 = vector.load %arg11[%c0_6, %c0_7] : memref<200x256xbf16, #tpu.memory_space<vmem>>, vector<200x256xbf16>
    tpu.vector_store %arg11[%c0_6, %c0_7], %9 {strides = array<i32>} : memref<200x256xbf16, #tpu.memory_space<vmem>>, vector<200x256xbf16>,
    return
  }
  func.func @transform_0(%arg0: i32, %arg1: i32) -> (i32, i32) {
    %c0_i32 = arith.constant 0 : i32
    %c0_i32_0 = arith.constant 0 : i32
    return %arg0, %c0_i32 : i32, i32
  }
  func.func @transform_1(%arg0: i32, %arg1: i32) -> (i32, i32) {
    %c0_i32 = arith.constant 0 : i32
    %c0_i32_0 = arith.constant 0 : i32
    %c0_i32_1 = arith.constant 0 : i32
    return %c0_i32, %c0_i32_0 : i32, i32
  }
  func.func @transform_2(%arg0: i32, %arg1: i32) -> (i32, i32) {
    %c0_i32 = arith.constant 0 : i32
    %c0_i32_0 = arith.constant 0 : i32
    %c0_i32_1 = arith.constant 0 : i32
    return %c0_i32, %c0_i32_0 : i32, i32
  }
  func.func @transform_3(%arg0: i32, %arg1: i32) -> (i32, i32) {
    %c0_i32 = arith.constant 0 : i32
    %c0_i32_0 = arith.constant 0 : i32
    %c0_i32_1 = arith.constant 0 : i32
    return %c0_i32, %c0_i32_0 : i32, i32
  }
  func.func @transform_4(%arg0: i32, %arg1: i32) -> (i32, i32) {
    %c0_i32 = arith.constant 0 : i32
    %c0_i32_0 = arith.constant 0 : i32
    %c0_i32_1 = arith.constant 0 : i32
    return %c0_i32, %c0_i32_0 : i32, i32
  }
  func.func @transform_5(%arg0: i32, %arg1: i32) -> (i32, i32) {
    %c0_i32 = arith.constant 0 : i32
    %c0_i32_0 = arith.constant 0 : i32
    %c0_i32_1 = arith.constant 0 : i32
    return %c0_i32, %c0_i32_0 : i32, i32
  }
  func.func @transform_6(%arg0: i32, %arg1: i32) -> (i32, i32) {
    %c0_i32 = arith.constant 0 : i32
    %c0_i32_0 = arith.constant 0 : i32
    %c0_i32_1 = arith.constant 0 : i32
    return %c0_i32, %c0_i32_0 : i32, i32
  }
  func.func @transform_7(%arg0: i32, %arg1: i32) -> (i32, i32) {
    %c0_i32 = arith.constant 0 : i32
    %c0_i32_0 = arith.constant 0 : i32
    return %c0_i32, %arg1 : i32, i32
  }
  func.func @transform_8(%arg0: i32, %arg1: i32) -> (i32, i32) {
    %c0_i32 = arith.constant 0 : i32
    %c0_i32_0 = arith.constant 0 : i32
    return %c0_i32, %arg1 : i32, i32
  }
  func.func @transform_9(%arg0: i32, %arg1: i32) -> (i32, i32) {
    %c0_i32 = arith.constant 0 : i32
    return %arg0, %arg1 : i32, i32
  }
}

</mosaic_0001>

<llo_original>
// kernel: tpu_custom_call.1
$region0: #{tpu_custom_call.1}
  #allocation0 [shape = 'u32[]', space=smem, size = 0x4, offset = 0x4, fixed_abs, tag = 'smem constant byte address 0x4 - core index']
  #allocation1 [shape = 'u32[144,128]{1,0:T(1,128)}', space=vmem, size = 0x12000, scoped, tag = 'internal scratch']
  #allocation2 [shape = 'bf16[200,128]{1,0:T(8,128)(2,1)}', space=vmem, size = 0xc800, scoped, tag = 'scratch operand']
  %s0 = inlined_call_operand.hbm [shape: bf16[200,256], index: 0, kind: input, shape index: {}]
  %s1 = inlined_call_operand.hbm [shape: bf16[256,128], index: 1, kind: input, shape index: {}]
  %s2 = inlined_call_operand.vmem [shape: f32[1,128], index: 2, kind: input, shape index: {}]
  %s3 = inlined_call_operand.hbm [shape: bf16[128,128], index: 3, kind: input, shape index: {}]
  %s4 = inlined_call_operand.vmem [shape: f32[1,128], index: 4, kind: input, shape index: {}]
  %s5 = inlined_call_operand.hbm [shape: bf16[128,128], index: 5, kind: input, shape index: {}]
  %s6 = inlined_call_operand.vmem [shape: f32[1,128], index: 6, kind: input, shape index: {}]
  %s7 = inlined_call_operand.hbm [shape: bf16[128,256], index: 7, kind: input, shape index: {}]
  %s8 = inlined_call_operand.vmem [shape: f32[1,256], index: 8, kind: input, shape index: {}]
  %s9 = inlined_call_operand.hbm [shape: bf16[200,256], index: 9, kind: output, shape index: {}]
  %s10 = sld [smem:[#allocation0]]
  $region70: #{tpu_custom_call.1} parent=0
    _
  %s12 = ssub.s32 1, %s10
  %s13 = scalar_select 0, %s12, %s10
  $region1: #{tpu_custom_call.1} parent=0
    #allocation3 [shape = 'u8[102400]{0}', space=vmem, size = 0x19000, scoped, tag = 'input window, operand 0, single buffered']
    #allocation4 [shape = 's32[1]{0}', space=sflag, size = 0x4, scoped, tag = 'scoped memory for tpu_custom_call.1']
    #allocation5 [shape = 's32[1]{0}', space=sflag, size = 0x4, scoped, tag = 'scoped memory for tpu_custom_call.1']
    #allocation6 [shape = 'u8[65536]{0}', space=vmem, size = 0x10000, scoped, tag = 'input window, operand 1, single buffered']
    #allocation7 [shape = 's32[1]{0}', space=sflag, size = 0x4, scoped, tag = 'scoped memory for tpu_custom_call.1']
    #allocation8 [shape = 'u8[32768]{0}', space=vmem, size = 0x8000, scoped, tag = 'input window, operand 3, single buffered']
    #allocation9 [shape = 'u8[32768]{0}', space=vmem, size = 0x8000, scoped, tag = 'input window, operand 5, single buffered']
    #allocation10 [shape = 's32[1]{0}', space=sflag, size = 0x4, scoped, tag = 'scoped memory for tpu_custom_call.1']
    #allocation11 [shape = 'u8[65536]{0}', space=vmem, size = 0x10000, scoped, tag = 'input window, operand 7, single buffered']
    #allocation12 [shape = 'u8[102400]{0}', space=vmem, size = 0x19000, scoped, tag = 'output window, operand 0, single buffered']
    %14 = vsyncpa [#allocation4], 0
    %15 = vsyncpa [#allocation7], 0
    %16 = vsyncpa [#allocation10], 0
    %17 = vsyncpa [#allocation5], 0
    // Predicated region
    $region2: #{tpu_custom_call.1} parent=1 // pred_check
      _
    $region3: #{tpu_custom_call.1} parent=1 // pred_check_branch
      %19 = sbr.rel (0) target = $region5
    $region4: #{tpu_custom_call.1} parent=1 // pred_region
      %s21 = ssub.s32 3200, 3200
      %22 = vsyncadd [#allocation4], %s21
      %s23 = sshll.u32 [#allocation3], 4
      %s24 = int_to_ptr.vmem [resolvable:$true] %s23
      %29 = dma.hbm_to_vmem [thread:$0]  %s0, 3200, %s24, [#allocation4], 128, 128, 8
    $region5: #{tpu_custom_call.1} parent=1 // pred_fallthru
      _
    // Predicated region
    $region6: #{tpu_custom_call.1} parent=1 // pred_check
      _
    $region7: #{tpu_custom_call.1} parent=1 // pred_check_branch
      %31 = sbr.rel (0) target = $region9
    $region8: #{tpu_custom_call.1} parent=1 // pred_region
      %s33 = ssub.s32 2048, 2048
      %34 = vsyncadd [#allocation7], %s33
      %s35 = sshll.u32 [#allocation6], 4
      %s36 = int_to_ptr.vmem [resolvable:$true] %s35
      %41 = dma.hbm_to_vmem [thread:$0]  %s1, 2048, %s36, [#allocation7], 64, 64, 4
    $region9: #{tpu_custom_call.1} parent=1 // pred_fallthru
      _
    // Predicated region
    $region10: #{tpu_custom_call.1} parent=1 // pred_check
      _
    $region11: #{tpu_custom_call.1} parent=1 // pred_check_branch
      %43 = sbr.rel (0) target = $region13
    $region12: #{tpu_custom_call.1} parent=1 // pred_region
      _
    $region13: #{tpu_custom_call.1} parent=1 // pred_fallthru
      _
    // Predicated region
    $region14: #{tpu_custom_call.1} parent=1 // pred_check
      _
    $region15: #{tpu_custom_call.1} parent=1 // pred_check_branch
      %45 = sbr.rel (0) target = $region17
    $region16: #{tpu_custom_call.1} parent=1 // pred_region
      %s47 = ssub.s32 1024, 1024
      %48 = vsyncadd [#allocation7], %s47
      %s49 = sshll.u32 [#allocation8], 4
      %s50 = int_to_ptr.vmem [resolvable:$true] %s49
      %55 = dma.hbm_to_vmem [thread:$0]  %s3, 1024, %s50, [#allocation7], 64, 64, 4
    $region17: #{tpu_custom_call.1} parent=1 // pred_fallthru
      _
    // Predicated region
    $region18: #{tpu_custom_call.1} parent=1 // pred_check
      _
    $region19: #{tpu_custom_call.1} parent=1 // pred_check_branch
      %57 = sbr.rel (0) target = $region21
    $region20: #{tpu_custom_call.1} parent=1 // pred_region
      _
    $region21: #{tpu_custom_call.1} parent=1 // pred_fallthru
      _
    // Predicated region
    $region22: #{tpu_custom_call.1} parent=1 // pred_check
      _
    $region23: #{tpu_custom_call.1} parent=1 // pred_check_branch
      %59 = sbr.rel (0) target = $region25
    $region24: #{tpu_custom_call.1} parent=1 // pred_region
      %s61 = ssub.s32 1024, 1024
      %62 = vsyncadd [#allocation10], %s61
      %s63 = sshll.u32 [#allocation9], 4
      %s64 = int_to_ptr.vmem [resolvable:$true] %s63
      %69 = dma.hbm_to_vmem [thread:$0]  %s5, 1024, %s64, [#allocation10], 64, 64, 4
    $region25: #{tpu_custom_call.1} parent=1 // pred_fallthru
      _
    // Predicated region
    $region26: #{tpu_custom_call.1} parent=1 // pred_check
      _
    $region27: #{tpu_custom_call.1} parent=1 // pred_check_branch
      %71 = sbr.rel (0) target = $region29
    $region28: #{tpu_custom_call.1} parent=1 // pred_region
      _
    $region29: #{tpu_custom_call.1} parent=1 // pred_fallthru
      _
    // Predicated region
    $region30: #{tpu_custom_call.1} parent=1 // pred_check
      _
    $region31: #{tpu_custom_call.1} parent=1 // pred_check_branch
      %73 = sbr.rel (0) target = $region33
    $region32: #{tpu_custom_call.1} parent=1 // pred_region
      %s75 = ssub.s32 2048, 2048
      %76 = vsyncadd [#allocation10], %s75
      %s77 = sshll.u32 [#allocation11], 4
      %s78 = int_to_ptr.vmem [resolvable:$true] %s77
      %83 = dma.hbm_to_vmem [thread:$0]  %s7, 2048, %s78, [#allocation10], 128, 128, 8
    $region33: #{tpu_custom_call.1} parent=1 // pred_fallthru
      _
    // Predicated region
    $region34: #{tpu_custom_call.1} parent=1 // pred_check
      _
    $region35: #{tpu_custom_call.1} parent=1 // pred_check_branch
      %85 = sbr.rel (0) target = $region37
    $region36: #{tpu_custom_call.1} parent=1 // pred_region
      _
    $region37: #{tpu_custom_call.1} parent=1 // pred_fallthru
      _
    // Predicated region
    $region38: #{tpu_custom_call.1} parent=1 // pred_check
      _
    $region39: #{tpu_custom_call.1} parent=1 // pred_check_branch
      %87 = sbr.rel (0) target = $region41
    $region40: #{tpu_custom_call.1} parent=1 // pred_region
      %88 = dma.done [#allocation4], 3200
    $region41: #{tpu_custom_call.1} parent=1 // pred_fallthru
      _
    // Predicated region
    $region42: #{tpu_custom_call.1} parent=1 // pred_check
      _
    $region43: #{tpu_custom_call.1} parent=1 // pred_check_branch
      %90 = sbr.rel (0) target = $region45
    $region44: #{tpu_custom_call.1} parent=1 // pred_region
      %91 = dma.done [#allocation7], 2048
    $region45: #{tpu_custom_call.1} parent=1 // pred_fallthru
      _
    // Predicated region
    $region46: #{tpu_custom_call.1} parent=1 // pred_check
      _
    $region47: #{tpu_custom_call.1} parent=1 // pred_check_branch
      %93 = sbr.rel (0) target = $region49
    $region48: #{tpu_custom_call.1} parent=1 // pred_region
      %94 = dma.done [#allocation7], 1024
    $region49: #{tpu_custom_call.1} parent=1 // pred_fallthru
      _
    // Predicated region
    $region50: #{tpu_custom_call.1} parent=1 // pred_check
      _
    $region51: #{tpu_custom_call.1} parent=1 // pred_check_branch
      %96 = sbr.rel (0) target = $region53
    $region52: #{tpu_custom_call.1} parent=1 // pred_region
      %97 = dma.done [#allocation10], 1024
    $region53: #{tpu_custom_call.1} parent=1 // pred_fallthru
      _
    // Predicated region
    $region54: #{tpu_custom_call.1} parent=1 // pred_check
      _
    $region55: #{tpu_custom_call.1} parent=1 // pred_check_branch
      %99 = sbr.rel (0) target = $region57
    $region56: #{tpu_custom_call.1} parent=1 // pred_region
      %100 = dma.done [#allocation10], 2048
    $region57: #{tpu_custom_call.1} parent=1 // pred_fallthru
      _
    %p102 = scmp.eq.s32.totalorder 0, 0
    // Predicated region
    $region58: #{tpu_custom_call.1} parent=1 // pred_check
      %p103 = pneg %p102
    $region59: #{tpu_custom_call.1} parent=1 // pred_check_branch
      %105 = sbr.rel (%p103) target = $region61
    $region60: #{tpu_custom_call.1} parent=1 // pred_region
      %v106 = vld [vmem:[#allocation3] sm:$0xff]
      %v107 = vld [vmem:[#allocation3 + $0x8] sm:$0xff]
      %v108 = vld [vmem:[#allocation3 + $0x10] sm:$0xff]
      %v109 = vld [vmem:[#allocation3 + $0x18] sm:$0xff]
      %v110 = vld [vmem:[#allocation3 + $0x20] sm:$0xff]
      %v111 = vld [vmem:[#allocation3 + $0x28] sm:$0xff]
      %v112 = vld [vmem:[#allocation3 + $0x30] sm:$0xff]
      %v113 = vld [vmem:[#allocation3 + $0x38] sm:$0xff]
      %v114 = vld [vmem:[#allocation3 + $0x40] sm:$0xff]
      %v115 = vld [vmem:[#allocation3 + $0x48] sm:$0xff]
      %v116 = vld [vmem:[#allocation3 + $0x50] sm:$0xff]
      %v117 = vld [vmem:[#allocation3 + $0x58] sm:$0xff]
      %v118 = vld [vmem:[#allocation3 + $0x60] sm:$0xff]
      %v119 = vld [vmem:[#allocation3 + $0x68] sm:$0xff]
      %v120 = vld [vmem:[#allocation3 + $0x70] sm:$0xff]
      %v121 = vld [vmem:[#allocation3 + $0x78] sm:$0xff]
      %v122 = vld [vmem:[#allocation3 + $0x80] sm:$0xff]
      %v123 = vld [vmem:[#allocation3 + $0x88] sm:$0xff]
      %v124 = vld [vmem:[#allocation3 + $0x90] sm:$0xff]
      %v125 = vld [vmem:[#allocation3 + $0x98] sm:$0xff]
      %v126 = vld [vmem:[#allocation3 + $0xa0] sm:$0xff]
      %v127 = vld [vmem:[#allocation3 + $0xa8] sm:$0xff]
      %v128 = vld [vmem:[#allocation3 + $0xb0] sm:$0xff]
      %v129 = vld [vmem:[#allocation3 + $0xb8] sm:$0xff]
      %v130 = vld [vmem:[#allocation3 + $0xc0] sm:$0xff]
      %v131 = vunpack.c.l.bf16 %v106
      %v132 = vunpack.c.h.bf16 %v106
      %v133 = vunpack.c.l.bf16 %v107
      %v134 = vunpack.c.h.bf16 %v107
      %v135 = vunpack.c.l.bf16 %v108
      %v136 = vunpack.c.h.bf16 %v108
      %v137 = vunpack.c.l.bf16 %v109
      %v138 = vunpack.c.h.bf16 %v109
      %v139 = vunpack.c.l.bf16 %v110
      %v140 = vunpack.c.h.bf16 %v110
      %v141 = vunpack.c.l.bf16 %v111
      %v142 = vunpack.c.h.bf16 %v111
      %v143 = vunpack.c.l.bf16 %v112
      %v144 = vunpack.c.h.bf16 %v112
      %v145 = vunpack.c.l.bf16 %v113
      %v146 = vunpack.c.h.bf16 %v113
      %v147 = vunpack.c.l.bf16 %v114
      %v148 = vunpack.c.h.bf16 %v114
      %v149 = vunpack.c.l.bf16 %v115
      %v150 = vunpack.c.h.bf16 %v115
      %v151 = vunpack.c.l.bf16 %v116
      %v152 = vunpack.c.h.bf16 %v116
      %v153 = vunpack.c.l.bf16 %v117
      %v154 = vunpack.c.h.bf16 %v117
      %v155 = vunpack.c.l.bf16 %v118
      %v156 = vunpack.c.h.bf16 %v118
      %v157 = vunpack.c.l.bf16 %v119
      %v158 = vunpack.c.h.bf16 %v119
      %v159 = vunpack.c.l.bf16 %v120
      %v160 = vunpack.c.h.bf16 %v120
      %v161 = vunpack.c.l.bf16 %v121
      %v162 = vunpack.c.h.bf16 %v121
      %v163 = vunpack.c.l.bf16 %v122
      %v164 = vunpack.c.h.bf16 %v122
      %v165 = vunpack.c.l.bf16 %v123
      %v166 = vunpack.c.h.bf16 %v123
      %v167 = vunpack.c.l.bf16 %v124
      %v168 = vunpack.c.h.bf16 %v124
      %v169 = vunpack.c.l.bf16 %v125
      %v170 = vunpack.c.h.bf16 %v125
      %v171 = vunpack.c.l.bf16 %v126
      %v172 = vunpack.c.h.bf16 %v126
      %v173 = vunpack.c.l.bf16 %v127
      %v174 = vunpack.c.h.bf16 %v127
      %v175 = vunpack.c.l.bf16 %v128
      %v176 = vunpack.c.h.bf16 %v128
      %v177 = vunpack.c.l.bf16 %v129
      %v178 = vunpack.c.h.bf16 %v129
      %v179 = vunpack.c.l.bf16 %v130
      %v180 = vunpack.c.h.bf16 %v130
      %v181 = vmul.f32 %v131, %v131
      %v182 = vmul.f32 %v132, %v132
      %v183 = vmul.f32 %v133, %v133
      %v184 = vmul.f32 %v134, %v134
      %v185 = vmul.f32 %v135, %v135
      %v186 = vmul.f32 %v136, %v136
      %v187 = vmul.f32 %v137, %v137
      %v188 = vmul.f32 %v138, %v138
      %v189 = vmul.f32 %v139, %v139
      %v190 = vmul.f32 %v140, %v140
      %v191 = vmul.f32 %v141, %v141
      %v192 = vmul.f32 %v142, %v142
      %v193 = vmul.f32 %v143, %v143
      %v194 = vmul.f32 %v144, %v144
      %v195 = vmul.f32 %v145, %v145
      %v196 = vmul.f32 %v146, %v146
      %v197 = vmul.f32 %v147, %v147
      %v198 = vmul.f32 %v148, %v148
      %v199 = vmul.f32 %v149, %v149
      %v200 = vmul.f32 %v150, %v150
      %v201 = vmul.f32 %v151, %v151
      %v202 = vmul.f32 %v152, %v152
      %v203 = vmul.f32 %v153, %v153
      %v204 = vmul.f32 %v154, %v154
      %v205 = vmul.f32 %v155, %v155
      %v206 = vmul.f32 %v156, %v156
      %v207 = vmul.f32 %v157, %v157
      %v208 = vmul.f32 %v158, %v158
      %v209 = vmul.f32 %v159, %v159
      %v210 = vmul.f32 %v160, %v160
      %v211 = vmul.f32 %v161, %v161
      %v212 = vmul.f32 %v162, %v162
      %v213 = vmul.f32 %v163, %v163
      %v214 = vmul.f32 %v164, %v164
      %v215 = vmul.f32 %v165, %v165
      %v216 = vmul.f32 %v166, %v166
      %v217 = vmul.f32 %v167, %v167
      %v218 = vmul.f32 %v168, %v168
      %v219 = vmul.f32 %v169, %v169
      %v220 = vmul.f32 %v170, %v170
      %v221 = vmul.f32 %v171, %v171
      %v222 = vmul.f32 %v172, %v172
      %v223 = vmul.f32 %v173, %v173
      %v224 = vmul.f32 %v174, %v174
      %v225 = vmul.f32 %v175, %v175
      %v226 = vmul.f32 %v176, %v176
      %v227 = vmul.f32 %v177, %v177
      %v228 = vmul.f32 %v178, %v178
      %v229 = vmul.f32 %v179, %v179
      %v230 = vmul.f32 %v180, %v180
      %v231 = vadd.f32 %v181, %v182
      %232 = vadd.xlane.f32.xlu0 %v231
      %v233 = vpop.xlane.xlu0 %232
      %v234 = vadd.f32 %v183, %v184
      %235 = vadd.xlane.f32.xlu0 %v234
      %v236 = vpop.xlane.xlu0 %235
      %v237 = vadd.f32 %v185, %v186
      %238 = vadd.xlane.f32.xlu0 %v237
      %v239 = vpop.xlane.xlu0 %238
      %v240 = vadd.f32 %v187, %v188
      %241 = vadd.xlane.f32.xlu0 %v240
      %v242 = vpop.xlane.xlu0 %241
      %v243 = vadd.f32 %v189, %v190
      %244 = vadd.xlane.f32.xlu0 %v243
      %v245 = vpop.xlane.xlu0 %244
      %v246 = vadd.f32 %v191, %v192
      %247 = vadd.xlane.f32.xlu0 %v246
      %v248 = vpop.xlane.xlu0 %247
      %v249 = vadd.f32 %v193, %v194
      %250 = vadd.xlane.f32.xlu0 %v249
      %v251 = vpop.xlane.xlu0 %250
      %v252 = vadd.f32 %v195, %v196
      %253 = vadd.xlane.f32.xlu0 %v252
      %v254 = vpop.xlane.xlu0 %253
      %v255 = vadd.f32 %v197, %v198
      %256 = vadd.xlane.f32.xlu0 %v255
      %v257 = vpop.xlane.xlu0 %256
      %v258 = vadd.f32 %v199, %v200
      %259 = vadd.xlane.f32.xlu0 %v258
      %v260 = vpop.xlane.xlu0 %259
      %v261 = vadd.f32 %v201, %v202
      %262 = vadd.xlane.f32.xlu0 %v261
      %v263 = vpop.xlane.xlu0 %262
      %v264 = vadd.f32 %v203, %v204
      %265 = vadd.xlane.f32.xlu0 %v264
      %v266 = vpop.xlane.xlu0 %265
      %v267 = vadd.f32 %v205, %v206
      %268 = vadd.xlane.f32.xlu0 %v267
      %v269 = vpop.xlane.xlu0 %268
      %v270 = vadd.f32 %v207, %v208
      %271 = vadd.xlane.f32.xlu0 %v270
      %v272 = vpop.xlane.xlu0 %271
      %v273 = vadd.f32 %v209, %v210
      %274 = vadd.xlane.f32.xlu0 %v273
      %v275 = vpop.xlane.xlu0 %274
      %v276 = vadd.f32 %v211, %v212
      %277 = vadd.xlane.f32.xlu0 %v276
      %v278 = vpop.xlane.xlu0 %277
      %v279 = vadd.f32 %v213, %v214
      %280 = vadd.xlane.f32.xlu0 %v279
      %v281 = vpop.xlane.xlu0 %280
      %v282 = vadd.f32 %v215, %v216
      %283 = vadd.xlane.f32.xlu0 %v282
      %v284 = vpop.xlane.xlu0 %283
      %v285 = vadd.f32 %v217, %v218
      %286 = vadd.xlane.f32.xlu0 %v285
      %v287 = vpop.xlane.xlu0 %286
      %v288 = vadd.f32 %v219, %v220
      %289 = vadd.xlane.f32.xlu0 %v288
      %v290 = vpop.xlane.xlu0 %289
      %v291 = vadd.f32 %v221, %v222
      %292 = vadd.xlane.f32.xlu0 %v291
      %v293 = vpop.xlane.xlu0 %292
      %v294 = vadd.f32 %v223, %v224
      %295 = vadd.xlane.f32.xlu0 %v294
      %v296 = vpop.xlane.xlu0 %295
      %v297 = vadd.f32 %v225, %v226
      %298 = vadd.xlane.f32.xlu0 %v297
      %v299 = vpop.xlane.xlu0 %298
      %v300 = vadd.f32 %v227, %v228
      %301 = vadd.xlane.f32.xlu0 %v300
      %v302 = vpop.xlane.xlu0 %301
      %v303 = vadd.f32 %v229, %v230
      %304 = vadd.xlane.f32.xlu0 %v303
      %v305 = vpop.xlane.xlu0 %304
      %v306 = vmax.f32 %v233, 1e-24
      %v307 = vmax.f32 %v236, 1e-24
      %v308 = vmax.f32 %v239, 1e-24
      %v309 = vmax.f32 %v242, 1e-24
      %v310 = vmax.f32 %v245, 1e-24
      %v311 = vmax.f32 %v248, 1e-24
      %v312 = vmax.f32 %v251, 1e-24
      %v313 = vmax.f32 %v254, 1e-24
      %v314 = vmax.f32 %v257, 1e-24
      %v315 = vmax.f32 %v260, 1e-24
      %v316 = vmax.f32 %v263, 1e-24
      %v317 = vmax.f32 %v266, 1e-24
      %v318 = vmax.f32 %v269, 1e-24
      %v319 = vmax.f32 %v272, 1e-24
      %v320 = vmax.f32 %v275, 1e-24
      %v321 = vmax.f32 %v278, 1e-24
      %v322 = vmax.f32 %v281, 1e-24
      %v323 = vmax.f32 %v284, 1e-24
      %v324 = vmax.f32 %v287, 1e-24
      %v325 = vmax.f32 %v290, 1e-24
      %v326 = vmax.f32 %v293, 1e-24
      %v327 = vmax.f32 %v296, 1e-24
      %v328 = vmax.f32 %v299, 1e-24
      %v329 = vmax.f32 %v302, 1e-24
      %v330 = vmax.f32 %v305, 1e-24
      %v331 = vrsqrt.pop %v306
      %v332 = vrsqrt.pop %v307
      %v333 = vrsqrt.pop %v308
      %v334 = vrsqrt.pop %v309
      %v335 = vrsqrt.pop %v310
      %v336 = vrsqrt.pop %v311
      %v337 = vrsqrt.pop %v312
      %v338 = vrsqrt.pop %v313
      %v339 = vrsqrt.pop %v314
      %v340 = vrsqrt.pop %v315
      %v341 = vrsqrt.pop %v316
      %v342 = vrsqrt.pop %v317
      %v343 = vrsqrt.pop %v318
      %v344 = vrsqrt.pop %v319
      %v345 = vrsqrt.pop %v320
      %v346 = vrsqrt.pop %v321
      %v347 = vrsqrt.pop %v322
      %v348 = vrsqrt.pop %v323
      %v349 = vrsqrt.pop %v324
      %v350 = vrsqrt.pop %v325
      %v351 = vrsqrt.pop %v326
      %v352 = vrsqrt.pop %v327
      %v353 = vrsqrt.pop %v328
      %v354 = vrsqrt.pop %v329
      %v355 = vrsqrt.pop %v330
      %v356 = vmul.f32 %v131, %v331
      %v357 = vmul.f32 %v132, %v331
      %v358 = vmul.f32 %v133, %v332
      %v359 = vmul.f32 %v134, %v332
      %v360 = vmul.f32 %v135, %v333
      %v361 = vmul.f32 %v136, %v333
      %v362 = vmul.f32 %v137, %v334
      %v363 = vmul.f32 %v138, %v334
      %v364 = vmul.f32 %v139, %v335
      %v365 = vmul.f32 %v140, %v335
      %v366 = vmul.f32 %v141, %v336
      %v367 = vmul.f32 %v142, %v336
      %v368 = vmul.f32 %v143, %v337
      %v369 = vmul.f32 %v144, %v337
      %v370 = vmul.f32 %v145, %v338
      %v371 = vmul.f32 %v146, %v338
      %v372 = vmul.f32 %v147, %v339
      %v373 = vmul.f32 %v148, %v339
      %v374 = vmul.f32 %v149, %v340
      %v375 = vmul.f32 %v150, %v340
      %v376 = vmul.f32 %v151, %v341
      %v377 = vmul.f32 %v152, %v341
      %v378 = vmul.f32 %v153, %v342
      %v379 = vmul.f32 %v154, %v342
      %v380 = vmul.f32 %v155, %v343
      %v381 = vmul.f32 %v156, %v343
      %v382 = vmul.f32 %v157, %v344
      %v383 = vmul.f32 %v158, %v344
      %v384 = vmul.f32 %v159, %v345
      %v385 = vmul.f32 %v160, %v345
      %v386 = vmul.f32 %v161, %v346
      %v387 = vmul.f32 %v162, %v346
      %v388 = vmul.f32 %v163, %v347
      %v389 = vmul.f32 %v164, %v347
      %v390 = vmul.f32 %v165, %v348
      %v391 = vmul.f32 %v166, %v348
      %v392 = vmul.f32 %v167, %v349
      %v393 = vmul.f32 %v168, %v349
      %v394 = vmul.f32 %v169, %v350
      %v395 = vmul.f32 %v170, %v350
      %v396 = vmul.f32 %v171, %v351
      %v397 = vmul.f32 %v172, %v351
      %v398 = vmul.f32 %v173, %v352
      %v399 = vmul.f32 %v174, %v352
      %v400 = vmul.f32 %v175, %v353
      %v401 = vmul.f32 %v176, %v353
      %v402 = vmul.f32 %v177, %v354
      %v403 = vmul.f32 %v178, %v354
      %v404 = vmul.f32 %v179, %v355
      %v405 = vmul.f32 %v180, %v355
      %v406 = vpack.c.bf16 %v358, %v356
      %v407 = vpack.c.bf16 %v359, %v357
      %v408 = vpack.c.bf16 %v362, %v360
      %v409 = vpack.c.bf16 %v363, %v361
      %v410 = vpack.c.bf16 %v366, %v364
      %v411 = vpack.c.bf16 %v367, %v365
      %v412 = vpack.c.bf16 %v370, %v368
      %v413 = vpack.c.bf16 %v371, %v369
      %v414 = vpack.c.bf16 %v374, %v372
      %v415 = vpack.c.bf16 %v375, %v373
      %v416 = vpack.c.bf16 %v378, %v376
      %v417 = vpack.c.bf16 %v379, %v377
      %v418 = vpack.c.bf16 %v382, %v380
      %v419 = vpack.c.bf16 %v383, %v381
      %v420 = vpack.c.bf16 %v386, %v384
      %v421 = vpack.c.bf16 %v387, %v385
      %v422 = vpack.c.bf16 %v390, %v388
      %v423 = vpack.c.bf16 %v391, %v389
      %v424 = vpack.c.bf16 %v394, %v392
      %v425 = vpack.c.bf16 %v395, %v393
      %v426 = vpack.c.bf16 %v398, %v396
      %v427 = vpack.c.bf16 %v399, %v397
      %v428 = vpack.c.bf16 %v402, %v400
      %v429 = vpack.c.bf16 %v403, %v401
      %v430 = vpack.c.bf16 %v404, %v404
      %v431 = vpack.c.bf16 %v405, %v405
      %v432 = vld [vmem:[#allocation6] sm:$0xf]
      %v433 = vld [vmem:[#allocation6 + $0x4] sm:$0xf]
      %v434 = vld [vmem:[#allocation6 + $0x8] sm:$0xf]
      %v435 = vld [vmem:[#allocation6 + $0xc] sm:$0xf]
      %v436 = vld [vmem:[#allocation6 + $0x10] sm:$0xf]
      %v437 = vld [vmem:[#allocation6 + $0x14] sm:$0xf]
      %v438 = vld [vmem:[#allocation6 + $0x18] sm:$0xf]
      %v439 = vld [vmem:[#allocation6 + $0x1c] sm:$0xf]
      %v440 = vld [vmem:[#allocation6 + $0x20] sm:$0xf]
      %v441 = vld [vmem:[#allocation6 + $0x24] sm:$0xf]
      %v442 = vld [vmem:[#allocation6 + $0x28] sm:$0xf]
      %v443 = vld [vmem:[#allocation6 + $0x2c] sm:$0xf]
      %v444 = vld [vmem:[#allocation6 + $0x30] sm:$0xf]
      %v445 = vld [vmem:[#allocation6 + $0x34] sm:$0xf]
      %v446 = vld [vmem:[#allocation6 + $0x38] sm:$0xf]
      %v447 = vld [vmem:[#allocation6 + $0x3c] sm:$0xf]
      %v448 = vld [vmem:[#allocation6 + $0x40] sm:$0xf]
      %v449 = vld [vmem:[#allocation6 + $0x44] sm:$0xf]
      %v450 = vld [vmem:[#allocation6 + $0x48] sm:$0xf]
      %v451 = vld [vmem:[#allocation6 + $0x4c] sm:$0xf]
      %v452 = vld [vmem:[#allocation6 + $0x50] sm:$0xf]
      %v453 = vld [vmem:[#allocation6 + $0x54] sm:$0xf]
      %v454 = vld [vmem:[#allocation6 + $0x58] sm:$0xf]
      %v455 = vld [vmem:[#allocation6 + $0x5c] sm:$0xf]
      %v456 = vld [vmem:[#allocation6 + $0x60] sm:$0xf]
      %v457 = vld [vmem:[#allocation6 + $0x64] sm:$0xf]
      %v458 = vld [vmem:[#allocation6 + $0x68] sm:$0xf]
      %v459 = vld [vmem:[#allocation6 + $0x6c] sm:$0xf]
      %v460 = vld [vmem:[#allocation6 + $0x70] sm:$0xf]
      %v461 = vld [vmem:[#allocation6 + $0x74] sm:$0xf]
      %v462 = vld [vmem:[#allocation6 + $0x78] sm:$0xf]
      %v463 = vld [vmem:[#allocation6 + $0x7c] sm:$0xf]
      %v464 = vld [vmem:[%s2] sm:$0x1]
      %v465 = vpack.c.bf16 %v464, %v464
      %v498 = vunpack.c.l.b16 %v432
      %v499 = vunpack.c.l.b16 %v433
      %v500 = vunpack.c.l.b16 %v434
      %v501 = vunpack.c.l.b16 %v435
      %v502 = vunpack.c.l.b16 %v436
      %v503 = vunpack.c.l.b16 %v437
      %v504 = vunpack.c.l.b16 %v438
      %v505 = vunpack.c.l.b16 %v439
      %v506 = vunpack.c.l.b16 %v440
      %v507 = vunpack.c.l.b16 %v441
      %v508 = vunpack.c.l.b16 %v442
      %v509 = vunpack.c.l.b16 %v443
      %v510 = vunpack.c.l.b16 %v444
      %v511 = vunpack.c.l.b16 %v445
      %v512 = vunpack.c.l.b16 %v446
      %v513 = vunpack.c.l.b16 %v447
      %v514 = vunpack.c.l.b16 %v448
      %v515 = vunpack.c.l.b16 %v449
      %v516 = vunpack.c.l.b16 %v450
      %v517 = vunpack.c.l.b16 %v451
      %v518 = vunpack.c.l.b16 %v452
      %v519 = vunpack.c.l.b16 %v453
      %v520 = vunpack.c.l.b16 %v454
      %v521 = vunpack.c.l.b16 %v455
      %v522 = vunpack.c.l.b16 %v456
      %v523 = vunpack.c.l.b16 %v457
      %v524 = vunpack.c.l.b16 %v458
      %v525 = vunpack.c.l.b16 %v459
      %v526 = vunpack.c.l.b16 %v460
      %v527 = vunpack.c.l.b16 %v461
      %v528 = vunpack.c.l.b16 %v462
      %v529 = vunpack.c.l.b16 %v463
      %v530 = vpack.c.b16 %v499, %v498
      %v531 = vpack.c.b16 %v501, %v500
      %v532 = vpack.c.b16 %v503, %v502
      %v533 = vpack.c.b16 %v505, %v504
      %v534 = vpack.c.b16 %v507, %v506
      %v535 = vpack.c.b16 %v509, %v508
      %v536 = vpack.c.b16 %v511, %v510
      %v537 = vpack.c.b16 %v513, %v512
      %v538 = vpack.c.b16 %v515, %v514
      %v539 = vpack.c.b16 %v517, %v516
      %v540 = vpack.c.b16 %v519, %v518
      %v541 = vpack.c.b16 %v521, %v520
      %v542 = vpack.c.b16 %v523, %v522
      %v543 = vpack.c.b16 %v525, %v524
      %v544 = vpack.c.b16 %v527, %v526
      %v545 = vpack.c.b16 %v529, %v528
      %562 = vmatprep.subr.bf16.mxu0 0
      %563 = vmatpush1.bf16.msra.mxu0 %v537
      %564 = vmatprep.subr.bf16.mxu0 0
      %565 = vmatpush1.bf16.msra.mxu0 %v536
      %566 = vmatprep.subr.bf16.mxu0 0
      %567 = vmatpush1.bf16.msra.mxu0 %v535
      %568 = vmatprep.subr.bf16.mxu0 0
      %569 = vmatpush1.bf16.msra.mxu0 %v534
      %570 = vmatprep.subr.bf16.mxu0 0
      %571 = vmatpush1.bf16.msra.mxu0 %v533
      %572 = vmatprep.subr.bf16.mxu0 0
      %573 = vmatpush1.bf16.msra.mxu0 %v532
      %574 = vmatprep.subr.bf16.mxu0 0
      %575 = vmatpush1.bf16.msra.mxu0 %v531
      %576 = vmatprep.subr.bf16.mxu0 0
      %577 = vmatpush1.bf16.msra.mxu0 %v530
      %578 = vmatprep.subr.bf16.mxu0 0
      %579 = vmatpush2.bf16.msra.mxu0 %v545
      %580 = vmatprep.subr.bf16.mxu0 0
      %581 = vmatpush2.bf16.msra.mxu0 %v544
      %582 = vmatprep.subr.bf16.mxu0 0
      %583 = vmatpush2.bf16.msra.mxu0 %v543
      %584 = vmatprep.subr.bf16.mxu0 0
      %585 = vmatpush2.bf16.msra.mxu0 %v542
      %586 = vmatprep.subr.bf16.mxu0 0
      %587 = vmatpush2.bf16.msra.mxu0 %v541
      %588 = vmatprep.subr.bf16.mxu0 0
      %589 = vmatpush2.bf16.msra.mxu0 %v540
      %590 = vmatprep.subr.bf16.mxu0 0
      %591 = vmatpush2.bf16.msra.mxu0 %v539
      %592 = vmatprep.subr.bf16.mxu0 0
      %593 = vmatpush2.bf16.msra.mxu0 %v538
      %594 = vmatprep.mubr.bf16.mxu0 %v407
      %595 = vmatmul.mubr.bf16.gmra.mxu0 %v406
      %v596 = vpop.f32.mrf.mxu0
      %v597 = vadd.f32 0.0, %v596
      %v598 = vpop.f32.mrf.mxu0
      %v599 = vpop.f32.mrf.mxu0
      %v600 = vadd.f32 0.0, %v599
      %v601 = vpop.f32.mrf.mxu0
      %602 = vmatprep.mubr.bf16.mxu0 %v409
      %603 = vmatmul.mubr.bf16.gmra.mxu0 %v408
      %v604 = vpop.f32.mrf.mxu0
      %v605 = vadd.f32 0.0, %v604
      %v606 = vpop.f32.mrf.mxu0
      %v607 = vpop.f32.mrf.mxu0
      %v608 = vadd.f32 0.0, %v607
      %v609 = vpop.f32.mrf.mxu0
      %610 = vmatprep.mubr.bf16.mxu0 %v411
      %611 = vmatmul.mubr.bf16.gmra.mxu0 %v410
      %v612 = vpop.f32.mrf.mxu0
      %v613 = vadd.f32 0.0, %v612
      %v614 = vpop.f32.mrf.mxu0
      %v615 = vpop.f32.mrf.mxu0
      %v616 = vadd.f32 0.0, %v615
      %v617 = vpop.f32.mrf.mxu0
      %618 = vmatprep.mubr.bf16.mxu0 %v413
      %619 = vmatmul.mubr.bf16.gmra.mxu0 %v412
      %v620 = vpop.f32.mrf.mxu0
      %v621 = vadd.f32 0.0, %v620
      %v622 = vpop.f32.mrf.mxu0
      %v623 = vpop.f32.mrf.mxu0
      %v624 = vadd.f32 0.0, %v623
      %v625 = vpop.f32.mrf.mxu0
      %626 = vmatprep.mubr.bf16.mxu0 %v415
      %627 = vmatmul.mubr.bf16.gmra.mxu0 %v414
      %v628 = vpop.f32.mrf.mxu0
      %v629 = vadd.f32 0.0, %v628
      %v630 = vpop.f32.mrf.mxu0
      %v631 = vpop.f32.mrf.mxu0
      %v632 = vadd.f32 0.0, %v631
      %v633 = vpop.f32.mrf.mxu0
      %634 = vmatprep.mubr.bf16.mxu0 %v417
      %635 = vmatmul.mubr.bf16.gmra.mxu0 %v416
      %v636 = vpop.f32.mrf.mxu0
      %v637 = vadd.f32 0.0, %v636
      %v638 = vpop.f32.mrf.mxu0
      %v639 = vpop.f32.mrf.mxu0
      %v640 = vadd.f32 0.0, %v639
      %v641 = vpop.f32.mrf.mxu0
      %642 = vmatprep.mubr.bf16.mxu0 %v419
      %643 = vmatmul.mubr.bf16.gmra.mxu0 %v418
      %v644 = vpop.f32.mrf.mxu0
      %v645 = vadd.f32 0.0, %v644
      %v646 = vpop.f32.mrf.mxu0
      %v647 = vpop.f32.mrf.mxu0
      %v648 = vadd.f32 0.0, %v647
      %v649 = vpop.f32.mrf.mxu0
      %650 = vmatprep.mubr.bf16.mxu0 %v421
      %651 = vmatmul.mubr.bf16.gmra.mxu0 %v420
      %v652 = vpop.f32.mrf.mxu0
      %v653 = vadd.f32 0.0, %v652
      %v654 = vpop.f32.mrf.mxu0
      %v655 = vpop.f32.mrf.mxu0
      %v656 = vadd.f32 0.0, %v655
      %v657 = vpop.f32.mrf.mxu0
      %658 = vmatprep.mubr.bf16.mxu0 %v423
      %659 = vmatmul.mubr.bf16.gmra.mxu0 %v422
      %v660 = vpop.f32.mrf.mxu0
      %v661 = vadd.f32 0.0, %v660
      %v662 = vpop.f32.mrf.mxu0
      %v663 = vpop.f32.mrf.mxu0
      %v664 = vadd.f32 0.0, %v663
      %v665 = vpop.f32.mrf.mxu0
      %666 = vmatprep.mubr.bf16.mxu0 %v425
      %667 = vmatmul.mubr.bf16.gmra.mxu0 %v424
      %v668 = vpop.f32.mrf.mxu0
      %v669 = vadd.f32 0.0, %v668
      %v670 = vpop.f32.mrf.mxu0
      %v671 = vpop.f32.mrf.mxu0
      %v672 = vadd.f32 0.0, %v671
      %v673 = vpop.f32.mrf.mxu0
      %674 = vmatprep.mubr.bf16.mxu0 %v427
      %675 = vmatmul.mubr.bf16.gmra.mxu0 %v426
      %v676 = vpop.f32.mrf.mxu0
      %v677 = vadd.f32 0.0, %v676
      %v678 = vpop.f32.mrf.mxu0
      %v679 = vpop.f32.mrf.mxu0
      %v680 = vadd.f32 0.0, %v679
      %v681 = vpop.f32.mrf.mxu0
      %682 = vmatprep.mubr.bf16.mxu0 %v429
      %683 = vmatmul.mubr.bf16.gmra.mxu0 %v428
      %v684 = vpop.f32.mrf.mxu0
      %v685 = vadd.f32 0.0, %v684
      %v686 = vpop.f32.mrf.mxu0
      %v687 = vpop.f32.mrf.mxu0
      %v688 = vadd.f32 0.0, %v687
      %v689 = vpop.f32.mrf.mxu0
      %690 = vmatprep.mubr.bf16.mxu0 %v431
      %691 = vmatmul.mubr.bf16.gmra.mxu0 %v430
      %v692 = vpop.f32.mrf.mxu0
      %v693 = vadd.f32 0.0, %v692
      %v694 = vpop.f32.mrf.mxu0
      %v695 = vpop.f32.mrf.mxu0
      %v696 = vpop.f32.mrf.mxu0
      %697 = vdwg.mxu0
      %v698 = vpack.c.bf16 %v600, %v597
      %v699 = vpack.c.bf16 %v608, %v605
      %v700 = vpack.c.bf16 %v616, %v613
      %v701 = vpack.c.bf16 %v624, %v621
      %v702 = vpack.c.bf16 %v632, %v629
      %v703 = vpack.c.bf16 %v640, %v637
      %v704 = vpack.c.bf16 %v648, %v645
      %v705 = vpack.c.bf16 %v656, %v653
      %v706 = vpack.c.bf16 %v664, %v661
      %v707 = vpack.c.bf16 %v672, %v669
      %v708 = vpack.c.bf16 %v680, %v677
      %v709 = vpack.c.bf16 %v688, %v685
      %v710 = vpack.c.bf16 %v693, %v693
      %v712 = vpack.i.b16 %v465, %v465
      %v714 = vlaneseq
      %v715 = vshrl.u32 %v714, 7
      %v716 = vsub.s32 0, %v715
      %v717 = vrot.slane %v712, %v716
      %v718 = vadd.bf16 %v698, %v717
      %v719 = vadd.bf16 %v699, %v717
      %v720 = vadd.bf16 %v700, %v717
      %v721 = vadd.bf16 %v701, %v717
      %v722 = vadd.bf16 %v702, %v717
      %v723 = vadd.bf16 %v703, %v717
      %v724 = vadd.bf16 %v704, %v717
      %v725 = vadd.bf16 %v705, %v717
      %v726 = vadd.bf16 %v706, %v717
      %v727 = vadd.bf16 %v707, %v717
      %v728 = vadd.bf16 %v708, %v717
      %v729 = vadd.bf16 %v709, %v717
      %v730 = vadd.bf16 %v710, %v717
      %v731 = vtanh.bf16.pop %v718
      %v732 = vtanh.bf16.pop %v719
      %v733 = vtanh.bf16.pop %v720
      %v734 = vtanh.bf16.pop %v721
      %v735 = vtanh.bf16.pop %v722
      %v736 = vtanh.bf16.pop %v723
      %v737 = vtanh.bf16.pop %v724
      %v738 = vtanh.bf16.pop %v725
      %v739 = vtanh.bf16.pop %v726
      %v740 = vtanh.bf16.pop %v727
      %v741 = vtanh.bf16.pop %v728
      %v742 = vtanh.bf16.pop %v729
      %v743 = vtanh.bf16.pop %v730
      %v744 = vld [vmem:[#allocation8] sm:$0xf]
      %v745 = vld [vmem:[#allocation8 + $0x4] sm:$0xf]
      %v746 = vld [vmem:[#allocation8 + $0x8] sm:$0xf]
      %v747 = vld [vmem:[#allocation8 + $0xc] sm:$0xf]
      %v748 = vld [vmem:[#allocation8 + $0x10] sm:$0xf]
      %v749 = vld [vmem:[#allocation8 + $0x14] sm:$0xf]
      %v750 = vld [vmem:[#allocation8 + $0x18] sm:$0xf]
      %v751 = vld [vmem:[#allocation8 + $0x1c] sm:$0xf]
      %v752 = vld [vmem:[#allocation8 + $0x20] sm:$0xf]
      %v753 = vld [vmem:[#allocation8 + $0x24] sm:$0xf]
      %v754 = vld [vmem:[#allocation8 + $0x28] sm:$0xf]
      %v755 = vld [vmem:[#allocation8 + $0x2c] sm:$0xf]
      %v756 = vld [vmem:[#allocation8 + $0x30] sm:$0xf]
      %v757 = vld [vmem:[#allocation8 + $0x34] sm:$0xf]
      %v758 = vld [vmem:[#allocation8 + $0x38] sm:$0xf]
      %v759 = vld [vmem:[#allocation8 + $0x3c] sm:$0xf]
      %v760 = vld [vmem:[%s4] sm:$0x1]
      %v761 = vpack.c.bf16 %v760, %v760
      %v778 = vunpack.c.l.b16 %v744
      %v779 = vunpack.c.l.b16 %v745
      %v780 = vunpack.c.l.b16 %v746
      %v781 = vunpack.c.l.b16 %v747
      %v782 = vunpack.c.l.b16 %v748
      %v783 = vunpack.c.l.b16 %v749
      %v784 = vunpack.c.l.b16 %v750
      %v785 = vunpack.c.l.b16 %v751
      %v786 = vunpack.c.l.b16 %v752
      %v787 = vunpack.c.l.b16 %v753
      %v788 = vunpack.c.l.b16 %v754
      %v789 = vunpack.c.l.b16 %v755
      %v790 = vunpack.c.l.b16 %v756
      %v791 = vunpack.c.l.b16 %v757
      %v792 = vunpack.c.l.b16 %v758
      %v793 = vunpack.c.l.b16 %v759
      %v794 = vpack.c.b16 %v779, %v778
      %v795 = vpack.c.b16 %v781, %v780
      %v796 = vpack.c.b16 %v783, %v782
      %v797 = vpack.c.b16 %v785, %v784
      %v798 = vpack.c.b16 %v787, %v786
      %v799 = vpack.c.b16 %v789, %v788
      %v800 = vpack.c.b16 %v791, %v790
      %v801 = vpack.c.b16 %v793, %v792
      %810 = vmatprep.subr.bf16.mxu0 0
      %811 = vmatpush1.bf16.msra.mxu0 %v801
      %812 = vmatprep.subr.bf16.mxu0 0
      %813 = vmatpush1.bf16.msra.mxu0 %v800
      %814 = vmatprep.subr.bf16.mxu0 0
      %815 = vmatpush1.bf16.msra.mxu0 %v799
      %816 = vmatprep.subr.bf16.mxu0 0
      %817 = vmatpush1.bf16.msra.mxu0 %v798
      %818 = vmatprep.subr.bf16.mxu0 0
      %819 = vmatpush1.bf16.msra.mxu0 %v797
      %820 = vmatprep.subr.bf16.mxu0 0
      %821 = vmatpush1.bf16.msra.mxu0 %v796
      %822 = vmatprep.subr.bf16.mxu0 0
      %823 = vmatpush1.bf16.msra.mxu0 %v795
      %824 = vmatprep.subr.bf16.mxu0 0
      %825 = vmatpush1.bf16.msra.mxu0 %v794
      %826 = vmatprep.subr.bf16.mxu0 0
      %827 = vmatpush2.bf16.msra.mxu0 0
      %828 = vmatprep.subr.bf16.mxu0 0
      %829 = vmatpush2.bf16.msra.mxu0 0
      %830 = vmatprep.subr.bf16.mxu0 0
      %831 = vmatpush2.bf16.msra.mxu0 0
      %832 = vmatprep.subr.bf16.mxu0 0
      %833 = vmatpush2.bf16.msra.mxu0 0
      %834 = vmatprep.subr.bf16.mxu0 0
      %835 = vmatpush2.bf16.msra.mxu0 0
      %836 = vmatprep.subr.bf16.mxu0 0
      %837 = vmatpush2.bf16.msra.mxu0 0
      %838 = vmatprep.subr.bf16.mxu0 0
      %839 = vmatpush2.bf16.msra.mxu0 0
      %840 = vmatprep.subr.bf16.mxu0 0
      %841 = vmatpush2.bf16.msra.mxu0 0
      %842 = vmatprep.mubr.bf16.mxu0 0
      %843 = vmatmul.mubr.bf16.gmra.mxu0 %v731
      %v844 = vpop.f32.mrf.mxu0
      %v845 = vadd.f32 0.0, %v844
      %v846 = vpop.f32.mrf.mxu0
      %v847 = vpop.f32.mrf.mxu0
      %v848 = vadd.f32 0.0, %v847
      %v849 = vpop.f32.mrf.mxu0
      %850 = vmatprep.mubr.bf16.mxu0 0
      %851 = vmatmul.mubr.bf16.gmra.mxu0 %v732
      %v852 = vpop.f32.mrf.mxu0
      %v853 = vadd.f32 0.0, %v852
      %v854 = vpop.f32.mrf.mxu0
      %v855 = vpop.f32.mrf.mxu0
      %v856 = vadd.f32 0.0, %v855
      %v857 = vpop.f32.mrf.mxu0
      %858 = vmatprep.mubr.bf16.mxu0 0
      %859 = vmatmul.mubr.bf16.gmra.mxu0 %v733
      %v860 = vpop.f32.mrf.mxu0
      %v861 = vadd.f32 0.0, %v860
      %v862 = vpop.f32.mrf.mxu0
      %v863 = vpop.f32.mrf.mxu0
      %v864 = vadd.f32 0.0, %v863
      %v865 = vpop.f32.mrf.mxu0
      %866 = vmatprep.mubr.bf16.mxu0 0
      %867 = vmatmul.mubr.bf16.gmra.mxu0 %v734
      %v868 = vpop.f32.mrf.mxu0
      %v869 = vadd.f32 0.0, %v868
      %v870 = vpop.f32.mrf.mxu0
      %v871 = vpop.f32.mrf.mxu0
      %v872 = vadd.f32 0.0, %v871
      %v873 = vpop.f32.mrf.mxu0
      %874 = vmatprep.mubr.bf16.mxu0 0
      %875 = vmatmul.mubr.bf16.gmra.mxu0 %v735
      %v876 = vpop.f32.mrf.mxu0
      %v877 = vadd.f32 0.0, %v876
      %v878 = vpop.f32.mrf.mxu0
      %v879 = vpop.f32.mrf.mxu0
      %v880 = vadd.f32 0.0, %v879
      %v881 = vpop.f32.mrf.mxu0
      %882 = vmatprep.mubr.bf16.mxu0 0
      %883 = vmatmul.mubr.bf16.gmra.mxu0 %v736
      %v884 = vpop.f32.mrf.mxu0
      %v885 = vadd.f32 0.0, %v884
      %v886 = vpop.f32.mrf.mxu0
      %v887 = vpop.f32.mrf.mxu0
      %v888 = vadd.f32 0.0, %v887
      %v889 = vpop.f32.mrf.mxu0
      %890 = vmatprep.mubr.bf16.mxu0 0
      %891 = vmatmul.mubr.bf16.gmra.mxu0 %v737
      %v892 = vpop.f32.mrf.mxu0
      %v893 = vadd.f32 0.0, %v892
      %v894 = vpop.f32.mrf.mxu0
      %v895 = vpop.f32.mrf.mxu0
      %v896 = vadd.f32 0.0, %v895
      %v897 = vpop.f32.mrf.mxu0
      %898 = vmatprep.mubr.bf16.mxu0 0
      %899 = vmatmul.mubr.bf16.gmra.mxu0 %v738
      %v900 = vpop.f32.mrf.mxu0
      %v901 = vadd.f32 0.0, %v900
      %v902 = vpop.f32.mrf.mxu0
      %v903 = vpop.f32.mrf.mxu0
      %v904 = vadd.f32 0.0, %v903
      %v905 = vpop.f32.mrf.mxu0
      %906 = vmatprep.mubr.bf16.mxu0 0
      %907 = vmatmul.mubr.bf16.gmra.mxu0 %v739
      %v908 = vpop.f32.mrf.mxu0
      %v909 = vadd.f32 0.0, %v908
      %v910 = vpop.f32.mrf.mxu0
      %v911 = vpop.f32.mrf.mxu0
      %v912 = vadd.f32 0.0, %v911
      %v913 = vpop.f32.mrf.mxu0
      %914 = vmatprep.mubr.bf16.mxu0 0
      %915 = vmatmul.mubr.bf16.gmra.mxu0 %v740
      %v916 = vpop.f32.mrf.mxu0
      %v917 = vadd.f32 0.0, %v916
      %v918 = vpop.f32.mrf.mxu0
      %v919 = vpop.f32.mrf.mxu0
      %v920 = vadd.f32 0.0, %v919
      %v921 = vpop.f32.mrf.mxu0
      %922 = vmatprep.mubr.bf16.mxu0 0
      %923 = vmatmul.mubr.bf16.gmra.mxu0 %v741
      %v924 = vpop.f32.mrf.mxu0
      %v925 = vadd.f32 0.0, %v924
      %v926 = vpop.f32.mrf.mxu0
      %v927 = vpop.f32.mrf.mxu0
      %v928 = vadd.f32 0.0, %v927
      %v929 = vpop.f32.mrf.mxu0
      %930 = vmatprep.mubr.bf16.mxu0 0
      %931 = vmatmul.mubr.bf16.gmra.mxu0 %v742
      %v932 = vpop.f32.mrf.mxu0
      %v933 = vadd.f32 0.0, %v932
      %v934 = vpop.f32.mrf.mxu0
      %v935 = vpop.f32.mrf.mxu0
      %v936 = vadd.f32 0.0, %v935
      %v937 = vpop.f32.mrf.mxu0
      %938 = vmatprep.mubr.bf16.mxu0 0
      %939 = vmatmul.mubr.bf16.gmra.mxu0 %v743
      %v940 = vpop.f32.mrf.mxu0
      %v941 = vadd.f32 0.0, %v940
      %v942 = vpop.f32.mrf.mxu0
      %v943 = vpop.f32.mrf.mxu0
      %v944 = vpop.f32.mrf.mxu0
      %945 = vdwg.mxu0
      %v946 = vpack.c.bf16 %v848, %v845
      %v947 = vpack.c.bf16 %v856, %v853
      %v948 = vpack.c.bf16 %v864, %v861
      %v949 = vpack.c.bf16 %v872, %v869
      %v950 = vpack.c.bf16 %v880, %v877
      %v951 = vpack.c.bf16 %v888, %v885
      %v952 = vpack.c.bf16 %v896, %v893
      %v953 = vpack.c.bf16 %v904, %v901
      %v954 = vpack.c.bf16 %v912, %v909
      %v955 = vpack.c.bf16 %v920, %v917
      %v956 = vpack.c.bf16 %v928, %v925
      %v957 = vpack.c.bf16 %v936, %v933
      %v958 = vpack.c.bf16 %v941, %v941
      %v960 = vpack.i.b16 %v761, %v761
      %v962 = vlaneseq
      %v963 = vshrl.u32 %v962, 7
      %v964 = vsub.s32 0, %v963
      %v965 = vrot.slane %v960, %v964
      %v966 = vadd.bf16 %v946, %v965
      %v967 = vadd.bf16 %v947, %v965
      %v968 = vadd.bf16 %v948, %v965
      %v969 = vadd.bf16 %v949, %v965
      %v970 = vadd.bf16 %v950, %v965
      %v971 = vadd.bf16 %v951, %v965
      %v972 = vadd.bf16 %v952, %v965
      %v973 = vadd.bf16 %v953, %v965
      %v974 = vadd.bf16 %v954, %v965
      %v975 = vadd.bf16 %v955, %v965
      %v976 = vadd.bf16 %v956, %v965
      %v977 = vadd.bf16 %v957, %v965
      %v978 = vadd.bf16 %v958, %v965
      %v979 = vtanh.bf16.pop %v966
      %v980 = vtanh.bf16.pop %v967
      %v981 = vtanh.bf16.pop %v968
      %v982 = vtanh.bf16.pop %v969
      %v983 = vtanh.bf16.pop %v970
      %v984 = vtanh.bf16.pop %v971
      %v985 = vtanh.bf16.pop %v972
      %v986 = vtanh.bf16.pop %v973
      %v987 = vtanh.bf16.pop %v974
      %v988 = vtanh.bf16.pop %v975
      %v989 = vtanh.bf16.pop %v976
      %v990 = vtanh.bf16.pop %v977
      %v991 = vtanh.bf16.pop %v978
      %v992 = vld [vmem:[#allocation9] sm:$0xf]
      %v993 = vld [vmem:[#allocation9 + $0x4] sm:$0xf]
      %v994 = vld [vmem:[#allocation9 + $0x8] sm:$0xf]
      %v995 = vld [vmem:[#allocation9 + $0xc] sm:$0xf]
      %v996 = vld [vmem:[#allocation9 + $0x10] sm:$0xf]
      %v997 = vld [vmem:[#allocation9 + $0x14] sm:$0xf]
      %v998 = vld [vmem:[#allocation9 + $0x18] sm:$0xf]
      %v999 = vld [vmem:[#allocation9 + $0x1c] sm:$0xf]
      %v1000 = vld [vmem:[#allocation9 + $0x20] sm:$0xf]
      %v1001 = vld [vmem:[#allocation9 + $0x24] sm:$0xf]
      %v1002 = vld [vmem:[#allocation9 + $0x28] sm:$0xf]
      %v1003 = vld [vmem:[#allocation9 + $0x2c] sm:$0xf]
      %v1004 = vld [vmem:[#allocation9 + $0x30] sm:$0xf]
      %v1005 = vld [vmem:[#allocation9 + $0x34] sm:$0xf]
      %v1006 = vld [vmem:[#allocation9 + $0x38] sm:$0xf]
      %v1007 = vld [vmem:[#allocation9 + $0x3c] sm:$0xf]
      %v1008 = vld [vmem:[%s6] sm:$0x1]
      %v1009 = vpack.c.bf16 %v1008, %v1008
      %v1026 = vunpack.c.l.b16 %v992
      %v1027 = vunpack.c.l.b16 %v993
      %v1028 = vunpack.c.l.b16 %v994
      %v1029 = vunpack.c.l.b16 %v995
      %v1030 = vunpack.c.l.b16 %v996
      %v1031 = vunpack.c.l.b16 %v997
      %v1032 = vunpack.c.l.b16 %v998
      %v1033 = vunpack.c.l.b16 %v999
      %v1034 = vunpack.c.l.b16 %v1000
      %v1035 = vunpack.c.l.b16 %v1001
      %v1036 = vunpack.c.l.b16 %v1002
      %v1037 = vunpack.c.l.b16 %v1003
      %v1038 = vunpack.c.l.b16 %v1004
      %v1039 = vunpack.c.l.b16 %v1005
      %v1040 = vunpack.c.l.b16 %v1006
      %v1041 = vunpack.c.l.b16 %v1007
      %v1042 = vpack.c.b16 %v1027, %v1026
      %v1043 = vpack.c.b16 %v1029, %v1028
      %v1044 = vpack.c.b16 %v1031, %v1030
      %v1045 = vpack.c.b16 %v1033, %v1032
      %v1046 = vpack.c.b16 %v1035, %v1034
      %v1047 = vpack.c.b16 %v1037, %v1036
      %v1048 = vpack.c.b16 %v1039, %v1038
      %v1049 = vpack.c.b16 %v1041, %v1040
      %1058 = vmatprep.subr.bf16.mxu0 0
      %1059 = vmatpush1.bf16.msra.mxu0 %v1049
      %1060 = vmatprep.subr.bf16.mxu0 0
      %1061 = vmatpush1.bf16.msra.mxu0 %v1048
      %1062 = vmatprep.subr.bf16.mxu0 0
      %1063 = vmatpush1.bf16.msra.mxu0 %v1047
      %1064 = vmatprep.subr.bf16.mxu0 0
      %1065 = vmatpush1.bf16.msra.mxu0 %v1046
      %1066 = vmatprep.subr.bf16.mxu0 0
      %1067 = vmatpush1.bf16.msra.mxu0 %v1045
      %1068 = vmatprep.subr.bf16.mxu0 0
      %1069 = vmatpush1.bf16.msra.mxu0 %v1044
      %1070 = vmatprep.subr.bf16.mxu0 0
      %1071 = vmatpush1.bf16.msra.mxu0 %v1043
      %1072 = vmatprep.subr.bf16.mxu0 0
      %1073 = vmatpush1.bf16.msra.mxu0 %v1042
      %1074 = vmatprep.subr.bf16.mxu0 0
      %1075 = vmatpush2.bf16.msra.mxu0 0
      %1076 = vmatprep.subr.bf16.mxu0 0
      %1077 = vmatpush2.bf16.msra.mxu0 0
      %1078 = vmatprep.subr.bf16.mxu0 0
      %1079 = vmatpush2.bf16.msra.mxu0 0
      %1080 = vmatprep.subr.bf16.mxu0 0
      %1081 = vmatpush2.bf16.msra.mxu0 0
      %1082 = vmatprep.subr.bf16.mxu0 0
      %1083 = vmatpush2.bf16.msra.mxu0 0
      %1084 = vmatprep.subr.bf16.mxu0 0
      %1085 = vmatpush2.bf16.msra.mxu0 0
      %1086 = vmatprep.subr.bf16.mxu0 0
      %1087 = vmatpush2.bf16.msra.mxu0 0
      %1088 = vmatprep.subr.bf16.mxu0 0
      %1089 = vmatpush2.bf16.msra.mxu0 0
      %1090 = vmatprep.mubr.bf16.mxu0 0
      %1091 = vmatmul.mubr.bf16.gmra.mxu0 %v979
      %v1092 = vpop.f32.mrf.mxu0
      %v1093 = vadd.f32 0.0, %v1092
      %v1094 = vpop.f32.mrf.mxu0
      %v1095 = vpop.f32.mrf.mxu0
      %v1096 = vadd.f32 0.0, %v1095
      %v1097 = vpop.f32.mrf.mxu0
      %1098 = vmatprep.mubr.bf16.mxu0 0
      %1099 = vmatmul.mubr.bf16.gmra.mxu0 %v980
      %v1100 = vpop.f32.mrf.mxu0
      %v1101 = vadd.f32 0.0, %v1100
      %v1102 = vpop.f32.mrf.mxu0
      %v1103 = vpop.f32.mrf.mxu0
      %v1104 = vadd.f32 0.0, %v1103
      %v1105 = vpop.f32.mrf.mxu0
      %1106 = vmatprep.mubr.bf16.mxu0 0
      %1107 = vmatmul.mubr.bf16.gmra.mxu0 %v981
      %v1108 = vpop.f32.mrf.mxu0
      %v1109 = vadd.f32 0.0, %v1108
      %v1110 = vpop.f32.mrf.mxu0
      %v1111 = vpop.f32.mrf.mxu0
      %v1112 = vadd.f32 0.0, %v1111
      %v1113 = vpop.f32.mrf.mxu0
      %1114 = vmatprep.mubr.bf16.mxu0 0
      %1115 = vmatmul.mubr.bf16.gmra.mxu0 %v982
      %v1116 = vpop.f32.mrf.mxu0
      %v1117 = vadd.f32 0.0, %v1116
      %v1118 = vpop.f32.mrf.mxu0
      %v1119 = vpop.f32.mrf.mxu0
      %v1120 = vadd.f32 0.0, %v1119
      %v1121 = vpop.f32.mrf.mxu0
      %1122 = vmatprep.mubr.bf16.mxu0 0
      %1123 = vmatmul.mubr.bf16.gmra.mxu0 %v983
      %v1124 = vpop.f32.mrf.mxu0
      %v1125 = vadd.f32 0.0, %v1124
      %v1126 = vpop.f32.mrf.mxu0
      %v1127 = vpop.f32.mrf.mxu0
      %v1128 = vadd.f32 0.0, %v1127
      %v1129 = vpop.f32.mrf.mxu0
      %1130 = vmatprep.mubr.bf16.mxu0 0
      %1131 = vmatmul.mubr.bf16.gmra.mxu0 %v984
      %v1132 = vpop.f32.mrf.mxu0
      %v1133 = vadd.f32 0.0, %v1132
      %v1134 = vpop.f32.mrf.mxu0
      %v1135 = vpop.f32.mrf.mxu0
      %v1136 = vadd.f32 0.0, %v1135
      %v1137 = vpop.f32.mrf.mxu0
      %1138 = vmatprep.mubr.bf16.mxu0 0
      %1139 = vmatmul.mubr.bf16.gmra.mxu0 %v985
      %v1140 = vpop.f32.mrf.mxu0
      %v1141 = vadd.f32 0.0, %v1140
      %v1142 = vpop.f32.mrf.mxu0
      %v1143 = vpop.f32.mrf.mxu0
      %v1144 = vadd.f32 0.0, %v1143
      %v1145 = vpop.f32.mrf.mxu0
      %1146 = vmatprep.mubr.bf16.mxu0 0
      %1147 = vmatmul.mubr.bf16.gmra.mxu0 %v986
      %v1148 = vpop.f32.mrf.mxu0
      %v1149 = vadd.f32 0.0, %v1148
      %v1150 = vpop.f32.mrf.mxu0
      %v1151 = vpop.f32.mrf.mxu0
      %v1152 = vadd.f32 0.0, %v1151
      %v1153 = vpop.f32.mrf.mxu0
      %1154 = vmatprep.mubr.bf16.mxu0 0
      %1155 = vmatmul.mubr.bf16.gmra.mxu0 %v987
      %v1156 = vpop.f32.mrf.mxu0
      %v1157 = vadd.f32 0.0, %v1156
      %v1158 = vpop.f32.mrf.mxu0
      %v1159 = vpop.f32.mrf.mxu0
      %v1160 = vadd.f32 0.0, %v1159
      %v1161 = vpop.f32.mrf.mxu0
      %1162 = vmatprep.mubr.bf16.mxu0 0
      %1163 = vmatmul.mubr.bf16.gmra.mxu0 %v988
      %v1164 = vpop.f32.mrf.mxu0
      %v1165 = vadd.f32 0.0, %v1164
      %v1166 = vpop.f32.mrf.mxu0
      %v1167 = vpop.f32.mrf.mxu0
      %v1168 = vadd.f32 0.0, %v1167
      %v1169 = vpop.f32.mrf.mxu0
      %1170 = vmatprep.mubr.bf16.mxu0 0
      %1171 = vmatmul.mubr.bf16.gmra.mxu0 %v989
      %v1172 = vpop.f32.mrf.mxu0
      %v1173 = vadd.f32 0.0, %v1172
      %v1174 = vpop.f32.mrf.mxu0
      %v1175 = vpop.f32.mrf.mxu0
      %v1176 = vadd.f32 0.0, %v1175
      %v1177 = vpop.f32.mrf.mxu0
      %1178 = vmatprep.mubr.bf16.mxu0 0
      %1179 = vmatmul.mubr.bf16.gmra.mxu0 %v990
      %v1180 = vpop.f32.mrf.mxu0
      %v1181 = vadd.f32 0.0, %v1180
      %v1182 = vpop.f32.mrf.mxu0
      %v1183 = vpop.f32.mrf.mxu0
      %v1184 = vadd.f32 0.0, %v1183
      %v1185 = vpop.f32.mrf.mxu0
      %1186 = vmatprep.mubr.bf16.mxu0 0
      %1187 = vmatmul.mubr.bf16.gmra.mxu0 %v991
      %v1188 = vpop.f32.mrf.mxu0
      %v1189 = vadd.f32 0.0, %v1188
      %v1190 = vpop.f32.mrf.mxu0
      %v1191 = vpop.f32.mrf.mxu0
      %v1192 = vpop.f32.mrf.mxu0
      %1193 = vdwg.mxu0
      %v1194 = vpack.c.bf16 %v1096, %v1093
      %v1195 = vpack.c.bf16 %v1104, %v1101
      %v1196 = vpack.c.bf16 %v1112, %v1109
      %v1197 = vpack.c.bf16 %v1120, %v1117
      %v1198 = vpack.c.bf16 %v1128, %v1125
      %v1199 = vpack.c.bf16 %v1136, %v1133
      %v1200 = vpack.c.bf16 %v1144, %v1141
      %v1201 = vpack.c.bf16 %v1152, %v1149
      %v1202 = vpack.c.bf16 %v1160, %v1157
      %v1203 = vpack.c.bf16 %v1168, %v1165
      %v1204 = vpack.c.bf16 %v1176, %v1173
      %v1205 = vpack.c.bf16 %v1184, %v1181
      %v1206 = vpack.c.bf16 %v1189, %v1189
      %v1208 = vpack.i.b16 %v1009, %v1009
      %v1210 = vlaneseq
      %v1211 = vshrl.u32 %v1210, 7
      %v1212 = vsub.s32 0, %v1211
      %v1213 = vrot.slane %v1208, %v1212
      %v1214 = vadd.bf16 %v1194, %v1213
      %v1215 = vadd.bf16 %v1195, %v1213
      %v1216 = vadd.bf16 %v1196, %v1213
      %v1217 = vadd.bf16 %v1197, %v1213
      %v1218 = vadd.bf16 %v1198, %v1213
      %v1219 = vadd.bf16 %v1199, %v1213
      %v1220 = vadd.bf16 %v1200, %v1213
      %v1221 = vadd.bf16 %v1201, %v1213
      %v1222 = vadd.bf16 %v1202, %v1213
      %v1223 = vadd.bf16 %v1203, %v1213
      %v1224 = vadd.bf16 %v1204, %v1213
      %v1225 = vadd.bf16 %v1205, %v1213
      %v1226 = vadd.bf16 %v1206, %v1213
      %v1227 = vtanh.bf16.pop %v1214
      %v1228 = vtanh.bf16.pop %v1215
      %v1229 = vtanh.bf16.pop %v1216
      %v1230 = vtanh.bf16.pop %v1217
      %v1231 = vtanh.bf16.pop %v1218
      %v1232 = vtanh.bf16.pop %v1219
      %v1233 = vtanh.bf16.pop %v1220
      %v1234 = vtanh.bf16.pop %v1221
      %v1235 = vtanh.bf16.pop %v1222
      %v1236 = vtanh.bf16.pop %v1223
      %v1237 = vtanh.bf16.pop %v1224
      %v1238 = vtanh.bf16.pop %v1225
      %v1239 = vtanh.bf16.pop %v1226
      %v1253 = vunpack.c.l.b16 %v1227
      %v1254 = vunpack.c.h.b16 %v1227
      %v1255 = vunpack.c.l.b16 %v1228
      %v1256 = vunpack.c.h.b16 %v1228
      %v1257 = vunpack.c.l.b16 %v1229
      %v1258 = vunpack.c.h.b16 %v1229
      %v1259 = vunpack.c.l.b16 %v1230
      %v1260 = vunpack.c.h.b16 %v1230
      %v1261 = vunpack.c.l.b16 %v1231
      %v1262 = vunpack.c.h.b16 %v1231
      %v1263 = vunpack.c.l.b16 %v1232
      %v1264 = vunpack.c.h.b16 %v1232
      %v1265 = vunpack.c.l.b16 %v1233
      %v1266 = vunpack.c.h.b16 %v1233
      %v1267 = vunpack.c.l.b16 %v1234
      %v1268 = vunpack.c.h.b16 %v1234
      %v1269 = vunpack.c.l.b16 %v1235
      %v1270 = vunpack.c.h.b16 %v1235
      %v1271 = vunpack.c.l.b16 %v1236
      %v1272 = vunpack.c.h.b16 %v1236
      %v1273 = vunpack.c.l.b16 %v1237
      %v1274 = vunpack.c.h.b16 %v1237
      %v1275 = vunpack.c.l.b16 %v1238
      %v1276 = vunpack.c.h.b16 %v1238
      %v1277 = vunpack.c.l.b16 %v1239
      %v1278 = vpack.c.b16 %v1253, %v1253
      %v1279 = vpack.c.b16 %v1254, %v1254
      %v1280 = vpack.c.b16 %v1255, %v1255
      %v1281 = vpack.c.b16 %v1256, %v1256
      %v1282 = vpack.c.b16 %v1257, %v1257
      %v1283 = vpack.c.b16 %v1258, %v1258
      %v1284 = vpack.c.b16 %v1259, %v1259
      %v1285 = vpack.c.b16 %v1260, %v1260
      %v1286 = vpack.c.b16 %v1261, %v1261
      %v1287 = vpack.c.b16 %v1262, %v1262
      %v1288 = vpack.c.b16 %v1263, %v1263
      %v1289 = vpack.c.b16 %v1264, %v1264
      %v1290 = vpack.c.b16 %v1265, %v1265
      %v1291 = vpack.c.b16 %v1266, %v1266
      %v1292 = vpack.c.b16 %v1267, %v1267
      %v1293 = vpack.c.b16 %v1268, %v1268
      %v1294 = vpack.c.b16 %v1269, %v1269
      %v1295 = vpack.c.b16 %v1270, %v1270
      %v1296 = vpack.c.b16 %v1271, %v1271
      %v1297 = vpack.c.b16 %v1272, %v1272
      %v1298 = vpack.c.b16 %v1273, %v1273
      %v1299 = vpack.c.b16 %v1274, %v1274
      %v1300 = vpack.c.b16 %v1275, %v1275
      %v1301 = vpack.c.b16 %v1276, %v1276
      %v1302 = vpack.c.b16 %v1277, %v1277
      %1328 = vst [vmem:[#allocation2] sm:$0xf] %v1278
      %1329 = vst [vmem:[#allocation2 + $0x4] sm:$0xf] %v1279
      %1330 = vst [vmem:[#allocation2 + $0x8] sm:$0xf] %v1280
      %1331 = vst [vmem:[#allocation2 + $0xc] sm:$0xf] %v1281
      %1332 = vst [vmem:[#allocation2 + $0x10] sm:$0xf] %v1282
      %1333 = vst [vmem:[#allocation2 + $0x14] sm:$0xf] %v1283
      %1334 = vst [vmem:[#allocation2 + $0x18] sm:$0xf] %v1284
      %1335 = vst [vmem:[#allocation2 + $0x1c] sm:$0xf] %v1285
      %1336 = vst [vmem:[#allocation2 + $0x20] sm:$0xf] %v1286
      %1337 = vst [vmem:[#allocation2 + $0x24] sm:$0xf] %v1287
      %1338 = vst [vmem:[#allocation2 + $0x28] sm:$0xf] %v1288
      %1339 = vst [vmem:[#allocation2 + $0x2c] sm:$0xf] %v1289
      %1340 = vst [vmem:[#allocation2 + $0x30] sm:$0xf] %v1290
      %1341 = vst [vmem:[#allocation2 + $0x34] sm:$0xf] %v1291
      %1342 = vst [vmem:[#allocation2 + $0x38] sm:$0xf] %v1292
      %1343 = vst [vmem:[#allocation2 + $0x3c] sm:$0xf] %v1293
      %1344 = vst [vmem:[#allocation2 + $0x40] sm:$0xf] %v1294
      %1345 = vst [vmem:[#allocation2 + $0x44] sm:$0xf] %v1295
      %1346 = vst [vmem:[#allocation2 + $0x48] sm:$0xf] %v1296
      %1347 = vst [vmem:[#allocation2 + $0x4c] sm:$0xf] %v1297
      %1348 = vst [vmem:[#allocation2 + $0x50] sm:$0xf] %v1298
      %1349 = vst [vmem:[#allocation2 + $0x54] sm:$0xf] %v1299
      %1350 = vst [vmem:[#allocation2 + $0x58] sm:$0xf] %v1300
      %1351 = vst [vmem:[#allocation2 + $0x5c] sm:$0xf] %v1301
      %1352 = vst [vmem:[#allocation2 + $0x60] sm:$0xf] %v1302
    $region61: #{tpu_custom_call.1} parent=1 // pred_fallthru
      _
    %v1353 = vld [vmem:[#allocation2] sm:$0xf]
    %v1354 = vld [vmem:[#allocation2 + $0x4] sm:$0xf]
    %v1355 = vld [vmem:[#allocation2 + $0x8] sm:$0xf]
    %v1356 = vld [vmem:[#allocation2 + $0xc] sm:$0xf]
    %v1357 = vld [vmem:[#allocation2 + $0x10] sm:$0xf]
    %v1358 = vld [vmem:[#allocation2 + $0x14] sm:$0xf]
    %v1359 = vld [vmem:[#allocation2 + $0x18] sm:$0xf]
    %v1360 = vld [vmem:[#allocation2 + $0x1c] sm:$0xf]
    %v1361 = vld [vmem:[#allocation2 + $0x20] sm:$0xf]
    %v1362 = vld [vmem:[#allocation2 + $0x24] sm:$0xf]
    %v1363 = vld [vmem:[#allocation2 + $0x28] sm:$0xf]
    %v1364 = vld [vmem:[#allocation2 + $0x2c] sm:$0xf]
    %v1365 = vld [vmem:[#allocation2 + $0x30] sm:$0xf]
    %v1366 = vld [vmem:[#allocation2 + $0x34] sm:$0xf]
    %v1367 = vld [vmem:[#allocation2 + $0x38] sm:$0xf]
    %v1368 = vld [vmem:[#allocation2 + $0x3c] sm:$0xf]
    %v1369 = vld [vmem:[#allocation2 + $0x40] sm:$0xf]
    %v1370 = vld [vmem:[#allocation2 + $0x44] sm:$0xf]
    %v1371 = vld [vmem:[#allocation2 + $0x48] sm:$0xf]
    %v1372 = vld [vmem:[#allocation2 + $0x4c] sm:$0xf]
    %v1373 = vld [vmem:[#allocation2 + $0x50] sm:$0xf]
    %v1374 = vld [vmem:[#allocation2 + $0x54] sm:$0xf]
    %v1375 = vld [vmem:[#allocation2 + $0x58] sm:$0xf]
    %v1376 = vld [vmem:[#allocation2 + $0x5c] sm:$0xf]
    %v1377 = vld [vmem:[#allocation2 + $0x60] sm:$0xf]
    %v1378 = vld [vmem:[#allocation11] sm:$0xff]
    %v1379 = vld [vmem:[#allocation11 + $0x8] sm:$0xff]
    %v1380 = vld [vmem:[#allocation11 + $0x10] sm:$0xff]
    %v1381 = vld [vmem:[#allocation11 + $0x18] sm:$0xff]
    %v1382 = vld [vmem:[#allocation11 + $0x20] sm:$0xff]
    %v1383 = vld [vmem:[#allocation11 + $0x28] sm:$0xff]
    %v1384 = vld [vmem:[#allocation11 + $0x30] sm:$0xff]
    %v1385 = vld [vmem:[#allocation11 + $0x38] sm:$0xff]
    %v1386 = vld [vmem:[#allocation11 + $0x40] sm:$0xff]
    %v1387 = vld [vmem:[#allocation11 + $0x48] sm:$0xff]
    %v1388 = vld [vmem:[#allocation11 + $0x50] sm:$0xff]
    %v1389 = vld [vmem:[#allocation11 + $0x58] sm:$0xff]
    %v1390 = vld [vmem:[#allocation11 + $0x60] sm:$0xff]
    %v1391 = vld [vmem:[#allocation11 + $0x68] sm:$0xff]
    %v1392 = vld [vmem:[#allocation11 + $0x70] sm:$0xff]
    %v1393 = vld [vmem:[#allocation11 + $0x78] sm:$0xff]
    %v1394 = vld [vmem:[%s8] sm:$0x3]
    %v1396 = vlaneseq
    %v1397 = vshrl.u32 %v1396, 7
    %v1398 = vsub.s32 0, %v1397
    %v1399 = vrot.slane %v1394, %v1398
    %v1400 = vlaneseq
    %v1401 = vshrl.u32 %v1400, 7
    %v1402 = vsub.s32 1, %v1401
    %v1403 = vrot.slane %v1394, %v1402
    %v1431 = vunpack.c.l.b16 %v1353
    %v1432 = vunpack.c.l.b16 %v1354
    %v1433 = vunpack.c.l.b16 %v1355
    %v1434 = vunpack.c.l.b16 %v1356
    %v1435 = vunpack.c.l.b16 %v1357
    %v1436 = vunpack.c.l.b16 %v1358
    %v1437 = vunpack.c.l.b16 %v1359
    %v1438 = vunpack.c.l.b16 %v1360
    %v1439 = vunpack.c.l.b16 %v1361
    %v1440 = vunpack.c.l.b16 %v1362
    %v1441 = vunpack.c.l.b16 %v1363
    %v1442 = vunpack.c.l.b16 %v1364
    %v1443 = vunpack.c.l.b16 %v1365
    %v1444 = vunpack.c.l.b16 %v1366
    %v1445 = vunpack.c.l.b16 %v1367
    %v1446 = vunpack.c.l.b16 %v1368
    %v1447 = vunpack.c.l.b16 %v1369
    %v1448 = vunpack.c.l.b16 %v1370
    %v1449 = vunpack.c.l.b16 %v1371
    %v1450 = vunpack.c.l.b16 %v1372
    %v1451 = vunpack.c.l.b16 %v1373
    %v1452 = vunpack.c.l.b16 %v1374
    %v1453 = vunpack.c.l.b16 %v1375
    %v1454 = vunpack.c.l.b16 %v1376
    %v1455 = vunpack.c.l.b16 %v1377
    %v1456 = vpack.c.b16 %v1432, %v1431
    %v1457 = vpack.c.b16 %v1434, %v1433
    %v1458 = vpack.c.b16 %v1436, %v1435
    %v1459 = vpack.c.b16 %v1438, %v1437
    %v1460 = vpack.c.b16 %v1440, %v1439
    %v1461 = vpack.c.b16 %v1442, %v1441
    %v1462 = vpack.c.b16 %v1444, %v1443
    %v1463 = vpack.c.b16 %v1446, %v1445
    %v1464 = vpack.c.b16 %v1448, %v1447
    %v1465 = vpack.c.b16 %v1450, %v1449
    %v1466 = vpack.c.b16 %v1452, %v1451
    %v1467 = vpack.c.b16 %v1454, %v1453
    %v1468 = vpack.c.b16 %v1455, %v1455
    %v1498 = vunpack.c.l.b16 %v1378
    %v1499 = vunpack.c.h.b16 %v1378
    %v1500 = vunpack.c.l.b16 %v1379
    %v1501 = vunpack.c.h.b16 %v1379
    %v1502 = vunpack.c.l.b16 %v1380
    %v1503 = vunpack.c.h.b16 %v1380
    %v1504 = vunpack.c.l.b16 %v1381
    %v1505 = vunpack.c.h.b16 %v1381
    %v1506 = vunpack.c.l.b16 %v1382
    %v1507 = vunpack.c.h.b16 %v1382
    %v1508 = vunpack.c.l.b16 %v1383
    %v1509 = vunpack.c.h.b16 %v1383
    %v1510 = vunpack.c.l.b16 %v1384
    %v1511 = vunpack.c.h.b16 %v1384
    %v1512 = vunpack.c.l.b16 %v1385
    %v1513 = vunpack.c.h.b16 %v1385
    %v1514 = vunpack.c.l.b16 %v1386
    %v1515 = vunpack.c.h.b16 %v1386
    %v1516 = vunpack.c.l.b16 %v1387
    %v1517 = vunpack.c.h.b16 %v1387
    %v1518 = vunpack.c.l.b16 %v1388
    %v1519 = vunpack.c.h.b16 %v1388
    %v1520 = vunpack.c.l.b16 %v1389
    %v1521 = vunpack.c.h.b16 %v1389
    %v1522 = vunpack.c.l.b16 %v1390
    %v1523 = vunpack.c.h.b16 %v1390
    %v1524 = vunpack.c.l.b16 %v1391
    %v1525 = vunpack.c.h.b16 %v1391
    %v1526 = vunpack.c.l.b16 %v1392
    %v1527 = vunpack.c.h.b16 %v1392
    %v1528 = vunpack.c.l.b16 %v1393
    %v1529 = vunpack.c.h.b16 %v1393
    %v1530 = vpack.c.b16 %v1500, %v1498
    %v1531 = vpack.c.b16 %v1501, %v1499
    %v1532 = vpack.c.b16 %v1504, %v1502
    %v1533 = vpack.c.b16 %v1505, %v1503
    %v1534 = vpack.c.b16 %v1508, %v1506
    %v1535 = vpack.c.b16 %v1509, %v1507
    %v1536 = vpack.c.b16 %v1512, %v1510
    %v1537 = vpack.c.b16 %v1513, %v1511
    %v1538 = vpack.c.b16 %v1516, %v1514
    %v1539 = vpack.c.b16 %v1517, %v1515
    %v1540 = vpack.c.b16 %v1520, %v1518
    %v1541 = vpack.c.b16 %v1521, %v1519
    %v1542 = vpack.c.b16 %v1524, %v1522
    %v1543 = vpack.c.b16 %v1525, %v1523
    %v1544 = vpack.c.b16 %v1528, %v1526
    %v1545 = vpack.c.b16 %v1529, %v1527
    %1562 = vmatprep.subr.bf16.mxu0 %v1545
    %1563 = vmatpush1.bf16.msra.mxu0 %v1544
    %1564 = vmatprep.subr.bf16.mxu0 %v1543
    %1565 = vmatpush1.bf16.msra.mxu0 %v1542
    %1566 = vmatprep.subr.bf16.mxu0 %v1541
    %1567 = vmatpush1.bf16.msra.mxu0 %v1540
    %1568 = vmatprep.subr.bf16.mxu0 %v1539
    %1569 = vmatpush1.bf16.msra.mxu0 %v1538
    %1570 = vmatprep.subr.bf16.mxu0 %v1537
    %1571 = vmatpush1.bf16.msra.mxu0 %v1536
    %1572 = vmatprep.subr.bf16.mxu0 %v1535
    %1573 = vmatpush1.bf16.msra.mxu0 %v1534
    %1574 = vmatprep.subr.bf16.mxu0 %v1533
    %1575 = vmatpush1.bf16.msra.mxu0 %v1532
    %1576 = vmatprep.subr.bf16.mxu0 %v1531
    %1577 = vmatpush1.bf16.msra.mxu0 %v1530
    %1578 = vmatprep.subr.bf16.mxu0 0
    %1579 = vmatpush2.bf16.msra.mxu0 0
    %1580 = vmatprep.subr.bf16.mxu0 0
    %1581 = vmatpush2.bf16.msra.mxu0 0
    %1582 = vmatprep.subr.bf16.mxu0 0
    %1583 = vmatpush2.bf16.msra.mxu0 0
    %1584 = vmatprep.subr.bf16.mxu0 0
    %1585 = vmatpush2.bf16.msra.mxu0 0
    %1586 = vmatprep.subr.bf16.mxu0 0
    %1587 = vmatpush2.bf16.msra.mxu0 0
    %1588 = vmatprep.subr.bf16.mxu0 0
    %1589 = vmatpush2.bf16.msra.mxu0 0
    %1590 = vmatprep.subr.bf16.mxu0 0
    %1591 = vmatpush2.bf16.msra.mxu0 0
    %1592 = vmatprep.subr.bf16.mxu0 0
    %1593 = vmatpush2.bf16.msra.mxu0 0
    %1594 = vmatprep.mubr.bf16.mxu0 0
    %1595 = vmatmul.mubr.bf16.gmra.mxu0 %v1456
    %v1596 = vpop.f32.mrf.mxu0
    %v1597 = vadd.f32 %v1399, %v1596
    %v1598 = vpop.f32.mrf.mxu0
    %v1599 = vadd.f32 %v1403, %v1598
    %v1600 = vpop.f32.mrf.mxu0
    %v1601 = vadd.f32 %v1399, %v1600
    %v1602 = vpop.f32.mrf.mxu0
    %v1603 = vadd.f32 %v1403, %v1602
    %1604 = vmatprep.mubr.bf16.mxu0 0
    %1605 = vmatmul.mubr.bf16.gmra.mxu0 %v1457
    %v1606 = vpop.f32.mrf.mxu0
    %v1607 = vadd.f32 %v1399, %v1606
    %v1608 = vpop.f32.mrf.mxu0
    %v1609 = vadd.f32 %v1403, %v1608
    %v1610 = vpop.f32.mrf.mxu0
    %v1611 = vadd.f32 %v1399, %v1610
    %v1612 = vpop.f32.mrf.mxu0
    %v1613 = vadd.f32 %v1403, %v1612
    %1614 = vmatprep.mubr.bf16.mxu0 0
    %1615 = vmatmul.mubr.bf16.gmra.mxu0 %v1458
    %v1616 = vpop.f32.mrf.mxu0
    %v1617 = vadd.f32 %v1399, %v1616
    %v1618 = vpop.f32.mrf.mxu0
    %v1619 = vadd.f32 %v1403, %v1618
    %v1620 = vpop.f32.mrf.mxu0
    %v1621 = vadd.f32 %v1399, %v1620
    %v1622 = vpop.f32.mrf.mxu0
    %v1623 = vadd.f32 %v1403, %v1622
    %1624 = vmatprep.mubr.bf16.mxu0 0
    %1625 = vmatmul.mubr.bf16.gmra.mxu0 %v1459
    %v1626 = vpop.f32.mrf.mxu0
    %v1627 = vadd.f32 %v1399, %v1626
    %v1628 = vpop.f32.mrf.mxu0
    %v1629 = vadd.f32 %v1403, %v1628
    %v1630 = vpop.f32.mrf.mxu0
    %v1631 = vadd.f32 %v1399, %v1630
    %v1632 = vpop.f32.mrf.mxu0
    %v1633 = vadd.f32 %v1403, %v1632
    %1634 = vmatprep.mubr.bf16.mxu0 0
    %1635 = vmatmul.mubr.bf16.gmra.mxu0 %v1460
    %v1636 = vpop.f32.mrf.mxu0
    %v1637 = vadd.f32 %v1399, %v1636
    %v1638 = vpop.f32.mrf.mxu0
    %v1639 = vadd.f32 %v1403, %v1638
    %v1640 = vpop.f32.mrf.mxu0
    %v1641 = vadd.f32 %v1399, %v1640
    %v1642 = vpop.f32.mrf.mxu0
    %v1643 = vadd.f32 %v1403, %v1642
    %1644 = vmatprep.mubr.bf16.mxu0 0
    %1645 = vmatmul.mubr.bf16.gmra.mxu0 %v1461
    %v1646 = vpop.f32.mrf.mxu0
    %v1647 = vadd.f32 %v1399, %v1646
    %v1648 = vpop.f32.mrf.mxu0
    %v1649 = vadd.f32 %v1403, %v1648
    %v1650 = vpop.f32.mrf.mxu0
    %v1651 = vadd.f32 %v1399, %v1650
    %v1652 = vpop.f32.mrf.mxu0
    %v1653 = vadd.f32 %v1403, %v1652
    %1654 = vmatprep.mubr.bf16.mxu0 0
    %1655 = vmatmul.mubr.bf16.gmra.mxu0 %v1462
    %v1656 = vpop.f32.mrf.mxu0
    %v1657 = vadd.f32 %v1399, %v1656
    %v1658 = vpop.f32.mrf.mxu0
    %v1659 = vadd.f32 %v1403, %v1658
    %v1660 = vpop.f32.mrf.mxu0
    %v1661 = vadd.f32 %v1399, %v1660
    %v1662 = vpop.f32.mrf.mxu0
    %v1663 = vadd.f32 %v1403, %v1662
    %1664 = vmatprep.mubr.bf16.mxu0 0
    %1665 = vmatmul.mubr.bf16.gmra.mxu0 %v1463
    %v1666 = vpop.f32.mrf.mxu0
    %v1667 = vadd.f32 %v1399, %v1666
    %v1668 = vpop.f32.mrf.mxu0
    %v1669 = vadd.f32 %v1403, %v1668
    %v1670 = vpop.f32.mrf.mxu0
    %v1671 = vadd.f32 %v1399, %v1670
    %v1672 = vpop.f32.mrf.mxu0
    %v1673 = vadd.f32 %v1403, %v1672
    %1674 = vmatprep.mubr.bf16.mxu0 0
    %1675 = vmatmul.mubr.bf16.gmra.mxu0 %v1464
    %v1676 = vpop.f32.mrf.mxu0
    %v1677 = vadd.f32 %v1399, %v1676
    %v1678 = vpop.f32.mrf.mxu0
    %v1679 = vadd.f32 %v1403, %v1678
    %v1680 = vpop.f32.mrf.mxu0
    %v1681 = vadd.f32 %v1399, %v1680
    %v1682 = vpop.f32.mrf.mxu0
    %v1683 = vadd.f32 %v1403, %v1682
    %1684 = vmatprep.mubr.bf16.mxu0 0
    %1685 = vmatmul.mubr.bf16.gmra.mxu0 %v1465
    %v1686 = vpop.f32.mrf.mxu0
    %v1687 = vadd.f32 %v1399, %v1686
    %v1688 = vpop.f32.mrf.mxu0
    %v1689 = vadd.f32 %v1403, %v1688
    %v1690 = vpop.f32.mrf.mxu0
    %v1691 = vadd.f32 %v1399, %v1690
    %v1692 = vpop.f32.mrf.mxu0
    %v1693 = vadd.f32 %v1403, %v1692
    %1694 = vmatprep.mubr.bf16.mxu0 0
    %1695 = vmatmul.mubr.bf16.gmra.mxu0 %v1466
    %v1696 = vpop.f32.mrf.mxu0
    %v1697 = vadd.f32 %v1399, %v1696
    %v1698 = vpop.f32.mrf.mxu0
    %v1699 = vadd.f32 %v1403, %v1698
    %v1700 = vpop.f32.mrf.mxu0
    %v1701 = vadd.f32 %v1399, %v1700
    %v1702 = vpop.f32.mrf.mxu0
    %v1703 = vadd.f32 %v1403, %v1702
    %1704 = vmatprep.mubr.bf16.mxu0 0
    %1705 = vmatmul.mubr.bf16.gmra.mxu0 %v1467
    %v1706 = vpop.f32.mrf.mxu0
    %v1707 = vadd.f32 %v1399, %v1706
    %v1708 = vpop.f32.mrf.mxu0
    %v1709 = vadd.f32 %v1403, %v1708
    %v1710 = vpop.f32.mrf.mxu0
    %v1711 = vadd.f32 %v1399, %v1710
    %v1712 = vpop.f32.mrf.mxu0
    %v1713 = vadd.f32 %v1403, %v1712
    %1714 = vmatprep.mubr.bf16.mxu0 0
    %1715 = vmatmul.mubr.bf16.gmra.mxu0 %v1468
    %v1716 = vpop.f32.mrf.mxu0
    %v1717 = vadd.f32 %v1399, %v1716
    %v1718 = vpop.f32.mrf.mxu0
    %v1719 = vadd.f32 %v1403, %v1718
    %v1720 = vpop.f32.mrf.mxu0
    %v1721 = vpop.f32.mrf.mxu0
    %1722 = vdwg.mxu0
    %v1723 = vpack.c.bf16 %v1601, %v1597
    %v1724 = vpack.c.bf16 %v1603, %v1599
    %v1725 = vpack.c.bf16 %v1611, %v1607
    %v1726 = vpack.c.bf16 %v1613, %v1609
    %v1727 = vpack.c.bf16 %v1621, %v1617
    %v1728 = vpack.c.bf16 %v1623, %v1619
    %v1729 = vpack.c.bf16 %v1631, %v1627
    %v1730 = vpack.c.bf16 %v1633, %v1629
    %v1731 = vpack.c.bf16 %v1641, %v1637
    %v1732 = vpack.c.bf16 %v1643, %v1639
    %v1733 = vpack.c.bf16 %v1651, %v1647
    %v1734 = vpack.c.bf16 %v1653, %v1649
    %v1735 = vpack.c.bf16 %v1661, %v1657
    %v1736 = vpack.c.bf16 %v1663, %v1659
    %v1737 = vpack.c.bf16 %v1671, %v1667
    %v1738 = vpack.c.bf16 %v1673, %v1669
    %v1739 = vpack.c.bf16 %v1681, %v1677
    %v1740 = vpack.c.bf16 %v1683, %v1679
    %v1741 = vpack.c.bf16 %v1691, %v1687
    %v1742 = vpack.c.bf16 %v1693, %v1689
    %v1743 = vpack.c.bf16 %v1701, %v1697
    %v1744 = vpack.c.bf16 %v1703, %v1699
    %v1745 = vpack.c.bf16 %v1711, %v1707
    %v1746 = vpack.c.bf16 %v1713, %v1709
    %v1747 = vpack.c.bf16 %v1717, %v1717
    %v1748 = vpack.c.bf16 %v1719, %v1719
    %v1775 = vunpack.c.l.b16 %v1723
    %v1776 = vunpack.c.l.b16 %v1724
    %v1777 = vunpack.c.h.b16 %v1723
    %v1778 = vunpack.c.h.b16 %v1724
    %v1779 = vunpack.c.l.b16 %v1725
    %v1780 = vunpack.c.l.b16 %v1726
    %v1781 = vunpack.c.h.b16 %v1725
    %v1782 = vunpack.c.h.b16 %v1726
    %v1783 = vunpack.c.l.b16 %v1727
    %v1784 = vunpack.c.l.b16 %v1728
    %v1785 = vunpack.c.h.b16 %v1727
    %v1786 = vunpack.c.h.b16 %v1728
    %v1787 = vunpack.c.l.b16 %v1729
    %v1788 = vunpack.c.l.b16 %v1730
    %v1789 = vunpack.c.h.b16 %v1729
    %v1790 = vunpack.c.h.b16 %v1730
    %v1791 = vunpack.c.l.b16 %v1731
    %v1792 = vunpack.c.l.b16 %v1732
    %v1793 = vunpack.c.h.b16 %v1731
    %v1794 = vunpack.c.h.b16 %v1732
    %v1795 = vunpack.c.l.b16 %v1733
    %v1796 = vunpack.c.l.b16 %v1734
    %v1797 = vunpack.c.h.b16 %v1733
    %v1798 = vunpack.c.h.b16 %v1734
    %v1799 = vunpack.c.l.b16 %v1735
    %v1800 = vunpack.c.l.b16 %v1736
    %v1801 = vunpack.c.h.b16 %v1735
    %v1802 = vunpack.c.h.b16 %v1736
    %v1803 = vunpack.c.l.b16 %v1737
    %v1804 = vunpack.c.l.b16 %v1738
    %v1805 = vunpack.c.h.b16 %v1737
    %v1806 = vunpack.c.h.b16 %v1738
    %v1807 = vunpack.c.l.b16 %v1739
    %v1808 = vunpack.c.l.b16 %v1740
    %v1809 = vunpack.c.h.b16 %v1739
    %v1810 = vunpack.c.h.b16 %v1740
    %v1811 = vunpack.c.l.b16 %v1741
    %v1812 = vunpack.c.l.b16 %v1742
    %v1813 = vunpack.c.h.b16 %v1741
    %v1814 = vunpack.c.h.b16 %v1742
    %v1815 = vunpack.c.l.b16 %v1743
    %v1816 = vunpack.c.l.b16 %v1744
    %v1817 = vunpack.c.h.b16 %v1743
    %v1818 = vunpack.c.h.b16 %v1744
    %v1819 = vunpack.c.l.b16 %v1745
    %v1820 = vunpack.c.l.b16 %v1746
    %v1821 = vunpack.c.h.b16 %v1745
    %v1822 = vunpack.c.h.b16 %v1746
    %v1823 = vunpack.c.l.b16 %v1747
    %v1824 = vunpack.c.l.b16 %v1748
    %v1825 = vpack.c.b16 %v1776, %v1775
    %v1826 = vpack.c.b16 %v1778, %v1777
    %v1827 = vpack.c.b16 %v1780, %v1779
    %v1828 = vpack.c.b16 %v1782, %v1781
    %v1829 = vpack.c.b16 %v1784, %v1783
    %v1830 = vpack.c.b16 %v1786, %v1785
    %v1831 = vpack.c.b16 %v1788, %v1787
    %v1832 = vpack.c.b16 %v1790, %v1789
    %v1833 = vpack.c.b16 %v1792, %v1791
    %v1834 = vpack.c.b16 %v1794, %v1793
    %v1835 = vpack.c.b16 %v1796, %v1795
    %v1836 = vpack.c.b16 %v1798, %v1797
    %v1837 = vpack.c.b16 %v1800, %v1799
    %v1838 = vpack.c.b16 %v1802, %v1801
    %v1839 = vpack.c.b16 %v1804, %v1803
    %v1840 = vpack.c.b16 %v1806, %v1805
    %v1841 = vpack.c.b16 %v1808, %v1807
    %v1842 = vpack.c.b16 %v1810, %v1809
    %v1843 = vpack.c.b16 %v1812, %v1811
    %v1844 = vpack.c.b16 %v1814, %v1813
    %v1845 = vpack.c.b16 %v1816, %v1815
    %v1846 = vpack.c.b16 %v1818, %v1817
    %v1847 = vpack.c.b16 %v1820, %v1819
    %v1848 = vpack.c.b16 %v1822, %v1821
    %v1849 = vpack.c.b16 %v1824, %v1823
    %1875 = vst [vmem:[#allocation12] sm:$0xff] %v1825
    %1876 = vst [vmem:[#allocation12 + $0x8] sm:$0xff] %v1826
    %1877 = vst [vmem:[#allocation12 + $0x10] sm:$0xff] %v1827
    %1878 = vst [vmem:[#allocation12 + $0x18] sm:$0xff] %v1828
    %1879 = vst [vmem:[#allocation12 + $0x20] sm:$0xff] %v1829
    %1880 = vst [vmem:[#allocation12 + $0x28] sm:$0xff] %v1830
    %1881 = vst [vmem:[#allocation12 + $0x30] sm:$0xff] %v1831
    %1882 = vst [vmem:[#allocation12 + $0x38] sm:$0xff] %v1832
    %1883 = vst [vmem:[#allocation12 + $0x40] sm:$0xff] %v1833
    %1884 = vst [vmem:[#allocation12 + $0x48] sm:$0xff] %v1834
    %1885 = vst [vmem:[#allocation12 + $0x50] sm:$0xff] %v1835
    %1886 = vst [vmem:[#allocation12 + $0x58] sm:$0xff] %v1836
    %1887 = vst [vmem:[#allocation12 + $0x60] sm:$0xff] %v1837
    %1888 = vst [vmem:[#allocation12 + $0x68] sm:$0xff] %v1838
    %1889 = vst [vmem:[#allocation12 + $0x70] sm:$0xff] %v1839
    %1890 = vst [vmem:[#allocation12 + $0x78] sm:$0xff] %v1840
    %1891 = vst [vmem:[#allocation12 + $0x80] sm:$0xff] %v1841
    %1892 = vst [vmem:[#allocation12 + $0x88] sm:$0xff] %v1842
    %1893 = vst [vmem:[#allocation12 + $0x90] sm:$0xff] %v1843
    %1894 = vst [vmem:[#allocation12 + $0x98] sm:$0xff] %v1844
    %1895 = vst [vmem:[#allocation12 + $0xa0] sm:$0xff] %v1845
    %1896 = vst [vmem:[#allocation12 + $0xa8] sm:$0xff] %v1846
    %1897 = vst [vmem:[#allocation12 + $0xb0] sm:$0xff] %v1847
    %1898 = vst [vmem:[#allocation12 + $0xb8] sm:$0xff] %v1848
    %1899 = vst [vmem:[#allocation12 + $0xc0] sm:$0xff] %v1849
    // Predicated region
    $region62: #{tpu_custom_call.1} parent=1 // pred_check
      _
    $region63: #{tpu_custom_call.1} parent=1 // pred_check_branch
      %1901 = sbr.rel (0) target = $region65
    $region64: #{tpu_custom_call.1} parent=1 // pred_region
      %s1903 = ssub.s32 3200, 3200
      %1904 = vsyncadd [#allocation5], %s1903
      %s1905 = sshll.u32 [#allocation12], 4
      %s1906 = int_to_ptr.vmem [resolvable:$true] %s1905
      %1911 = dma.vmem_to_hbm [thread:$0]  %s1906, 3200, %s9, [#allocation5], 128, 128, 8
    $region65: #{tpu_custom_call.1} parent=1 // pred_fallthru
      _
    // Predicated region
    $region66: #{tpu_custom_call.1} parent=1 // pred_check
      _
    $region67: #{tpu_custom_call.1} parent=1 // pred_check_branch
      %1913 = sbr.rel (0) target = $region69
    $region68: #{tpu_custom_call.1} parent=1 // pred_region
      %1914 = dma.done [#allocation5], 3200
    $region69: #{tpu_custom_call.1} parent=1 // pred_fallthru
      _
    %1915 = vsyncpa [#allocation4], 1
    %1916 = vsyncpa [#allocation7], 1
    %1917 = vsyncpa [#allocation10], 1
    %1918 = vsyncpa [#allocation5], 1

// kernel: tpu_custom_call.1
$region0: #{tpu_custom_call.1}
  #allocation0 [shape = 'u32[]', space=smem, size = 0x4, offset = 0x4, fixed_abs, tag = 'smem constant byte address 0x4 - core index']
  #allocation1 [shape = 'u32[144,128]{1,0:T(1,128)}', space=vmem, size = 0x12000, scoped, tag = 'internal scratch']
  #allocation2 [shape = 'bf16[200,128]{1,0:T(8,128)(2,1)}', space=vmem, size = 0xc800, scoped, tag = 'scratch operand']
  %s0 = inlined_call_operand.hbm [shape: bf16[200,256], index: 0, kind: input, shape index: {}]
  %s1 = inlined_call_operand.hbm [shape: bf16[256,128], index: 1, kind: input, shape index: {}]
  %s2 = inlined_call_operand.vmem [shape: f32[1,128], index: 2, kind: input, shape index: {}]
  %s3 = inlined_call_operand.hbm [shape: bf16[128,128], index: 3, kind: input, shape index: {}]
  %s4 = inlined_call_operand.vmem [shape: f32[1,128], index: 4, kind: input, shape index: {}]
  %s5 = inlined_call_operand.hbm [shape: bf16[128,128], index: 5, kind: input, shape index: {}]
  %s6 = inlined_call_operand.vmem [shape: f32[1,128], index: 6, kind: input, shape index: {}]
  %s7 = inlined_call_operand.hbm [shape: bf16[128,256], index: 7, kind: input, shape index: {}]
  %s8 = inlined_call_operand.vmem [shape: f32[1,256], index: 8, kind: input, shape index: {}]
  %s9 = inlined_call_operand.hbm [shape: bf16[200,256], index: 9, kind: output, shape index: {}]
  %s10 = sld [smem:[#allocation0]]
  $region70: #{tpu_custom_call.1} parent=0
    _
  %s12 = ssub.s32 1, %s10
  %s13 = scalar_select 0, %s12, %s10
  $region1: #{tpu_custom_call.1} parent=0
    #allocation3 [shape = 'u8[102400]{0}', space=vmem, size = 0x19000, scoped, tag = 'input window, operand 0, single buffered']
    #allocation4 [shape = 's32[1]{0}', space=sflag, size = 0x4, scoped, tag = 'scoped memory for tpu_custom_call.1']
    #allocation5 [shape = 's32[1]{0}', space=sflag, size = 0x4, scoped, tag = 'scoped memory for tpu_custom_call.1']
    #allocation6 [shape = 'u8[65536]{0}', space=vmem, size = 0x10000, scoped, tag = 'input window, operand 1, single buffered']
    #allocation7 [shape = 's32[1]{0}', space=sflag, size = 0x4, scoped, tag = 'scoped memory for tpu_custom_call.1']
    #allocation8 [shape = 'u8[32768]{0}', space=vmem, size = 0x8000, scoped, tag = 'input window, operand 3, single buffered']
    #allocation9 [shape = 'u8[32768]{0}', space=vmem, size = 0x8000, scoped, tag = 'input window, operand 5, single buffered']
    #allocation10 [shape = 's32[1]{0}', space=sflag, size = 0x4, scoped, tag = 'scoped memory for tpu_custom_call.1']
    #allocation11 [shape = 'u8[65536]{0}', space=vmem, size = 0x10000, scoped, tag = 'input window, operand 7, single buffered']
    #allocation12 [shape = 'u8[102400]{0}', space=vmem, size = 0x19000, scoped, tag = 'output window, operand 0, single buffered']
    %14 = vsyncpa [#allocation4], 0
    %15 = vsyncpa [#allocation7], 0
    %16 = vsyncpa [#allocation10], 0
    %17 = vsyncpa [#allocation5], 0
    // Predicated region
    $region2: #{tpu_custom_call.1} parent=1 // pred_check
      _
    $region3: #{tpu_custom_call.1} parent=1 // pred_check_branch
      %19 = sbr.rel (0) target = $region5
    $region4: #{tpu_custom_call.1} parent=1 // pred_region
      %s21 = ssub.s32 3200, 3200
      %22 = vsyncadd [#allocation4], %s21
      %s23 = sshll.u32 [#allocation3], 4
      %s24 = int_to_ptr.vmem [resolvable:$true] %s23
      %29 = dma.hbm_to_vmem [thread:$0]  %s0, 3200, %s24, [#allocation4], 128, 128, 8
    $region5: #{tpu_custom_call.1} parent=1 // pred_fallthru
      _
    // Predicated region
    $region6: #{tpu_custom_call.1} parent=1 // pred_check
      _
    $region7: #{tpu_custom_call.1} parent=1 // pred_check_branch
      %31 = sbr.rel (0) target = $region9
    $region8: #{tpu_custom_call.1} parent=1 // pred_region
      %s33 = ssub.s32 2048, 2048
      %34 = vsyncadd [#allocation7], %s33
      %s35 = sshll.u32 [#allocation6], 4
      %s36 = int_to_ptr.vmem [resolvable:$true] %s35
      %41 = dma.hbm_to_vmem [thread:$0]  %s1, 2048, %s36, [#allocation7], 64, 64, 4
    $region9: #{tpu_custom_call.1} parent=1 // pred_fallthru
      _
    // Predicated region
    $region10: #{tpu_custom_call.1} parent=1 // pred_check
      _
    $region11: #{tpu_custom_call.1} parent=1 // pred_check_branch
      %43 = sbr.rel (0) target = $region13
    $region12: #{tpu_custom_call.1} parent=1 // pred_region
      _
    $region13: #{tpu_custom_call.1} parent=1 // pred_fallthru
      _
    // Predicated region
    $region14: #{tpu_custom_call.1} parent=1 // pred_check
      _
    $region15: #{tpu_custom_call.1} parent=1 // pred_check_branch
      %45 = sbr.rel (0) target = $region17
    $region16: #{tpu_custom_call.1} parent=1 // pred_region
      %s47 = ssub.s32 1024, 1024
      %48 = vsyncadd [#allocation7], %s47
      %s49 = sshll.u32 [#allocation8], 4
      %s50 = int_to_ptr.vmem [resolvable:$true] %s49
      %55 = dma.hbm_to_vmem [thread:$0]  %s3, 1024, %s50, [#allocation7], 64, 64, 4
    $region17: #{tpu_custom_call.1} parent=1 // pred_fallthru
      _
    // Predicated region
    $region18: #{tpu_custom_call.1} parent=1 // pred_check
      _
    $region19: #{tpu_custom_call.1} parent=1 // pred_check_branch
      %57 = sbr.rel (0) target = $region21
    $region20: #{tpu_custom_call.1} parent=1 // pred_region
      _
    $region21: #{tpu_custom_call.1} parent=1 // pred_fallthru
      _
    // Predicated region
    $region22: #{tpu_custom_call.1} parent=1 // pred_check
      _
    $region23: #{tpu_custom_call.1} parent=1 // pred_check_branch
      %59 = sbr.rel (0) target = $region25
    $region24: #{tpu_custom_call.1} parent=1 // pred_region
      %s61 = ssub.s32 1024, 1024
      %62 = vsyncadd [#allocation10], %s61
      %s63 = sshll.u32 [#allocation9], 4
      %s64 = int_to_ptr.vmem [resolvable:$true] %s63
      %69 = dma.hbm_to_vmem [thread:$0]  %s5, 1024, %s64, [#allocation10], 64, 64, 4
    $region25: #{tpu_custom_call.1} parent=1 // pred_fallthru
      _
    // Predicated region
    $region26: #{tpu_custom_call.1} parent=1 // pred_check
      _
    $region27: #{tpu_custom_call.1} parent=1 // pred_check_branch
      %71 = sbr.rel (0) target = $region29
    $region28: #{tpu_custom_call.1} parent=1 // pred_region
      _
    $region29: #{tpu_custom_call.1} parent=1 // pred_fallthru
      _
    // Predicated region
    $region30: #{tpu_custom_call.1} parent=1 // pred_check
      _
    $region31: #{tpu_custom_call.1} parent=1 // pred_check_branch
      %73 = sbr.rel (0) target = $region33
    $region32: #{tpu_custom_call.1} parent=1 // pred_region
      %s75 = ssub.s32 2048, 2048
      %76 = vsyncadd [#allocation10], %s75
      %s77 = sshll.u32 [#allocation11], 4
      %s78 = int_to_ptr.vmem [resolvable:$true] %s77
      %83 = dma.hbm_to_vmem [thread:$0]  %s7, 2048, %s78, [#allocation10], 128, 128, 8
    $region33: #{tpu_custom_call.1} parent=1 // pred_fallthru
      _
    // Predicated region
    $region34: #{tpu_custom_call.1} parent=1 // pred_check
      _
    $region35: #{tpu_custom_call.1} parent=1 // pred_check_branch
      %85 = sbr.rel (0) target = $region37
    $region36: #{tpu_custom_call.1} parent=1 // pred_region
      _
    $region37: #{tpu_custom_call.1} parent=1 // pred_fallthru
      _
    // Predicated region
    $region38: #{tpu_custom_call.1} parent=1 // pred_check
      _
    $region39: #{tpu_custom_call.1} parent=1 // pred_check_branch
      %87 = sbr.rel (0) target = $region41
    $region40: #{tpu_custom_call.1} parent=1 // pred_region
      %88 = dma.done [#allocation4], 3200
    $region41: #{tpu_custom_call.1} parent=1 // pred_fallthru
      _
    // Predicated region
    $region42: #{tpu_custom_call.1} parent=1 // pred_check
      _
    $region43: #{tpu_custom_call.1} parent=1 // pred_check_branch
      %90 = sbr.rel (0) target = $region45
    $region44: #{tpu_custom_call.1} parent=1 // pred_region
      %91 = dma.done [#allocation7], 2048
    $region45: #{tpu_custom_call.1} parent=1 // pred_fallthru
      _
    // Predicated region
    $region46: #{tpu_custom_call.1} parent=1 // pred_check
      _
    $region47: #{tpu_custom_call.1} parent=1 // pred_check_branch
      %93 = sbr.rel (0) target = $region49
    $region48: #{tpu_custom_call.1} parent=1 // pred_region
      %94 = dma.done [#allocation7], 1024
    $region49: #{tpu_custom_call.1} parent=1 // pred_fallthru
      _
    // Predicated region
    $region50: #{tpu_custom_call.1} parent=1 // pred_check
      _
    $region51: #{tpu_custom_call.1} parent=1 // pred_check_branch
      %96 = sbr.rel (0) target = $region53
    $region52: #{tpu_custom_call.1} parent=1 // pred_region
      %97 = dma.done [#allocation10], 1024
    $region53: #{tpu_custom_call.1} parent=1 // pred_fallthru
      _
    // Predicated region
    $region54: #{tpu_custom_call.1} parent=1 // pred_check
      _
    $region55: #{tpu_custom_call.1} parent=1 // pred_check_branch
      %99 = sbr.rel (0) target = $region57
    $region56: #{tpu_custom_call.1} parent=1 // pred_region
      %100 = dma.done [#allocation10], 2048
    $region57: #{tpu_custom_call.1} parent=1 // pred_fallthru
      _
    %p102 = scmp.eq.s32.totalorder 0, 0
    // Predicated region
    $region58: #{tpu_custom_call.1} parent=1 // pred_check
      %p103 = pneg %p102
    $region59: #{tpu_custom_call.1} parent=1 // pred_check_branch
      %105 = sbr.rel (%p103) target = $region61
    $region60: #{tpu_custom_call.1} parent=1 // pred_region
      %v106 = vld [vmem:[#allocation3] sm:$0xff]
      %v107 = vld [vmem:[#allocation3 + $0x8] sm:$0xff]
      %v108 = vld [vmem:[#allocation3 + $0x10] sm:$0xff]
      %v109 = vld [vmem:[#allocation3 + $0x18] sm:$0xff]
      %v110 = vld [vmem:[#allocation3 + $0x20] sm:$0xff]
      %v111 = vld [vmem:[#allocation3 + $0x28] sm:$0xff]
      %v112 = vld [vmem:[#allocation3 + $0x30] sm:$0xff]
      %v113 = vld [vmem:[#allocation3 + $0x38] sm:$0xff]
      %v114 = vld [vmem:[#allocation3 + $0x40] sm:$0xff]
      %v115 = vld [vmem:[#allocation3 + $0x48] sm:$0xff]
      %v116 = vld [vmem:[#allocation3 + $0x50] sm:$0xff]
      %v117 = vld [vmem:[#allocation3 + $0x58] sm:$0xff]
      %v118 = vld [vmem:[#allocation3 + $0x60] sm:$0xff]
      %v119 = vld [vmem:[#allocation3 + $0x68] sm:$0xff]
      %v120 = vld [vmem:[#allocation3 + $0x70] sm:$0xff]
      %v121 = vld [vmem:[#allocation3 + $0x78] sm:$0xff]
      %v122 = vld [vmem:[#allocation3 + $0x80] sm:$0xff]
      %v123 = vld [vmem:[#allocation3 + $0x88] sm:$0xff]
      %v124 = vld [vmem:[#allocation3 + $0x90] sm:$0xff]
      %v125 = vld [vmem:[#allocation3 + $0x98] sm:$0xff]
      %v126 = vld [vmem:[#allocation3 + $0xa0] sm:$0xff]
      %v127 = vld [vmem:[#allocation3 + $0xa8] sm:$0xff]
      %v128 = vld [vmem:[#allocation3 + $0xb0] sm:$0xff]
      %v129 = vld [vmem:[#allocation3 + $0xb8] sm:$0xff]
      %v130 = vld [vmem:[#allocation3 + $0xc0] sm:$0xff]
      %v131 = vunpack.c.l.bf16 %v106
      %v132 = vunpack.c.h.bf16 %v106
      %v133 = vunpack.c.l.bf16 %v107
      %v134 = vunpack.c.h.bf16 %v107
      %v135 = vunpack.c.l.bf16 %v108
      %v136 = vunpack.c.h.bf16 %v108
      %v137 = vunpack.c.l.bf16 %v109
      %v138 = vunpack.c.h.bf16 %v109
      %v139 = vunpack.c.l.bf16 %v110
      %v140 = vunpack.c.h.bf16 %v110
      %v141 = vunpack.c.l.bf16 %v111
      %v142 = vunpack.c.h.bf16 %v111
      %v143 = vunpack.c.l.bf16 %v112
      %v144 = vunpack.c.h.bf16 %v112
      %v145 = vunpack.c.l.bf16 %v113
      %v146 = vunpack.c.h.bf16 %v113
      %v147 = vunpack.c.l.bf16 %v114
      %v148 = vunpack.c.h.bf16 %v114
      %v149 = vunpack.c.l.bf16 %v115
      %v150 = vunpack.c.h.bf16 %v115
      %v151 = vunpack.c.l.bf16 %v116
      %v152 = vunpack.c.h.bf16 %v116
      %v153 = vunpack.c.l.bf16 %v117
      %v154 = vunpack.c.h.bf16 %v117
      %v155 = vunpack.c.l.bf16 %v118
      %v156 = vunpack.c.h.bf16 %v118
      %v157 = vunpack.c.l.bf16 %v119
      %v158 = vunpack.c.h.bf16 %v119
      %v159 = vunpack.c.l.bf16 %v120
      %v160 = vunpack.c.h.bf16 %v120
      %v161 = vunpack.c.l.bf16 %v121
      %v162 = vunpack.c.h.bf16 %v121
      %v163 = vunpack.c.l.bf16 %v122
      %v164 = vunpack.c.h.bf16 %v122
      %v165 = vunpack.c.l.bf16 %v123
      %v166 = vunpack.c.h.bf16 %v123
      %v167 = vunpack.c.l.bf16 %v124
      %v168 = vunpack.c.h.bf16 %v124
      %v169 = vunpack.c.l.bf16 %v125
      %v170 = vunpack.c.h.bf16 %v125
      %v171 = vunpack.c.l.bf16 %v126
      %v172 = vunpack.c.h.bf16 %v126
      %v173 = vunpack.c.l.bf16 %v127
      %v174 = vunpack.c.h.bf16 %v127
      %v175 = vunpack.c.l.bf16 %v128
      %v176 = vunpack.c.h.bf16 %v128
      %v177 = vunpack.c.l.bf16 %v129
      %v178 = vunpack.c.h.bf16 %v129
      %v179 = vunpack.c.l.bf16 %v130
      %v180 = vunpack.c.h.bf16 %v130
      %v181 = vmul.f32 %v131, %v131
      %v182 = vmul.f32 %v132, %v132
      %v183 = vmul.f32 %v133, %v133
      %v184 = vmul.f32 %v134, %v134
      %v185 = vmul.f32 %v135, %v135
      %v186 = vmul.f32 %v136, %v136
      %v187 = vmul.f32 %v137, %v137
      %v188 = vmul.f32 %v138, %v138
      %v189 = vmul.f32 %v139, %v139
      %v190 = vmul.f32 %v140, %v140
      %v191 = vmul.f32 %v141, %v141
      %v192 = vmul.f32 %v142, %v142
      %v193 = vmul.f32 %v143, %v143
      %v194 = vmul.f32 %v144, %v144
      %v195 = vmul.f32 %v145, %v145
      %v196 = vmul.f32 %v146, %v146
      %v197 = vmul.f32 %v147, %v147
      %v198 = vmul.f32 %v148, %v148
      %v199 = vmul.f32 %v149, %v149
      %v200 = vmul.f32 %v150, %v150
      %v201 = vmul.f32 %v151, %v151
      %v202 = vmul.f32 %v152, %v152
      %v203 = vmul.f32 %v153, %v153
      %v204 = vmul.f32 %v154, %v154
      %v205 = vmul.f32 %v155, %v155
      %v206 = vmul.f32 %v156, %v156
      %v207 = vmul.f32 %v157, %v157
      %v208 = vmul.f32 %v158, %v158
      %v209 = vmul.f32 %v159, %v159
      %v210 = vmul.f32 %v160, %v160
      %v211 = vmul.f32 %v161, %v161
      %v212 = vmul.f32 %v162, %v162
      %v213 = vmul.f32 %v163, %v163
      %v214 = vmul.f32 %v164, %v164
      %v215 = vmul.f32 %v165, %v165
      %v216 = vmul.f32 %v166, %v166
      %v217 = vmul.f32 %v167, %v167
      %v218 = vmul.f32 %v168, %v168
      %v219 = vmul.f32 %v169, %v169
      %v220 = vmul.f32 %v170, %v170
      %v221 = vmul.f32 %v171, %v171
      %v222 = vmul.f32 %v172, %v172
      %v223 = vmul.f32 %v173, %v173
      %v224 = vmul.f32 %v174, %v174
      %v225 = vmul.f32 %v175, %v175
      %v226 = vmul.f32 %v176, %v176
      %v227 = vmul.f32 %v177, %v177
      %v228 = vmul.f32 %v178, %v178
      %v229 = vmul.f32 %v179, %v179
      %v230 = vmul.f32 %v180, %v180
      %v231 = vadd.f32 %v181, %v182
      %232 = vadd.xlane.f32.xlu0 %v231
      %v233 = vpop.xlane.xlu0 %232
      %v234 = vadd.f32 %v183, %v184
      %235 = vadd.xlane.f32.xlu0 %v234
      %v236 = vpop.xlane.xlu0 %235
      %v237 = vadd.f32 %v185, %v186
      %238 = vadd.xlane.f32.xlu0 %v237
      %v239 = vpop.xlane.xlu0 %238
      %v240 = vadd.f32 %v187, %v188
      %241 = vadd.xlane.f32.xlu0 %v240
      %v242 = vpop.xlane.xlu0 %241
      %v243 = vadd.f32 %v189, %v190
      %244 = vadd.xlane.f32.xlu0 %v243
      %v245 = vpop.xlane.xlu0 %244
      %v246 = vadd.f32 %v191, %v192
      %247 = vadd.xlane.f32.xlu0 %v246
      %v248 = vpop.xlane.xlu0 %247
      %v249 = vadd.f32 %v193, %v194
      %250 = vadd.xlane.f32.xlu0 %v249
      %v251 = vpop.xlane.xlu0 %250
      %v252 = vadd.f32 %v195, %v196
      %253 = vadd.xlane.f32.xlu0 %v252
      %v254 = vpop.xlane.xlu0 %253
      %v255 = vadd.f32 %v197, %v198
      %256 = vadd.xlane.f32.xlu0 %v255
      %v257 = vpop.xlane.xlu0 %256
      %v258 = vadd.f32 %v199, %v200
      %259 = vadd.xlane.f32.xlu0 %v258
      %v260 = vpop.xlane.xlu0 %259
      %v261 = vadd.f32 %v201, %v202
      %262 = vadd.xlane.f32.xlu0 %v261
      %v263 = vpop.xlane.xlu0 %262
      %v264 = vadd.f32 %v203, %v204
      %265 = vadd.xlane.f32.xlu0 %v264
      %v266 = vpop.xlane.xlu0 %265
      %v267 = vadd.f32 %v205, %v206
      %268 = vadd.xlane.f32.xlu0 %v267
      %v269 = vpop.xlane.xlu0 %268
      %v270 = vadd.f32 %v207, %v208
      %271 = vadd.xlane.f32.xlu0 %v270
      %v272 = vpop.xlane.xlu0 %271
      %v273 = vadd.f32 %v209, %v210
      %274 = vadd.xlane.f32.xlu0 %v273
      %v275 = vpop.xlane.xlu0 %274
      %v276 = vadd.f32 %v211, %v212
      %277 = vadd.xlane.f32.xlu0 %v276
      %v278 = vpop.xlane.xlu0 %277
      %v279 = vadd.f32 %v213, %v214
      %280 = vadd.xlane.f32.xlu0 %v279
      %v281 = vpop.xlane.xlu0 %280
      %v282 = vadd.f32 %v215, %v216
      %283 = vadd.xlane.f32.xlu0 %v282
      %v284 = vpop.xlane.xlu0 %283
      %v285 = vadd.f32 %v217, %v218
      %286 = vadd.xlane.f32.xlu0 %v285
      %v287 = vpop.xlane.xlu0 %286
      %v288 = vadd.f32 %v219, %v220
      %289 = vadd.xlane.f32.xlu0 %v288
      %v290 = vpop.xlane.xlu0 %289
      %v291 = vadd.f32 %v221, %v222
      %292 = vadd.xlane.f32.xlu0 %v291
      %v293 = vpop.xlane.xlu0 %292
      %v294 = vadd.f32 %v223, %v224
      %295 = vadd.xlane.f32.xlu0 %v294
      %v296 = vpop.xlane.xlu0 %295
      %v297 = vadd.f32 %v225, %v226
      %298 = vadd.xlane.f32.xlu0 %v297
      %v299 = vpop.xlane.xlu0 %298
      %v300 = vadd.f32 %v227, %v228
      %301 = vadd.xlane.f32.xlu0 %v300
      %v302 = vpop.xlane.xlu0 %301
      %v303 = vadd.f32 %v229, %v230
      %304 = vadd.xlane.f32.xlu0 %v303
      %v305 = vpop.xlane.xlu0 %304
      %v306 = vmax.f32 %v233, 1e-24
      %v307 = vmax.f32 %v236, 1e-24
      %v308 = vmax.f32 %v239, 1e-24
      %v309 = vmax.f32 %v242, 1e-24
      %v310 = vmax.f32 %v245, 1e-24
      %v311 = vmax.f32 %v248, 1e-24
      %v312 = vmax.f32 %v251, 1e-24
      %v313 = vmax.f32 %v254, 1e-24
      %v314 = vmax.f32 %v257, 1e-24
      %v315 = vmax.f32 %v260, 1e-24
      %v316 = vmax.f32 %v263, 1e-24
      %v317 = vmax.f32 %v266, 1e-24
      %v318 = vmax.f32 %v269, 1e-24
      %v319 = vmax.f32 %v272, 1e-24
      %v320 = vmax.f32 %v275, 1e-24
      %v321 = vmax.f32 %v278, 1e-24
      %v322 = vmax.f32 %v281, 1e-24
      %v323 = vmax.f32 %v284, 1e-24
      %v324 = vmax.f32 %v287, 1e-24
      %v325 = vmax.f32 %v290, 1e-24
      %v326 = vmax.f32 %v293, 1e-24
      %v327 = vmax.f32 %v296, 1e-24
      %v328 = vmax.f32 %v299, 1e-24
      %v329 = vmax.f32 %v302, 1e-24
      %v330 = vmax.f32 %v305, 1e-24
      %v331 = vrsqrt.pop %v306
      %v332 = vrsqrt.pop %v307
      %v333 = vrsqrt.pop %v308
      %v334 = vrsqrt.pop %v309
      %v335 = vrsqrt.pop %v310
      %v336 = vrsqrt.pop %v311
      %v337 = vrsqrt.pop %v312
      %v338 = vrsqrt.pop %v313
      %v339 = vrsqrt.pop %v314
      %v340 = vrsqrt.pop %v315
      %v341 = vrsqrt.pop %v316
      %v342 = vrsqrt.pop %v317
      %v343 = vrsqrt.pop %v318
      %v344 = vrsqrt.pop %v319
      %v345 = vrsqrt.pop %v320
      %v346 = vrsqrt.pop %v321
      %v347 = vrsqrt.pop %v322
      %v348 = vrsqrt.pop %v323
      %v349 = vrsqrt.pop %v324
      %v350 = vrsqrt.pop %v325
      %v351 = vrsqrt.pop %v326
      %v352 = vrsqrt.pop %v327
      %v353 = vrsqrt.pop %v328
      %v354 = vrsqrt.pop %v329
      %v355 = vrsqrt.pop %v330
      %v356 = vmul.f32 %v131, %v331
      %v357 = vmul.f32 %v132, %v331
      %v358 = vmul.f32 %v133, %v332
      %v359 = vmul.f32 %v134, %v332
      %v360 = vmul.f32 %v135, %v333
      %v361 = vmul.f32 %v136, %v333
      %v362 = vmul.f32 %v137, %v334
      %v363 = vmul.f32 %v138, %v334
      %v364 = vmul.f32 %v139, %v335
      %v365 = vmul.f32 %v140, %v335
      %v366 = vmul.f32 %v141, %v336
      %v367 = vmul.f32 %v142, %v336
      %v368 = vmul.f32 %v143, %v337
      %v369 = vmul.f32 %v144, %v337
      %v370 = vmul.f32 %v145, %v338
      %v371 = vmul.f32 %v146, %v338
      %v372 = vmul.f32 %v147, %v339
      %v373 = vmul.f32 %v148, %v339
      %v374 = vmul.f32 %v149, %v340
      %v375 = vmul.f32 %v150, %v340
      %v376 = vmul.f32 %v151, %v341
      %v377 = vmul.f32 %v152, %v341
      %v378 = vmul.f32 %v153, %v342
      %v379 = vmul.f32 %v154, %v342
      %v380 = vmul.f32 %v155, %v343
      %v381 = vmul.f32 %v156, %v343
      %v382 = vmul.f32 %v157, %v344
      %v383 = vmul.f32 %v158, %v344
      %v384 = vmul.f32 %v159, %v345
      %v385 = vmul.f32 %v160, %v345
      %v386 = vmul.f32 %v161, %v346
      %v387 = vmul.f32 %v162, %v346
      %v388 = vmul.f32 %v163, %v347
      %v389 = vmul.f32 %v164, %v347
      %v390 = vmul.f32 %v165, %v348
      %v391 = vmul.f32 %v166, %v348
      %v392 = vmul.f32 %v167, %v349
      %v393 = vmul.f32 %v168, %v349
      %v394 = vmul.f32 %v169, %v350
      %v395 = vmul.f32 %v170, %v350
      %v396 = vmul.f32 %v171, %v351
      %v397 = vmul.f32 %v172, %v351
      %v398 = vmul.f32 %v173, %v352
      %v399 = vmul.f32 %v174, %v352
      %v400 = vmul.f32 %v175, %v353
      %v401 = vmul.f32 %v176, %v353
      %v402 = vmul.f32 %v177, %v354
      %v403 = vmul.f32 %v178, %v354
      %v404 = vmul.f32 %v179, %v355
      %v405 = vmul.f32 %v180, %v355
      %v406 = vpack.c.bf16 %v358, %v356
      %v407 = vpack.c.bf16 %v359, %v357
      %v408 = vpack.c.bf16 %v362, %v360
      %v409 = vpack.c.bf16 %v363, %v361
      %v410 = vpack.c.bf16 %v366, %v364
      %v411 = vpack.c.bf16 %v367, %v365
      %v412 = vpack.c.bf16 %v370, %v368
      %v413 = vpack.c.bf16 %v371, %v369
      %v414 = vpack.c.bf16 %v374, %v372
      %v415 = vpack.c.bf16 %v375, %v373
      %v416 = vpack.c.bf16 %v378, %v376
      %v417 = vpack.c.bf16 %v379, %v377
      %v418 = vpack.c.bf16 %v382, %v380
      %v419 = vpack.c.bf16 %v383, %v381
      %v420 = vpack.c.bf16 %v386, %v384
      %v421 = vpack.c.bf16 %v387, %v385
      %v422 = vpack.c.bf16 %v390, %v388
      %v423 = vpack.c.bf16 %v391, %v389
      %v424 = vpack.c.bf16 %v394, %v392
      %v425 = vpack.c.bf16 %v395, %v393
      %v426 = vpack.c.bf16 %v398, %v396
      %v427 = vpack.c.bf16 %v399, %v397
      %v428 = vpack.c.bf16 %v402, %v400
      %v429 = vpack.c.bf16 %v403, %v401
      %v430 = vpack.c.bf16 %v404, %v404
      %v431 = vpack.c.bf16 %v405, %v405
      %v432 = vld [vmem:[#allocation6] sm:$0xf]
      %v433 = vld [vmem:[#allocation6 + $0x4] sm:$0xf]
      %v434 = vld [vmem:[#allocation6 + $0x8] sm:$0xf]
      %v435 = vld [vmem:[#allocation6 + $0xc] sm:$0xf]
      %v436 = vld [vmem:[#allocation6 + $0x10] sm:$0xf]
      %v437 = vld [vmem:[#allocation6 + $0x14] sm:$0xf]
      %v438 = vld [vmem:[#allocation6 + $0x18] sm:$0xf]
      %v439 = vld [vmem:[#allocation6 + $0x1c] sm:$0xf]
      %v440 = vld [vmem:[#allocation6 + $0x20] sm:$0xf]
      %v441 = vld [vmem:[#allocation6 + $0x24] sm:$0xf]
      %v442 = vld [vmem:[#allocation6 + $0x28] sm:$0xf]
      %v443 = vld [vmem:[#allocation6 + $0x2c] sm:$0xf]
      %v444 = vld [vmem:[#allocation6 + $0x30] sm:$0xf]
      %v445 = vld [vmem:[#allocation6 + $0x34] sm:$0xf]
      %v446 = vld [vmem:[#allocation6 + $0x38] sm:$0xf]
      %v447 = vld [vmem:[#allocation6 + $0x3c] sm:$0xf]
      %v448 = vld [vmem:[#allocation6 + $0x40] sm:$0xf]
      %v449 = vld [vmem:[#allocation6 + $0x44] sm:$0xf]
      %v450 = vld [vmem:[#allocation6 + $0x48] sm:$0xf]
      %v451 = vld [vmem:[#allocation6 + $0x4c] sm:$0xf]
      %v452 = vld [vmem:[#allocation6 + $0x50] sm:$0xf]
      %v453 = vld [vmem:[#allocation6 + $0x54] sm:$0xf]
      %v454 = vld [vmem:[#allocation6 + $0x58] sm:$0xf]
      %v455 = vld [vmem:[#allocation6 + $0x5c] sm:$0xf]
      %v456 = vld [vmem:[#allocation6 + $0x60] sm:$0xf]
      %v457 = vld [vmem:[#allocation6 + $0x64] sm:$0xf]
      %v458 = vld [vmem:[#allocation6 + $0x68] sm:$0xf]
      %v459 = vld [vmem:[#allocation6 + $0x6c] sm:$0xf]
      %v460 = vld [vmem:[#allocation6 + $0x70] sm:$0xf]
      %v461 = vld [vmem:[#allocation6 + $0x74] sm:$0xf]
      %v462 = vld [vmem:[#allocation6 + $0x78] sm:$0xf]
      %v463 = vld [vmem:[#allocation6 + $0x7c] sm:$0xf]
      %v464 = vld [vmem:[%s2] sm:$0x1]
      %v465 = vpack.c.bf16 %v464, %v464
      %v498 = vunpack.c.l.b16 %v432
      %v499 = vunpack.c.l.b16 %v433
      %v500 = vunpack.c.l.b16 %v434
      %v501 = vunpack.c.l.b16 %v435
      %v502 = vunpack.c.l.b16 %v436
      %v503 = vunpack.c.l.b16 %v437
      %v504 = vunpack.c.l.b16 %v438
      %v505 = vunpack.c.l.b16 %v439
      %v506 = vunpack.c.l.b16 %v440
      %v507 = vunpack.c.l.b16 %v441
      %v508 = vunpack.c.l.b16 %v442
      %v509 = vunpack.c.l.b16 %v443
      %v510 = vunpack.c.l.b16 %v444
      %v511 = vunpack.c.l.b16 %v445
      %v512 = vunpack.c.l.b16 %v446
      %v513 = vunpack.c.l.b16 %v447
      %v514 = vunpack.c.l.b16 %v448
      %v515 = vunpack.c.l.b16 %v449
      %v516 = vunpack.c.l.b16 %v450
      %v517 = vunpack.c.l.b16 %v451
      %v518 = vunpack.c.l.b16 %v452
      %v519 = vunpack.c.l.b16 %v453
      %v520 = vunpack.c.l.b16 %v454
      %v521 = vunpack.c.l.b16 %v455
      %v522 = vunpack.c.l.b16 %v456
      %v523 = vunpack.c.l.b16 %v457
      %v524 = vunpack.c.l.b16 %v458
      %v525 = vunpack.c.l.b16 %v459
      %v526 = vunpack.c.l.b16 %v460
      %v527 = vunpack.c.l.b16 %v461
      %v528 = vunpack.c.l.b16 %v462
      %v529 = vunpack.c.l.b16 %v463
      %v530 = vpack.c.b16 %v499, %v498
      %v531 = vpack.c.b16 %v501, %v500
      %v532 = vpack.c.b16 %v503, %v502
      %v533 = vpack.c.b16 %v505, %v504
      %v534 = vpack.c.b16 %v507, %v506
      %v535 = vpack.c.b16 %v509, %v508
      %v536 = vpack.c.b16 %v511, %v510
      %v537 = vpack.c.b16 %v513, %v512
      %v538 = vpack.c.b16 %v515, %v514
      %v539 = vpack.c.b16 %v517, %v516
      %v540 = vpack.c.b16 %v519, %v518
      %v541 = vpack.c.b16 %v521, %v520
      %v542 = vpack.c.b16 %v523, %v522
      %v543 = vpack.c.b16 %v525, %v524
      %v544 = vpack.c.b16 %v527, %v526
      %v545 = vpack.c.b16 %v529, %v528
      %562 = vmatprep.subr.bf16.mxu0 0
      %563 = vmatpush1.bf16.msra.mxu0 %v537
      %564 = vmatprep.subr.bf16.mxu0 0
      %565 = vmatpush1.bf16.msra.mxu0 %v536
      %566 = vmatprep.subr.bf16.mxu0 0
      %567 = vmatpush1.bf16.msra.mxu0 %v535
      %568 = vmatprep.subr.bf16.mxu0 0
      %569 = vmatpush1.bf16.msra.mxu0 %v534
      %570 = vmatprep.subr.bf16.mxu0 0
      %571 = vmatpush1.bf16.msra.mxu0 %v533
      %572 = vmatprep.subr.bf16.mxu0 0
      %573 = vmatpush1.bf16.msra.mxu0 %v532
      %574 = vmatprep.subr.bf16.mxu0 0
      %575 = vmatpush1.bf16.msra.mxu0 %v531
      %576 = vmatprep.subr.bf16.mxu0 0
      %577 = vmatpush1.bf16.msra.mxu0 %v530
      %578 = vmatprep.subr.bf16.mxu0 0
      %579 = vmatpush2.bf16.msra.mxu0 %v545
      %580 = vmatprep.subr.bf16.mxu0 0
      %581 = vmatpush2.bf16.msra.mxu0 %v544
      %582 = vmatprep.subr.bf16.mxu0 0
      %583 = vmatpush2.bf16.msra.mxu0 %v543
      %584 = vmatprep.subr.bf16.mxu0 0
      %585 = vmatpush2.bf16.msra.mxu0 %v542
      %586 = vmatprep.subr.bf16.mxu0 0
      %587 = vmatpush2.bf16.msra.mxu0 %v541
      %588 = vmatprep.subr.bf16.mxu0 0
      %589 = vmatpush2.bf16.msra.mxu0 %v540
      %590 = vmatprep.subr.bf16.mxu0 0
      %591 = vmatpush2.bf16.msra.mxu0 %v539
      %592 = vmatprep.subr.bf16.mxu0 0
      %593 = vmatpush2.bf16.msra.mxu0 %v538
      %594 = vmatprep.mubr.bf16.mxu0 %v407
      %595 = vmatmul.mubr.bf16.gmra.mxu0 %v406
      %v596 = vpop.f32.mrf.mxu0
      %v597 = vadd.f32 0.0, %v596
      %v598 = vpop.f32.mrf.mxu0
      %v599 = vpop.f32.mrf.mxu0
      %v600 = vadd.f32 0.0, %v599
      %v601 = vpop.f32.mrf.mxu0
      %602 = vmatprep.mubr.bf16.mxu0 %v409
      %603 = vmatmul.mubr.bf16.gmra.mxu0 %v408
      %v604 = vpop.f32.mrf.mxu0
      %v605 = vadd.f32 0.0, %v604
      %v606 = vpop.f32.mrf.mxu0
      %v607 = vpop.f32.mrf.mxu0
      %v608 = vadd.f32 0.0, %v607
      %v609 = vpop.f32.mrf.mxu0
      %610 = vmatprep.mubr.bf16.mxu0 %v411
      %611 = vmatmul.mubr.bf16.gmra.mxu0 %v410
      %v612 = vpop.f32.mrf.mxu0
      %v613 = vadd.f32 0.0, %v612
      %v614 = vpop.f32.mrf.mxu0
      %v615 = vpop.f32.mrf.mxu0
      %v616 = vadd.f32 0.0, %v615
      %v617 = vpop.f32.mrf.mxu0
      %618 = vmatprep.mubr.bf16.mxu0 %v413
      %619 = vmatmul.mubr.bf16.gmra.mxu0 %v412
      %v620 = vpop.f32.mrf.mxu0
      %v621 = vadd.f32 0.0, %v620
      %v622 = vpop.f32.mrf.mxu0
      %v623 = vpop.f32.mrf.mxu0
      %v624 = vadd.f32 0.0, %v623
      %v625 = vpop.f32.mrf.mxu0
      %626 = vmatprep.mubr.bf16.mxu0 %v415
      %627 = vmatmul.mubr.bf16.gmra.mxu0 %v414
      %v628 = vpop.f32.mrf.mxu0
      %v629 = vadd.f32 0.0, %v628
      %v630 = vpop.f32.mrf.mxu0
      %v631 = vpop.f32.mrf.mxu0
      %v632 = vadd.f32 0.0, %v631
      %v633 = vpop.f32.mrf.mxu0
      %634 = vmatprep.mubr.bf16.mxu0 %v417
      %635 = vmatmul.mubr.bf16.gmra.mxu0 %v416
      %v636 = vpop.f32.mrf.mxu0
      %v637 = vadd.f32 0.0, %v636
      %v638 = vpop.f32.mrf.mxu0
      %v639 = vpop.f32.mrf.mxu0
      %v640 = vadd.f32 0.0, %v639
      %v641 = vpop.f32.mrf.mxu0
      %642 = vmatprep.mubr.bf16.mxu0 %v419
      %643 = vmatmul.mubr.bf16.gmra.mxu0 %v418
      %v644 = vpop.f32.mrf.mxu0
      %v645 = vadd.f32 0.0, %v644
      %v646 = vpop.f32.mrf.mxu0
      %v647 = vpop.f32.mrf.mxu0
      %v648 = vadd.f32 0.0, %v647
      %v649 = vpop.f32.mrf.mxu0
      %650 = vmatprep.mubr.bf16.mxu0 %v421
      %651 = vmatmul.mubr.bf16.gmra.mxu0 %v420
      %v652 = vpop.f32.mrf.mxu0
      %v653 = vadd.f32 0.0, %v652
      %v654 = vpop.f32.mrf.mxu0
      %v655 = vpop.f32.mrf.mxu0
      %v656 = vadd.f32 0.0, %v655
      %v657 = vpop.f32.mrf.mxu0
      %658 = vmatprep.mubr.bf16.mxu0 %v423
      %659 = vmatmul.mubr.bf16.gmra.mxu0 %v422
      %v660 = vpop.f32.mrf.mxu0
      %v661 = vadd.f32 0.0, %v660
      %v662 = vpop.f32.mrf.mxu0
      %v663 = vpop.f32.mrf.mxu0
      %v664 = vadd.f32 0.0, %v663
      %v665 = vpop.f32.mrf.mxu0
      %666 = vmatprep.mubr.bf16.mxu0 %v425
      %667 = vmatmul.mubr.bf16.gmra.mxu0 %v424
      %v668 = vpop.f32.mrf.mxu0
      %v669 = vadd.f32 0.0, %v668
      %v670 = vpop.f32.mrf.mxu0
      %v671 = vpop.f32.mrf.mxu0
      %v672 = vadd.f32 0.0, %v671
      %v673 = vpop.f32.mrf.mxu0
      %674 = vmatprep.mubr.bf16.mxu0 %v427
      %675 = vmatmul.mubr.bf16.gmra.mxu0 %v426
      %v676 = vpop.f32.mrf.mxu0
      %v677 = vadd.f32 0.0, %v676
      %v678 = vpop.f32.mrf.mxu0
      %v679 = vpop.f32.mrf.mxu0
      %v680 = vadd.f32 0.0, %v679
      %v681 = vpop.f32.mrf.mxu0
      %682 = vmatprep.mubr.bf16.mxu0 %v429
      %683 = vmatmul.mubr.bf16.gmra.mxu0 %v428
      %v684 = vpop.f32.mrf.mxu0
      %v685 = vadd.f32 0.0, %v684
      %v686 = vpop.f32.mrf.mxu0
      %v687 = vpop.f32.mrf.mxu0
      %v688 = vadd.f32 0.0, %v687
      %v689 = vpop.f32.mrf.mxu0
      %690 = vmatprep.mubr.bf16.mxu0 %v431
      %691 = vmatmul.mubr.bf16.gmra.mxu0 %v430
      %v692 = vpop.f32.mrf.mxu0
      %v693 = vadd.f32 0.0, %v692
      %v694 = vpop.f32.mrf.mxu0
      %v695 = vpop.f32.mrf.mxu0
      %v696 = vpop.f32.mrf.mxu0
      %697 = vdwg.mxu0
      %v698 = vpack.c.bf16 %v600, %v597
      %v699 = vpack.c.bf16 %v608, %v605
      %v700 = vpack.c.bf16 %v616, %v613
      %v701 = vpack.c.bf16 %v624, %v621
      %v702 = vpack.c.bf16 %v632, %v629
      %v703 = vpack.c.bf16 %v640, %v637
      %v704 = vpack.c.bf16 %v648, %v645
      %v705 = vpack.c.bf16 %v656, %v653
      %v706 = vpack.c.bf16 %v664, %v661
      %v707 = vpack.c.bf16 %v672, %v669
      %v708 = vpack.c.bf16 %v680, %v677
      %v709 = vpack.c.bf16 %v688, %v685
      %v710 = vpack.c.bf16 %v693, %v693
      %v712 = vpack.i.b16 %v465, %v465
      %v714 = vlaneseq
      %v715 = vshrl.u32 %v714, 7
      %v716 = vsub.s32 0, %v715
      %v717 = vrot.slane %v712, %v716
      %v718 = vadd.bf16 %v698, %v717
      %v719 = vadd.bf16 %v699, %v717
      %v720 = vadd.bf16 %v700, %v717
      %v721 = vadd.bf16 %v701, %v717
      %v722 = vadd.bf16 %v702, %v717
      %v723 = vadd.bf16 %v703, %v717
      %v724 = vadd.bf16 %v704, %v717
      %v725 = vadd.bf16 %v705, %v717
      %v726 = vadd.bf16 %v706, %v717
      %v727 = vadd.bf16 %v707, %v717
      %v728 = vadd.bf16 %v708, %v717
      %v729 = vadd.bf16 %v709, %v717
      %v730 = vadd.bf16 %v710, %v717
      %v731 = vtanh.bf16.pop %v718
      %v732 = vtanh.bf16.pop %v719
      %v733 = vtanh.bf16.pop %v720
      %v734 = vtanh.bf16.pop %v721
      %v735 = vtanh.bf16.pop %v722
      %v736 = vtanh.bf16.pop %v723
      %v737 = vtanh.bf16.pop %v724
      %v738 = vtanh.bf16.pop %v725
      %v739 = vtanh.bf16.pop %v726
      %v740 = vtanh.bf16.pop %v727
      %v741 = vtanh.bf16.pop %v728
      %v742 = vtanh.bf16.pop %v729
      %v743 = vtanh.bf16.pop %v730
      %v744 = vld [vmem:[#allocation8] sm:$0xf]
      %v745 = vld [vmem:[#allocation8 + $0x4] sm:$0xf]
      %v746 = vld [vmem:[#allocation8 + $0x8] sm:$0xf]
      %v747 = vld [vmem:[#allocation8 + $0xc] sm:$0xf]
      %v748 = vld [vmem:[#allocation8 + $0x10] sm:$0xf]
      %v749 = vld [vmem:[#allocation8 + $0x14] sm:$0xf]
      %v750 = vld [vmem:[#allocation8 + $0x18] sm:$0xf]
      %v751 = vld [vmem:[#allocation8 + $0x1c] sm:$0xf]
      %v752 = vld [vmem:[#allocation8 + $0x20] sm:$0xf]
      %v753 = vld [vmem:[#allocation8 + $0x24] sm:$0xf]
      %v754 = vld [vmem:[#allocation8 + $0x28] sm:$0xf]
      %v755 = vld [vmem:[#allocation8 + $0x2c] sm:$0xf]
      %v756 = vld [vmem:[#allocation8 + $0x30] sm:$0xf]
      %v757 = vld [vmem:[#allocation8 + $0x34] sm:$0xf]
      %v758 = vld [vmem:[#allocation8 + $0x38] sm:$0xf]
      %v759 = vld [vmem:[#allocation8 + $0x3c] sm:$0xf]
      %v760 = vld [vmem:[%s4] sm:$0x1]
      %v761 = vpack.c.bf16 %v760, %v760
      %v778 = vunpack.c.l.b16 %v744
      %v779 = vunpack.c.l.b16 %v745
      %v780 = vunpack.c.l.b16 %v746
      %v781 = vunpack.c.l.b16 %v747
      %v782 = vunpack.c.l.b16 %v748
      %v783 = vunpack.c.l.b16 %v749
      %v784 = vunpack.c.l.b16 %v750
      %v785 = vunpack.c.l.b16 %v751
      %v786 = vunpack.c.l.b16 %v752
      %v787 = vunpack.c.l.b16 %v753
      %v788 = vunpack.c.l.b16 %v754
      %v789 = vunpack.c.l.b16 %v755
      %v790 = vunpack.c.l.b16 %v756
      %v791 = vunpack.c.l.b16 %v757
      %v792 = vunpack.c.l.b16 %v758
      %v793 = vunpack.c.l.b16 %v759
      %v794 = vpack.c.b16 %v779, %v778
      %v795 = vpack.c.b16 %v781, %v780
      %v796 = vpack.c.b16 %v783, %v782
      %v797 = vpack.c.b16 %v785, %v784
      %v798 = vpack.c.b16 %v787, %v786
      %v799 = vpack.c.b16 %v789, %v788
      %v800 = vpack.c.b16 %v791, %v790
      %v801 = vpack.c.b16 %v793, %v792
      %810 = vmatprep.subr.bf16.mxu0 0
      %811 = vmatpush1.bf16.msra.mxu0 %v801
      %812 = vmatprep.subr.bf16.mxu0 0
      %813 = vmatpush1.bf16.msra.mxu0 %v800
      %814 = vmatprep.subr.bf16.mxu0 0
      %815 = vmatpush1.bf16.msra.mxu0 %v799
      %816 = vmatprep.subr.bf16.mxu0 0
      %817 = vmatpush1.bf16.msra.mxu0 %v798
      %818 = vmatprep.subr.bf16.mxu0 0
      %819 = vmatpush1.bf16.msra.mxu0 %v797
      %820 = vmatprep.subr.bf16.mxu0 0
      %821 = vmatpush1.bf16.msra.mxu0 %v796
      %822 = vmatprep.subr.bf16.mxu0 0
      %823 = vmatpush1.bf16.msra.mxu0 %v795
      %824 = vmatprep.subr.bf16.mxu0 0
      %825 = vmatpush1.bf16.msra.mxu0 %v794
      %826 = vmatprep.subr.bf16.mxu0 0
      %827 = vmatpush2.bf16.msra.mxu0 0
      %828 = vmatprep.subr.bf16.mxu0 0
      %829 = vmatpush2.bf16.msra.mxu0 0
      %830 = vmatprep.subr.bf16.mxu0 0
      %831 = vmatpush2.bf16.msra.mxu0 0
      %832 = vmatprep.subr.bf16.mxu0 0
      %833 = vmatpush2.bf16.msra.mxu0 0
      %834 = vmatprep.subr.bf16.mxu0 0
      %835 = vmatpush2.bf16.msra.mxu0 0
      %836 = vmatprep.subr.bf16.mxu0 0
      %837 = vmatpush2.bf16.msra.mxu0 0
      %838 = vmatprep.subr.bf16.mxu0 0
      %839 = vmatpush2.bf16.msra.mxu0 0
      %840 = vmatprep.subr.bf16.mxu0 0
      %841 = vmatpush2.bf16.msra.mxu0 0
      %842 = vmatprep.mubr.bf16.mxu0 0
      %843 = vmatmul.mubr.bf16.gmra.mxu0 %v731
      %v844 = vpop.f32.mrf.mxu0
      %v845 = vadd.f32 0.0, %v844
      %v846 = vpop.f32.mrf.mxu0
      %v847 = vpop.f32.mrf.mxu0
      %v848 = vadd.f32 0.0, %v847
      %v849 = vpop.f32.mrf.mxu0
      %850 = vmatprep.mubr.bf16.mxu0 0
      %851 = vmatmul.mubr.bf16.gmra.mxu0 %v732
      %v852 = vpop.f32.mrf.mxu0
      %v853 = vadd.f32 0.0, %v852
      %v854 = vpop.f32.mrf.mxu0
      %v855 = vpop.f32.mrf.mxu0
      %v856 = vadd.f32 0.0, %v855
      %v857 = vpop.f32.mrf.mxu0
      %858 = vmatprep.mubr.bf16.mxu0 0
      %859 = vmatmul.mubr.bf16.gmra.mxu0 %v733
      %v860 = vpop.f32.mrf.mxu0
      %v861 = vadd.f32 0.0, %v860
      %v862 = vpop.f32.mrf.mxu0
      %v863 = vpop.f32.mrf.mxu0
      %v864 = vadd.f32 0.0, %v863
      %v865 = vpop.f32.mrf.mxu0
      %866 = vmatprep.mubr.bf16.mxu0 0
      %867 = vmatmul.mubr.bf16.gmra.mxu0 %v734
      %v868 = vpop.f32.mrf.mxu0
      %v869 = vadd.f32 0.0, %v868
      %v870 = vpop.f32.mrf.mxu0
      %v871 = vpop.f32.mrf.mxu0
      %v872 = vadd.f32 0.0, %v871
      %v873 = vpop.f32.mrf.mxu0
      %874 = vmatprep.mubr.bf16.mxu0 0
      %875 = vmatmul.mubr.bf16.gmra.mxu0 %v735
      %v876 = vpop.f32.mrf.mxu0
      %v877 = vadd.f32 0.0, %v876
      %v878 = vpop.f32.mrf.mxu0
      %v879 = vpop.f32.mrf.mxu0
      %v880 = vadd.f32 0.0, %v879
      %v881 = vpop.f32.mrf.mxu0
      %882 = vmatprep.mubr.bf16.mxu0 0
      %883 = vmatmul.mubr.bf16.gmra.mxu0 %v736
      %v884 = vpop.f32.mrf.mxu0
      %v885 = vadd.f32 0.0, %v884
      %v886 = vpop.f32.mrf.mxu0
      %v887 = vpop.f32.mrf.mxu0
      %v888 = vadd.f32 0.0, %v887
      %v889 = vpop.f32.mrf.mxu0
      %890 = vmatprep.mubr.bf16.mxu0 0
      %891 = vmatmul.mubr.bf16.gmra.mxu0 %v737
      %v892 = vpop.f32.mrf.mxu0
      %v893 = vadd.f32 0.0, %v892
      %v894 = vpop.f32.mrf.mxu0
      %v895 = vpop.f32.mrf.mxu0
      %v896 = vadd.f32 0.0, %v895
      %v897 = vpop.f32.mrf.mxu0
      %898 = vmatprep.mubr.bf16.mxu0 0
      %899 = vmatmul.mubr.bf16.gmra.mxu0 %v738
      %v900 = vpop.f32.mrf.mxu0
      %v901 = vadd.f32 0.0, %v900
      %v902 = vpop.f32.mrf.mxu0
      %v903 = vpop.f32.mrf.mxu0
      %v904 = vadd.f32 0.0, %v903
      %v905 = vpop.f32.mrf.mxu0
      %906 = vmatprep.mubr.bf16.mxu0 0
      %907 = vmatmul.mubr.bf16.gmra.mxu0 %v739
      %v908 = vpop.f32.mrf.mxu0
      %v909 = vadd.f32 0.0, %v908
      %v910 = vpop.f32.mrf.mxu0
      %v911 = vpop.f32.mrf.mxu0
      %v912 = vadd.f32 0.0, %v911
      %v913 = vpop.f32.mrf.mxu0
      %914 = vmatprep.mubr.bf16.mxu0 0
      %915 = vmatmul.mubr.bf16.gmra.mxu0 %v740
      %v916 = vpop.f32.mrf.mxu0
      %v917 = vadd.f32 0.0, %v916
      %v918 = vpop.f32.mrf.mxu0
      %v919 = vpop.f32.mrf.mxu0
      %v920 = vadd.f32 0.0, %v919
      %v921 = vpop.f32.mrf.mxu0
      %922 = vmatprep.mubr.bf16.mxu0 0
      %923 = vmatmul.mubr.bf16.gmra.mxu0 %v741
      %v924 = vpop.f32.mrf.mxu0
      %v925 = vadd.f32 0.0, %v924
      %v926 = vpop.f32.mrf.mxu0
      %v927 = vpop.f32.mrf.mxu0
      %v928 = vadd.f32 0.0, %v927
      %v929 = vpop.f32.mrf.mxu0
      %930 = vmatprep.mubr.bf16.mxu0 0
      %931 = vmatmul.mubr.bf16.gmra.mxu0 %v742
      %v932 = vpop.f32.mrf.mxu0
      %v933 = vadd.f32 0.0, %v932
      %v934 = vpop.f32.mrf.mxu0
      %v935 = vpop.f32.mrf.mxu0
      %v936 = vadd.f32 0.0, %v935
      %v937 = vpop.f32.mrf.mxu0
      %938 = vmatprep.mubr.bf16.mxu0 0
      %939 = vmatmul.mubr.bf16.gmra.mxu0 %v743
      %v940 = vpop.f32.mrf.mxu0
      %v941 = vadd.f32 0.0, %v940
      %v942 = vpop.f32.mrf.mxu0
      %v943 = vpop.f32.mrf.mxu0
      %v944 = vpop.f32.mrf.mxu0
      %945 = vdwg.mxu0
      %v946 = vpack.c.bf16 %v848, %v845
      %v947 = vpack.c.bf16 %v856, %v853
      %v948 = vpack.c.bf16 %v864, %v861
      %v949 = vpack.c.bf16 %v872, %v869
      %v950 = vpack.c.bf16 %v880, %v877
      %v951 = vpack.c.bf16 %v888, %v885
      %v952 = vpack.c.bf16 %v896, %v893
      %v953 = vpack.c.bf16 %v904, %v901
      %v954 = vpack.c.bf16 %v912, %v909
      %v955 = vpack.c.bf16 %v920, %v917
      %v956 = vpack.c.bf16 %v928, %v925
      %v957 = vpack.c.bf16 %v936, %v933
      %v958 = vpack.c.bf16 %v941, %v941
      %v960 = vpack.i.b16 %v761, %v761
      %v962 = vlaneseq
      %v963 = vshrl.u32 %v962, 7
      %v964 = vsub.s32 0, %v963
      %v965 = vrot.slane %v960, %v964
      %v966 = vadd.bf16 %v946, %v965
      %v967 = vadd.bf16 %v947, %v965
      %v968 = vadd.bf16 %v948, %v965
      %v969 = vadd.bf16 %v949, %v965
      %v970 = vadd.bf16 %v950, %v965
      %v971 = vadd.bf16 %v951, %v965
      %v972 = vadd.bf16 %v952, %v965
      %v973 = vadd.bf16 %v953, %v965
      %v974 = vadd.bf16 %v954, %v965
      %v975 = vadd.bf16 %v955, %v965
      %v976 = vadd.bf16 %v956, %v965
      %v977 = vadd.bf16 %v957, %v965
      %v978 = vadd.bf16 %v958, %v965
      %v979 = vtanh.bf16.pop %v966
      %v980 = vtanh.bf16.pop %v967
      %v981 = vtanh.bf16.pop %v968
      %v982 = vtanh.bf16.pop %v969
      %v983 = vtanh.bf16.pop %v970
      %v984 = vtanh.bf16.pop %v971
      %v985 = vtanh.bf16.pop %v972
      %v986 = vtanh.bf16.pop %v973
      %v987 = vtanh.bf16.pop %v974
      %v988 = vtanh.bf16.pop %v975
      %v989 = vtanh.bf16.pop %v976
      %v990 = vtanh.bf16.pop %v977
      %v991 = vtanh.bf16.pop %v978
      %v992 = vld [vmem:[#allocation9] sm:$0xf]
      %v993 = vld [vmem:[#allocation9 + $0x4] sm:$0xf]
      %v994 = vld [vmem:[#allocation9 + $0x8] sm:$0xf]
      %v995 = vld [vmem:[#allocation9 + $0xc] sm:$0xf]
      %v996 = vld [vmem:[#allocation9 + $0x10] sm:$0xf]
      %v997 = vld [vmem:[#allocation9 + $0x14] sm:$0xf]
      %v998 = vld [vmem:[#allocation9 + $0x18] sm:$0xf]
      %v999 = vld [vmem:[#allocation9 + $0x1c] sm:$0xf]
      %v1000 = vld [vmem:[#allocation9 + $0x20] sm:$0xf]
      %v1001 = vld [vmem:[#allocation9 + $0x24] sm:$0xf]
      %v1002 = vld [vmem:[#allocation9 + $0x28] sm:$0xf]
      %v1003 = vld [vmem:[#allocation9 + $0x2c] sm:$0xf]
      %v1004 = vld [vmem:[#allocation9 + $0x30] sm:$0xf]
      %v1005 = vld [vmem:[#allocation9 + $0x34] sm:$0xf]
      %v1006 = vld [vmem:[#allocation9 + $0x38] sm:$0xf]
      %v1007 = vld [vmem:[#allocation9 + $0x3c] sm:$0xf]
      %v1008 = vld [vmem:[%s6] sm:$0x1]
      %v1009 = vpack.c.bf16 %v1008, %v1008
      %v1026 = vunpack.c.l.b16 %v992
      %v1027 = vunpack.c.l.b16 %v993
      %v1028 = vunpack.c.l.b16 %v994
      %v1029 = vunpack.c.l.b16 %v995
      %v1030 = vunpack.c.l.b16 %v996
      %v1031 = vunpack.c.l.b16 %v997
      %v1032 = vunpack.c.l.b16 %v998
      %v1033 = vunpack.c.l.b16 %v999
      %v1034 = vunpack.c.l.b16 %v1000
      %v1035 = vunpack.c.l.b16 %v1001
      %v1036 = vunpack.c.l.b16 %v1002
      %v1037 = vunpack.c.l.b16 %v1003
      %v1038 = vunpack.c.l.b16 %v1004
      %v1039 = vunpack.c.l.b16 %v1005
      %v1040 = vunpack.c.l.b16 %v1006
      %v1041 = vunpack.c.l.b16 %v1007
      %v1042 = vpack.c.b16 %v1027, %v1026
      %v1043 = vpack.c.b16 %v1029, %v1028
      %v1044 = vpack.c.b16 %v1031, %v1030
      %v1045 = vpack.c.b16 %v1033, %v1032
      %v1046 = vpack.c.b16 %v1035, %v1034
      %v1047 = vpack.c.b16 %v1037, %v1036
      %v1048 = vpack.c.b16 %v1039, %v1038
      %v1049 = vpack.c.b16 %v1041, %v1040
      %1058 = vmatprep.subr.bf16.mxu0 0
      %1059 = vmatpush1.bf16.msra.mxu0 %v1049
      %1060 = vmatprep.subr.bf16.mxu0 0
      %1061 = vmatpush1.bf16.msra.mxu0 %v1048
      %1062 = vmatprep.subr.bf16.mxu0 0
      %1063 = vmatpush1.bf16.msra.mxu0 %v1047
      %1064 = vmatprep.subr.bf16.mxu0 0
      %1065 = vmatpush1.bf16.msra.mxu0 %v1046
      %1066 = vmatprep.subr.bf16.mxu0 0
      %1067 = vmatpush1.bf16.msra.mxu0 %v1045
      %1068 = vmatprep.subr.bf16.mxu0 0
      %1069 = vmatpush1.bf16.msra.mxu0 %v1044
      %1070 = vmatprep.subr.bf16.mxu0 0
      %1071 = vmatpush1.bf16.msra.mxu0 %v1043
      %1072 = vmatprep.subr.bf16.mxu0 0
      %1073 = vmatpush1.bf16.msra.mxu0 %v1042
      %1074 = vmatprep.subr.bf16.mxu0 0
      %1075 = vmatpush2.bf16.msra.mxu0 0
      %1076 = vmatprep.subr.bf16.mxu0 0
      %1077 = vmatpush2.bf16.msra.mxu0 0
      %1078 = vmatprep.subr.bf16.mxu0 0
      %1079 = vmatpush2.bf16.msra.mxu0 0
      %1080 = vmatprep.subr.bf16.mxu0 0
      %1081 = vmatpush2.bf16.msra.mxu0 0
      %1082 = vmatprep.subr.bf16.mxu0 0
      %1083 = vmatpush2.bf16.msra.mxu0 0
      %1084 = vmatprep.subr.bf16.mxu0 0
      %1085 = vmatpush2.bf16.msra.mxu0 0
      %1086 = vmatprep.subr.bf16.mxu0 0
      %1087 = vmatpush2.bf16.msra.mxu0 0
      %1088 = vmatprep.subr.bf16.mxu0 0
      %1089 = vmatpush2.bf16.msra.mxu0 0
      %1090 = vmatprep.mubr.bf16.mxu0 0
      %1091 = vmatmul.mubr.bf16.gmra.mxu0 %v979
      %v1092 = vpop.f32.mrf.mxu0
      %v1093 = vadd.f32 0.0, %v1092
      %v1094 = vpop.f32.mrf.mxu0
      %v1095 = vpop.f32.mrf.mxu0
      %v1096 = vadd.f32 0.0, %v1095
      %v1097 = vpop.f32.mrf.mxu0
      %1098 = vmatprep.mubr.bf16.mxu0 0
      %1099 = vmatmul.mubr.bf16.gmra.mxu0 %v980
      %v1100 = vpop.f32.mrf.mxu0
      %v1101 = vadd.f32 0.0, %v1100
      %v1102 = vpop.f32.mrf.mxu0
      %v1103 = vpop.f32.mrf.mxu0
      %v1104 = vadd.f32 0.0, %v1103
      %v1105 = vpop.f32.mrf.mxu0
      %1106 = vmatprep.mubr.bf16.mxu0 0
      %1107 = vmatmul.mubr.bf16.gmra.mxu0 %v981
      %v1108 = vpop.f32.mrf.mxu0
      %v1109 = vadd.f32 0.0, %v1108
      %v1110 = vpop.f32.mrf.mxu0
      %v1111 = vpop.f32.mrf.mxu0
      %v1112 = vadd.f32 0.0, %v1111
      %v1113 = vpop.f32.mrf.mxu0
      %1114 = vmatprep.mubr.bf16.mxu0 0
      %1115 = vmatmul.mubr.bf16.gmra.mxu0 %v982
      %v1116 = vpop.f32.mrf.mxu0
      %v1117 = vadd.f32 0.0, %v1116
      %v1118 = vpop.f32.mrf.mxu0
      %v1119 = vpop.f32.mrf.mxu0
      %v1120 = vadd.f32 0.0, %v1119
      %v1121 = vpop.f32.mrf.mxu0
      %1122 = vmatprep.mubr.bf16.mxu0 0
      %1123 = vmatmul.mubr.bf16.gmra.mxu0 %v983
      %v1124 = vpop.f32.mrf.mxu0
      %v1125 = vadd.f32 0.0, %v1124
      %v1126 = vpop.f32.mrf.mxu0
      %v1127 = vpop.f32.mrf.mxu0
      %v1128 = vadd.f32 0.0, %v1127
      %v1129 = vpop.f32.mrf.mxu0
      %1130 = vmatprep.mubr.bf16.mxu0 0
      %1131 = vmatmul.mubr.bf16.gmra.mxu0 %v984
      %v1132 = vpop.f32.mrf.mxu0
      %v1133 = vadd.f32 0.0, %v1132
      %v1134 = vpop.f32.mrf.mxu0
      %v1135 = vpop.f32.mrf.mxu0
      %v1136 = vadd.f32 0.0, %v1135
      %v1137 = vpop.f32.mrf.mxu0
      %1138 = vmatprep.mubr.bf16.mxu0 0
      %1139 = vmatmul.mubr.bf16.gmra.mxu0 %v985
      %v1140 = vpop.f32.mrf.mxu0
      %v1141 = vadd.f32 0.0, %v1140
      %v1142 = vpop.f32.mrf.mxu0
      %v1143 = vpop.f32.mrf.mxu0
      %v1144 = vadd.f32 0.0, %v1143
      %v1145 = vpop.f32.mrf.mxu0
      %1146 = vmatprep.mubr.bf16.mxu0 0
      %1147 = vmatmul.mubr.bf16.gmra.mxu0 %v986
      %v1148 = vpop.f32.mrf.mxu0
      %v1149 = vadd.f32 0.0, %v1148
      %v1150 = vpop.f32.mrf.mxu0
      %v1151 = vpop.f32.mrf.mxu0
      %v1152 = vadd.f32 0.0, %v1151
      %v1153 = vpop.f32.mrf.mxu0
      %1154 = vmatprep.mubr.bf16.mxu0 0
      %1155 = vmatmul.mubr.bf16.gmra.mxu0 %v987
      %v1156 = vpop.f32.mrf.mxu0
      %v1157 = vadd.f32 0.0, %v1156
      %v1158 = vpop.f32.mrf.mxu0
      %v1159 = vpop.f32.mrf.mxu0
      %v1160 = vadd.f32 0.0, %v1159
      %v1161 = vpop.f32.mrf.mxu0
      %1162 = vmatprep.mubr.bf16.mxu0 0
      %1163 = vmatmul.mubr.bf16.gmra.mxu0 %v988
      %v1164 = vpop.f32.mrf.mxu0
      %v1165 = vadd.f32 0.0, %v1164
      %v1166 = vpop.f32.mrf.mxu0
      %v1167 = vpop.f32.mrf.mxu0
      %v1168 = vadd.f32 0.0, %v1167
      %v1169 = vpop.f32.mrf.mxu0
      %1170 = vmatprep.mubr.bf16.mxu0 0
      %1171 = vmatmul.mubr.bf16.gmra.mxu0 %v989
      %v1172 = vpop.f32.mrf.mxu0
      %v1173 = vadd.f32 0.0, %v1172
      %v1174 = vpop.f32.mrf.mxu0
      %v1175 = vpop.f32.mrf.mxu0
      %v1176 = vadd.f32 0.0, %v1175
      %v1177 = vpop.f32.mrf.mxu0
      %1178 = vmatprep.mubr.bf16.mxu0 0
      %1179 = vmatmul.mubr.bf16.gmra.mxu0 %v990
      %v1180 = vpop.f32.mrf.mxu0
      %v1181 = vadd.f32 0.0, %v1180
      %v1182 = vpop.f32.mrf.mxu0
      %v1183 = vpop.f32.mrf.mxu0
      %v1184 = vadd.f32 0.0, %v1183
      %v1185 = vpop.f32.mrf.mxu0
      %1186 = vmatprep.mubr.bf16.mxu0 0
      %1187 = vmatmul.mubr.bf16.gmra.mxu0 %v991
      %v1188 = vpop.f32.mrf.mxu0
      %v1189 = vadd.f32 0.0, %v1188
      %v1190 = vpop.f32.mrf.mxu0
      %v1191 = vpop.f32.mrf.mxu0
      %v1192 = vpop.f32.mrf.mxu0
      %1193 = vdwg.mxu0
      %v1194 = vpack.c.bf16 %v1096, %v1093
      %v1195 = vpack.c.bf16 %v1104, %v1101
      %v1196 = vpack.c.bf16 %v1112, %v1109
      %v1197 = vpack.c.bf16 %v1120, %v1117
      %v1198 = vpack.c.bf16 %v1128, %v1125
      %v1199 = vpack.c.bf16 %v1136, %v1133
      %v1200 = vpack.c.bf16 %v1144, %v1141
      %v1201 = vpack.c.bf16 %v1152, %v1149
      %v1202 = vpack.c.bf16 %v1160, %v1157
      %v1203 = vpack.c.bf16 %v1168, %v1165
      %v1204 = vpack.c.bf16 %v1176, %v1173
      %v1205 = vpack.c.bf16 %v1184, %v1181
      %v1206 = vpack.c.bf16 %v1189, %v1189
      %v1208 = vpack.i.b16 %v1009, %v1009
      %v1210 = vlaneseq
      %v1211 = vshrl.u32 %v1210, 7
      %v1212 = vsub.s32 0, %v1211
      %v1213 = vrot.slane %v1208, %v1212
      %v1214 = vadd.bf16 %v1194, %v1213
      %v1215 = vadd.bf16 %v1195, %v1213
      %v1216 = vadd.bf16 %v1196, %v1213
      %v1217 = vadd.bf16 %v1197, %v1213
      %v1218 = vadd.bf16 %v1198, %v1213
      %v1219 = vadd.bf16 %v1199, %v1213
      %v1220 = vadd.bf16 %v1200, %v1213
      %v1221 = vadd.bf16 %v1201, %v1213
      %v1222 = vadd.bf16 %v1202, %v1213
      %v1223 = vadd.bf16 %v1203, %v1213
      %v1224 = vadd.bf16 %v1204, %v1213
      %v1225 = vadd.bf16 %v1205, %v1213
      %v1226 = vadd.bf16 %v1206, %v1213
      %v1227 = vtanh.bf16.pop %v1214
      %v1228 = vtanh.bf16.pop %v1215
      %v1229 = vtanh.bf16.pop %v1216
      %v1230 = vtanh.bf16.pop %v1217
      %v1231 = vtanh.bf16.pop %v1218
      %v1232 = vtanh.bf16.pop %v1219
      %v1233 = vtanh.bf16.pop %v1220
      %v1234 = vtanh.bf16.pop %v1221
      %v1235 = vtanh.bf16.pop %v1222
      %v1236 = vtanh.bf16.pop %v1223
      %v1237 = vtanh.bf16.pop %v1224
      %v1238 = vtanh.bf16.pop %v1225
      %v1239 = vtanh.bf16.pop %v1226
      %v1253 = vunpack.c.l.b16 %v1227
      %v1254 = vunpack.c.h.b16 %v1227
      %v1255 = vunpack.c.l.b16 %v1228
      %v1256 = vunpack.c.h.b16 %v1228
      %v1257 = vunpack.c.l.b16 %v1229
      %v1258 = vunpack.c.h.b16 %v1229
      %v1259 = vunpack.c.l.b16 %v1230
      %v1260 = vunpack.c.h.b16 %v1230
      %v1261 = vunpack.c.l.b16 %v1231
      %v1262 = vunpack.c.h.b16 %v1231
      %v1263 = vunpack.c.l.b16 %v1232
      %v1264 = vunpack.c.h.b16 %v1232
      %v1265 = vunpack.c.l.b16 %v1233
      %v1266 = vunpack.c.h.b16 %v1233
      %v1267 = vunpack.c.l.b16 %v1234
      %v1268 = vunpack.c.h.b16 %v1234
      %v1269 = vunpack.c.l.b16 %v1235
      %v1270 = vunpack.c.h.b16 %v1235
      %v1271 = vunpack.c.l.b16 %v1236
      %v1272 = vunpack.c.h.b16 %v1236
      %v1273 = vunpack.c.l.b16 %v1237
      %v1274 = vunpack.c.h.b16 %v1237
      %v1275 = vunpack.c.l.b16 %v1238
      %v1276 = vunpack.c.h.b16 %v1238
      %v1277 = vunpack.c.l.b16 %v1239
      %v1278 = vpack.c.b16 %v1253, %v1253
      %v1279 = vpack.c.b16 %v1254, %v1254
      %v1280 = vpack.c.b16 %v1255, %v1255
      %v1281 = vpack.c.b16 %v1256, %v1256
      %v1282 = vpack.c.b16 %v1257, %v1257
      %v1283 = vpack.c.b16 %v1258, %v1258
      %v1284 = vpack.c.b16 %v1259, %v1259
      %v1285 = vpack.c.b16 %v1260, %v1260
      %v1286 = vpack.c.b16 %v1261, %v1261
      %v1287 = vpack.c.b16 %v1262, %v1262
      %v1288 = vpack.c.b16 %v1263, %v1263
      %v1289 = vpack.c.b16 %v1264, %v1264
      %v1290 = vpack.c.b16 %v1265, %v1265
      %v1291 = vpack.c.b16 %v1266, %v1266
      %v1292 = vpack.c.b16 %v1267, %v1267
      %v1293 = vpack.c.b16 %v1268, %v1268
      %v1294 = vpack.c.b16 %v1269, %v1269
      %v1295 = vpack.c.b16 %v1270, %v1270
      %v1296 = vpack.c.b16 %v1271, %v1271
      %v1297 = vpack.c.b16 %v1272, %v1272
      %v1298 = vpack.c.b16 %v1273, %v1273
      %v1299 = vpack.c.b16 %v1274, %v1274
      %v1300 = vpack.c.b16 %v1275, %v1275
      %v1301 = vpack.c.b16 %v1276, %v1276
      %v1302 = vpack.c.b16 %v1277, %v1277
      %1328 = vst [vmem:[#allocation2] sm:$0xf] %v1278
      %1329 = vst [vmem:[#allocation2 + $0x4] sm:$0xf] %v1279
      %1330 = vst [vmem:[#allocation2 + $0x8] sm:$0xf] %v1280
      %1331 = vst [vmem:[#allocation2 + $0xc] sm:$0xf] %v1281
      %1332 = vst [vmem:[#allocation2 + $0x10] sm:$0xf] %v1282
      %1333 = vst [vmem:[#allocation2 + $0x14] sm:$0xf] %v1283
      %1334 = vst [vmem:[#allocation2 + $0x18] sm:$0xf] %v1284
      %1335 = vst [vmem:[#allocation2 + $0x1c] sm:$0xf] %v1285
      %1336 = vst [vmem:[#allocation2 + $0x20] sm:$0xf] %v1286
      %1337 = vst [vmem:[#allocation2 + $0x24] sm:$0xf] %v1287
      %1338 = vst [vmem:[#allocation2 + $0x28] sm:$0xf] %v1288
      %1339 = vst [vmem:[#allocation2 + $0x2c] sm:$0xf] %v1289
      %1340 = vst [vmem:[#allocation2 + $0x30] sm:$0xf] %v1290
      %1341 = vst [vmem:[#allocation2 + $0x34] sm:$0xf] %v1291
      %1342 = vst [vmem:[#allocation2 + $0x38] sm:$0xf] %v1292
      %1343 = vst [vmem:[#allocation2 + $0x3c] sm:$0xf] %v1293
      %1344 = vst [vmem:[#allocation2 + $0x40] sm:$0xf] %v1294
      %1345 = vst [vmem:[#allocation2 + $0x44] sm:$0xf] %v1295
      %1346 = vst [vmem:[#allocation2 + $0x48] sm:$0xf] %v1296
      %1347 = vst [vmem:[#allocation2 + $0x4c] sm:$0xf] %v1297
      %1348 = vst [vmem:[#allocation2 + $0x50] sm:$0xf] %v1298
      %1349 = vst [vmem:[#allocation2 + $0x54] sm:$0xf] %v1299
      %1350 = vst [vmem:[#allocation2 + $0x58] sm:$0xf] %v1300
      %1351 = vst [vmem:[#allocation2 + $0x5c] sm:$0xf] %v1301
      %1352 = vst [vmem:[#allocation2 + $0x60] sm:$0xf] %v1302
    $region61: #{tpu_custom_call.1} parent=1 // pred_fallthru
      _
    %v1353 = vld [vmem:[#allocation2] sm:$0xf]
    %v1354 = vld [vmem:[#allocation2 + $0x4] sm:$0xf]
    %v1355 = vld [vmem:[#allocation2 + $0x8] sm:$0xf]
    %v1356 = vld [vmem:[#allocation2 + $0xc] sm:$0xf]
    %v1357 = vld [vmem:[#allocation2 + $0x10] sm:$0xf]
    %v1358 = vld [vmem:[#allocation2 + $0x14] sm:$0xf]
    %v1359 = vld [vmem:[#allocation2 + $0x18] sm:$0xf]
    %v1360 = vld [vmem:[#allocation2 + $0x1c] sm:$0xf]
    %v1361 = vld [vmem:[#allocation2 + $0x20] sm:$0xf]
    %v1362 = vld [vmem:[#allocation2 + $0x24] sm:$0xf]
    %v1363 = vld [vmem:[#allocation2 + $0x28] sm:$0xf]
    %v1364 = vld [vmem:[#allocation2 + $0x2c] sm:$0xf]
    %v1365 = vld [vmem:[#allocation2 + $0x30] sm:$0xf]
    %v1366 = vld [vmem:[#allocation2 + $0x34] sm:$0xf]
    %v1367 = vld [vmem:[#allocation2 + $0x38] sm:$0xf]
    %v1368 = vld [vmem:[#allocation2 + $0x3c] sm:$0xf]
    %v1369 = vld [vmem:[#allocation2 + $0x40] sm:$0xf]
    %v1370 = vld [vmem:[#allocation2 + $0x44] sm:$0xf]
    %v1371 = vld [vmem:[#allocation2 + $0x48] sm:$0xf]
    %v1372 = vld [vmem:[#allocation2 + $0x4c] sm:$0xf]
    %v1373 = vld [vmem:[#allocation2 + $0x50] sm:$0xf]
    %v1374 = vld [vmem:[#allocation2 + $0x54] sm:$0xf]
    %v1375 = vld [vmem:[#allocation2 + $0x58] sm:$0xf]
    %v1376 = vld [vmem:[#allocation2 + $0x5c] sm:$0xf]
    %v1377 = vld [vmem:[#allocation2 + $0x60] sm:$0xf]
    %v1378 = vld [vmem:[#allocation11] sm:$0xff]
    %v1379 = vld [vmem:[#allocation11 + $0x8] sm:$0xff]
    %v1380 = vld [vmem:[#allocation11 + $0x10] sm:$0xff]
    %v1381 = vld [vmem:[#allocation11 + $0x18] sm:$0xff]
    %v1382 = vld [vmem:[#allocation11 + $0x20] sm:$0xff]
    %v1383 = vld [vmem:[#allocation11 + $0x28] sm:$0xff]
    %v1384 = vld [vmem:[#allocation11 + $0x30] sm:$0xff]
    %v1385 = vld [vmem:[#allocation11 + $0x38] sm:$0xff]
    %v1386 = vld [vmem:[#allocation11 + $0x40] sm:$0xff]
    %v1387 = vld [vmem:[#allocation11 + $0x48] sm:$0xff]
    %v1388 = vld [vmem:[#allocation11 + $0x50] sm:$0xff]
    %v1389 = vld [vmem:[#allocation11 + $0x58] sm:$0xff]
    %v1390 = vld [vmem:[#allocation11 + $0x60] sm:$0xff]
    %v1391 = vld [vmem:[#allocation11 + $0x68] sm:$0xff]
    %v1392 = vld [vmem:[#allocation11 + $0x70] sm:$0xff]
    %v1393 = vld [vmem:[#allocation11 + $0x78] sm:$0xff]
    %v1394 = vld [vmem:[%s8] sm:$0x3]
    %v1396 = vlaneseq
    %v1397 = vshrl.u32 %v1396, 7
    %v1398 = vsub.s32 0, %v1397
    %v1399 = vrot.slane %v1394, %v1398
    %v1400 = vlaneseq
    %v1401 = vshrl.u32 %v1400, 7
    %v1402 = vsub.s32 1, %v1401
    %v1403 = vrot.slane %v1394, %v1402
    %v1431 = vunpack.c.l.b16 %v1353
    %v1432 = vunpack.c.l.b16 %v1354
    %v1433 = vunpack.c.l.b16 %v1355
    %v1434 = vunpack.c.l.b16 %v1356
    %v1435 = vunpack.c.l.b16 %v1357
    %v1436 = vunpack.c.l.b16 %v1358
    %v1437 = vunpack.c.l.b16 %v1359
    %v1438 = vunpack.c.l.b16 %v1360
    %v1439 = vunpack.c.l.b16 %v1361
    %v1440 = vunpack.c.l.b16 %v1362
    %v1441 = vunpack.c.l.b16 %v1363
    %v1442 = vunpack.c.l.b16 %v1364
    %v1443 = vunpack.c.l.b16 %v1365
    %v1444 = vunpack.c.l.b16 %v1366
    %v1445 = vunpack.c.l.b16 %v1367
    %v1446 = vunpack.c.l.b16 %v1368
    %v1447 = vunpack.c.l.b16 %v1369
    %v1448 = vunpack.c.l.b16 %v1370
    %v1449 = vunpack.c.l.b16 %v1371
    %v1450 = vunpack.c.l.b16 %v1372
    %v1451 = vunpack.c.l.b16 %v1373
    %v1452 = vunpack.c.l.b16 %v1374
    %v1453 = vunpack.c.l.b16 %v1375
    %v1454 = vunpack.c.l.b16 %v1376
    %v1455 = vunpack.c.l.b16 %v1377
    %v1456 = vpack.c.b16 %v1432, %v1431
    %v1457 = vpack.c.b16 %v1434, %v1433
    %v1458 = vpack.c.b16 %v1436, %v1435
    %v1459 = vpack.c.b16 %v1438, %v1437
    %v1460 = vpack.c.b16 %v1440, %v1439
    %v1461 = vpack.c.b16 %v1442, %v1441
    %v1462 = vpack.c.b16 %v1444, %v1443
    %v1463 = vpack.c.b16 %v1446, %v1445
    %v1464 = vpack.c.b16 %v1448, %v1447
    %v1465 = vpack.c.b16 %v1450, %v1449
    %v1466 = vpack.c.b16 %v1452, %v1451
    %v1467 = vpack.c.b16 %v1454, %v1453
    %v1468 = vpack.c.b16 %v1455, %v1455
    %v1498 = vunpack.c.l.b16 %v1378
    %v1499 = vunpack.c.h.b16 %v1378
    %v1500 = vunpack.c.l.b16 %v1379
    %v1501 = vunpack.c.h.b16 %v1379
    %v1502 = vunpack.c.l.b16 %v1380
    %v1503 = vunpack.c.h.b16 %v1380
    %v1504 = vunpack.c.l.b16 %v1381
    %v1505 = vunpack.c.h.b16 %v1381
    %v1506 = vunpack.c.l.b16 %v1382
    %v1507 = vunpack.c.h.b16 %v1382
    %v1508 = vunpack.c.l.b16 %v1383
    %v1509 = vunpack.c.h.b16 %v1383
    %v1510 = vunpack.c.l.b16 %v1384
    %v1511 = vunpack.c.h.b16 %v1384
    %v1512 = vunpack.c.l.b16 %v1385
    %v1513 = vunpack.c.h.b16 %v1385
    %v1514 = vunpack.c.l.b16 %v1386
    %v1515 = vunpack.c.h.b16 %v1386
    %v1516 = vunpack.c.l.b16 %v1387
    %v1517 = vunpack.c.h.b16 %v1387
    %v1518 = vunpack.c.l.b16 %v1388
    %v1519 = vunpack.c.h.b16 %v1388
    %v1520 = vunpack.c.l.b16 %v1389
    %v1521 = vunpack.c.h.b16 %v1389
    %v1522 = vunpack.c.l.b16 %v1390
    %v1523 = vunpack.c.h.b16 %v1390
    %v1524 = vunpack.c.l.b16 %v1391
    %v1525 = vunpack.c.h.b16 %v1391
    %v1526 = vunpack.c.l.b16 %v1392
    %v1527 = vunpack.c.h.b16 %v1392
    %v1528 = vunpack.c.l.b16 %v1393
    %v1529 = vunpack.c.h.b16 %v1393
    %v1530 = vpack.c.b16 %v1500, %v1498
    %v1531 = vpack.c.b16 %v1501, %v1499
    %v1532 = vpack.c.b16 %v1504, %v1502
    %v1533 = vpack.c.b16 %v1505, %v1503
    %v1534 = vpack.c.b16 %v1508, %v1506
    %v1535 = vpack.c.b16 %v1509, %v1507
    %v1536 = vpack.c.b16 %v1512, %v1510
    %v1537 = vpack.c.b16 %v1513, %v1511
    %v1538 = vpack.c.b16 %v1516, %v1514
    %v1539 = vpack.c.b16 %v1517, %v1515
    %v1540 = vpack.c.b16 %v1520, %v1518
    %v1541 = vpack.c.b16 %v1521, %v1519
    %v1542 = vpack.c.b16 %v1524, %v1522
    %v1543 = vpack.c.b16 %v1525, %v1523
    %v1544 = vpack.c.b16 %v1528, %v1526
    %v1545 = vpack.c.b16 %v1529, %v1527
    %1562 = vmatprep.subr.bf16.mxu0 %v1545
    %1563 = vmatpush1.bf16.msra.mxu0 %v1544
    %1564 = vmatprep.subr.bf16.mxu0 %v1543
    %1565 = vmatpush1.bf16.msra.mxu0 %v1542
    %1566 = vmatprep.subr.bf16.mxu0 %v1541
    %1567 = vmatpush1.bf16.msra.mxu0 %v1540
    %1568 = vmatprep.subr.bf16.mxu0 %v1539
    %1569 = vmatpush1.bf16.msra.mxu0 %v1538
    %1570 = vmatprep.subr.bf16.mxu0 %v1537
    %1571 = vmatpush1.bf16.msra.mxu0 %v1536
    %1572 = vmatprep.subr.bf16.mxu0 %v1535
    %1573 = vmatpush1.bf16.msra.mxu0 %v1534
    %1574 = vmatprep.subr.bf16.mxu0 %v1533
    %1575 = vmatpush1.bf16.msra.mxu0 %v1532
    %1576 = vmatprep.subr.bf16.mxu0 %v1531
    %1577 = vmatpush1.bf16.msra.mxu0 %v1530
    %1578 = vmatprep.subr.bf16.mxu0 0
    %1579 = vmatpush2.bf16.msra.mxu0 0
    %1580 = vmatprep.subr.bf16.mxu0 0
    %1581 = vmatpush2.bf16.msra.mxu0 0
    %1582 = vmatprep.subr.bf16.mxu0 0
    %1583 = vmatpush2.bf16.msra.mxu0 0
    %1584 = vmatprep.subr.bf16.mxu0 0
    %1585 = vmatpush2.bf16.msra.mxu0 0
    %1586 = vmatprep.subr.bf16.mxu0 0
    %1587 = vmatpush2.bf16.msra.mxu0 0
    %1588 = vmatprep.subr.bf16.mxu0 0
    %1589 = vmatpush2.bf16.msra.mxu0 0
    %1590 = vmatprep.subr.bf16.mxu0 0
    %1591 = vmatpush2.bf16.msra.mxu0 0
    %1592 = vmatprep.subr.bf16.mxu0 0
    %1593 = vmatpush2.bf16.msra.mxu0 0
    %1594 = vmatprep.mubr.bf16.mxu0 0
    %1595 = vmatmul.mubr.bf16.gmra.mxu0 %v1456
    %v1596 = vpop.f32.mrf.mxu0
    %v1597 = vadd.f32 %v1399, %v1596
    %v1598 = vpop.f32.mrf.mxu0
    %v1599 = vadd.f32 %v1403, %v1598
    %v1600 = vpop.f32.mrf.mxu0
    %v1601 = vadd.f32 %v1399, %v1600
    %v1602 = vpop.f32.mrf.mxu0
    %v1603 = vadd.f32 %v1403, %v1602
    %1604 = vmatprep.mubr.bf16.mxu0 0
    %1605 = vmatmul.mubr.bf16.gmra.mxu0 %v1457
    %v1606 = vpop.f32.mrf.mxu0
    %v1607 = vadd.f32 %v1399, %v1606
    %v1608 = vpop.f32.mrf.mxu0
    %v1609 = vadd.f32 %v1403, %v1608
    %v1610 = vpop.f32.mrf.mxu0
    %v1611 = vadd.f32 %v1399, %v1610
    %v1612 = vpop.f32.mrf.mxu0
    %v1613 = vadd.f32 %v1403, %v1612
    %1614 = vmatprep.mubr.bf16.mxu0 0
    %1615 = vmatmul.mubr.bf16.gmra.mxu0 %v1458
    %v1616 = vpop.f32.mrf.mxu0
    %v1617 = vadd.f32 %v1399, %v1616
    %v1618 = vpop.f32.mrf.mxu0
    %v1619 = vadd.f32 %v1403, %v1618
    %v1620 = vpop.f32.mrf.mxu0
    %v1621 = vadd.f32 %v1399, %v1620
    %v1622 = vpop.f32.mrf.mxu0
    %v1623 = vadd.f32 %v1403, %v1622
    %1624 = vmatprep.mubr.bf16.mxu0 0
    %1625 = vmatmul.mubr.bf16.gmra.mxu0 %v1459
    %v1626 = vpop.f32.mrf.mxu0
    %v1627 = vadd.f32 %v1399, %v1626
    %v1628 = vpop.f32.mrf.mxu0
    %v1629 = vadd.f32 %v1403, %v1628
    %v1630 = vpop.f32.mrf.mxu0
    %v1631 = vadd.f32 %v1399, %v1630
    %v1632 = vpop.f32.mrf.mxu0
    %v1633 = vadd.f32 %v1403, %v1632
    %1634 = vmatprep.mubr.bf16.mxu0 0
    %1635 = vmatmul.mubr.bf16.gmra.mxu0 %v1460
    %v1636 = vpop.f32.mrf.mxu0
    %v1637 = vadd.f32 %v1399, %v1636
    %v1638 = vpop.f32.mrf.mxu0
    %v1639 = vadd.f32 %v1403, %v1638
    %v1640 = vpop.f32.mrf.mxu0
    %v1641 = vadd.f32 %v1399, %v1640
    %v1642 = vpop.f32.mrf.mxu0
    %v1643 = vadd.f32 %v1403, %v1642
    %1644 = vmatprep.mubr.bf16.mxu0 0
    %1645 = vmatmul.mubr.bf16.gmra.mxu0 %v1461
    %v1646 = vpop.f32.mrf.mxu0
    %v1647 = vadd.f32 %v1399, %v1646
    %v1648 = vpop.f32.mrf.mxu0
    %v1649 = vadd.f32 %v1403, %v1648
    %v1650 = vpop.f32.mrf.mxu0
    %v1651 = vadd.f32 %v1399, %v1650
    %v1652 = vpop.f32.mrf.mxu0
    %v1653 = vadd.f32 %v1403, %v1652
    %1654 = vmatprep.mubr.bf16.mxu0 0
    %1655 = vmatmul.mubr.bf16.gmra.mxu0 %v1462
    %v1656 = vpop.f32.mrf.mxu0
    %v1657 = vadd.f32 %v1399, %v1656
    %v1658 = vpop.f32.mrf.mxu0
    %v1659 = vadd.f32 %v1403, %v1658
    %v1660 = vpop.f32.mrf.mxu0
    %v1661 = vadd.f32 %v1399, %v1660
    %v1662 = vpop.f32.mrf.mxu0
    %v1663 = vadd.f32 %v1403, %v1662
    %1664 = vmatprep.mubr.bf16.mxu0 0
    %1665 = vmatmul.mubr.bf16.gmra.mxu0 %v1463
    %v1666 = vpop.f32.mrf.mxu0
    %v1667 = vadd.f32 %v1399, %v1666
    %v1668 = vpop.f32.mrf.mxu0
    %v1669 = vadd.f32 %v1403, %v1668
    %v1670 = vpop.f32.mrf.mxu0
    %v1671 = vadd.f32 %v1399, %v1670
    %v1672 = vpop.f32.mrf.mxu0
    %v1673 = vadd.f32 %v1403, %v1672
    %1674 = vmatprep.mubr.bf16.mxu0 0
    %1675 = vmatmul.mubr.bf16.gmra.mxu0 %v1464
    %v1676 = vpop.f32.mrf.mxu0
    %v1677 = vadd.f32 %v1399, %v1676
    %v1678 = vpop.f32.mrf.mxu0
    %v1679 = vadd.f32 %v1403, %v1678
    %v1680 = vpop.f32.mrf.mxu0
    %v1681 = vadd.f32 %v1399, %v1680
    %v1682 = vpop.f32.mrf.mxu0
    %v1683 = vadd.f32 %v1403, %v1682
    %1684 = vmatprep.mubr.bf16.mxu0 0
    %1685 = vmatmul.mubr.bf16.gmra.mxu0 %v1465
    %v1686 = vpop.f32.mrf.mxu0
    %v1687 = vadd.f32 %v1399, %v1686
    %v1688 = vpop.f32.mrf.mxu0
    %v1689 = vadd.f32 %v1403, %v1688
    %v1690 = vpop.f32.mrf.mxu0
    %v1691 = vadd.f32 %v1399, %v1690
    %v1692 = vpop.f32.mrf.mxu0
    %v1693 = vadd.f32 %v1403, %v1692
    %1694 = vmatprep.mubr.bf16.mxu0 0
    %1695 = vmatmul.mubr.bf16.gmra.mxu0 %v1466
    %v1696 = vpop.f32.mrf.mxu0
    %v1697 = vadd.f32 %v1399, %v1696
    %v1698 = vpop.f32.mrf.mxu0
    %v1699 = vadd.f32 %v1403, %v1698
    %v1700 = vpop.f32.mrf.mxu0
    %v1701 = vadd.f32 %v1399, %v1700
    %v1702 = vpop.f32.mrf.mxu0
    %v1703 = vadd.f32 %v1403, %v1702
    %1704 = vmatprep.mubr.bf16.mxu0 0
    %1705 = vmatmul.mubr.bf16.gmra.mxu0 %v1467
    %v1706 = vpop.f32.mrf.mxu0
    %v1707 = vadd.f32 %v1399, %v1706
    %v1708 = vpop.f32.mrf.mxu0
    %v1709 = vadd.f32 %v1403, %v1708
    %v1710 = vpop.f32.mrf.mxu0
    %v1711 = vadd.f32 %v1399, %v1710
    %v1712 = vpop.f32.mrf.mxu0
    %v1713 = vadd.f32 %v1403, %v1712
    %1714 = vmatprep.mubr.bf16.mxu0 0
    %1715 = vmatmul.mubr.bf16.gmra.mxu0 %v1468
    %v1716 = vpop.f32.mrf.mxu0
    %v1717 = vadd.f32 %v1399, %v1716
    %v1718 = vpop.f32.mrf.mxu0
    %v1719 = vadd.f32 %v1403, %v1718
    %v1720 = vpop.f32.mrf.mxu0
    %v1721 = vpop.f32.mrf.mxu0
    %1722 = vdwg.mxu0
    %v1723 = vpack.c.bf16 %v1601, %v1597
    %v1724 = vpack.c.bf16 %v1603, %v1599
    %v1725 = vpack.c.bf16 %v1611, %v1607
    %v1726 = vpack.c.bf16 %v1613, %v1609
    %v1727 = vpack.c.bf16 %v1621, %v1617
    %v1728 = vpack.c.bf16 %v1623, %v1619
    %v1729 = vpack.c.bf16 %v1631, %v1627
    %v1730 = vpack.c.bf16 %v1633, %v1629
    %v1731 = vpack.c.bf16 %v1641, %v1637
    %v1732 = vpack.c.bf16 %v1643, %v1639
    %v1733 = vpack.c.bf16 %v1651, %v1647
    %v1734 = vpack.c.bf16 %v1653, %v1649
    %v1735 = vpack.c.bf16 %v1661, %v1657
    %v1736 = vpack.c.bf16 %v1663, %v1659
    %v1737 = vpack.c.bf16 %v1671, %v1667
    %v1738 = vpack.c.bf16 %v1673, %v1669
    %v1739 = vpack.c.bf16 %v1681, %v1677
    %v1740 = vpack.c.bf16 %v1683, %v1679
    %v1741 = vpack.c.bf16 %v1691, %v1687
    %v1742 = vpack.c.bf16 %v1693, %v1689
    %v1743 = vpack.c.bf16 %v1701, %v1697
    %v1744 = vpack.c.bf16 %v1703, %v1699
    %v1745 = vpack.c.bf16 %v1711, %v1707
    %v1746 = vpack.c.bf16 %v1713, %v1709
    %v1747 = vpack.c.bf16 %v1717, %v1717
    %v1748 = vpack.c.bf16 %v1719, %v1719
    %v1775 = vunpack.c.l.b16 %v1723
    %v1776 = vunpack.c.l.b16 %v1724
    %v1777 = vunpack.c.h.b16 %v1723
    %v1778 = vunpack.c.h.b16 %v1724
    %v1779 = vunpack.c.l.b16 %v1725
    %v1780 = vunpack.c.l.b16 %v1726
    %v1781 = vunpack.c.h.b16 %v1725
    %v1782 = vunpack.c.h.b16 %v1726
    %v1783 = vunpack.c.l.b16 %v1727
    %v1784 = vunpack.c.l.b16 %v1728
    %v1785 = vunpack.c.h.b16 %v1727
    %v1786 = vunpack.c.h.b16 %v1728
    %v1787 = vunpack.c.l.b16 %v1729
    %v1788 = vunpack.c.l.b16 %v1730
    %v1789 = vunpack.c.h.b16 %v1729
    %v1790 = vunpack.c.h.b16 %v1730
    %v1791 = vunpack.c.l.b16 %v1731
    %v1792 = vunpack.c.l.b16 %v1732
    %v1793 = vunpack.c.h.b16 %v1731
    %v1794 = vunpack.c.h.b16 %v1732
    %v1795 = vunpack.c.l.b16 %v1733
    %v1796 = vunpack.c.l.b16 %v1734
    %v1797 = vunpack.c.h.b16 %v1733
    %v1798 = vunpack.c.h.b16 %v1734
    %v1799 = vunpack.c.l.b16 %v1735
    %v1800 = vunpack.c.l.b16 %v1736
    %v1801 = vunpack.c.h.b16 %v1735
    %v1802 = vunpack.c.h.b16 %v1736
    %v1803 = vunpack.c.l.b16 %v1737
    %v1804 = vunpack.c.l.b16 %v1738
    %v1805 = vunpack.c.h.b16 %v1737
    %v1806 = vunpack.c.h.b16 %v1738
    %v1807 = vunpack.c.l.b16 %v1739
    %v1808 = vunpack.c.l.b16 %v1740
    %v1809 = vunpack.c.h.b16 %v1739
    %v1810 = vunpack.c.h.b16 %v1740
    %v1811 = vunpack.c.l.b16 %v1741
    %v1812 = vunpack.c.l.b16 %v1742
    %v1813 = vunpack.c.h.b16 %v1741
    %v1814 = vunpack.c.h.b16 %v1742
    %v1815 = vunpack.c.l.b16 %v1743
    %v1816 = vunpack.c.l.b16 %v1744
    %v1817 = vunpack.c.h.b16 %v1743
    %v1818 = vunpack.c.h.b16 %v1744
    %v1819 = vunpack.c.l.b16 %v1745
    %v1820 = vunpack.c.l.b16 %v1746
    %v1821 = vunpack.c.h.b16 %v1745
    %v1822 = vunpack.c.h.b16 %v1746
    %v1823 = vunpack.c.l.b16 %v1747
    %v1824 = vunpack.c.l.b16 %v1748
    %v1825 = vpack.c.b16 %v1776, %v1775
    %v1826 = vpack.c.b16 %v1778, %v1777
    %v1827 = vpack.c.b16 %v1780, %v1779
    %v1828 = vpack.c.b16 %v1782, %v1781
    %v1829 = vpack.c.b16 %v1784, %v1783
    %v1830 = vpack.c.b16 %v1786, %v1785
    %v1831 = vpack.c.b16 %v1788, %v1787
    %v1832 = vpack.c.b16 %v1790, %v1789
    %v1833 = vpack.c.b16 %v1792, %v1791
    %v1834 = vpack.c.b16 %v1794, %v1793
    %v1835 = vpack.c.b16 %v1796, %v1795
    %v1836 = vpack.c.b16 %v1798, %v1797
    %v1837 = vpack.c.b16 %v1800, %v1799
    %v1838 = vpack.c.b16 %v1802, %v1801
    %v1839 = vpack.c.b16 %v1804, %v1803
    %v1840 = vpack.c.b16 %v1806, %v1805
    %v1841 = vpack.c.b16 %v1808, %v1807
    %v1842 = vpack.c.b16 %v1810, %v1809
    %v1843 = vpack.c.b16 %v1812, %v1811
    %v1844 = vpack.c.b16 %v1814, %v1813
    %v1845 = vpack.c.b16 %v1816, %v1815
    %v1846 = vpack.c.b16 %v1818, %v1817
    %v1847 = vpack.c.b16 %v1820, %v1819
    %v1848 = vpack.c.b16 %v1822, %v1821
    %v1849 = vpack.c.b16 %v1824, %v1823
    %1875 = vst [vmem:[#allocation12] sm:$0xff] %v1825
    %1876 = vst [vmem:[#allocation12 + $0x8] sm:$0xff] %v1826
    %1877 = vst [vmem:[#allocation12 + $0x10] sm:$0xff] %v1827
    %1878 = vst [vmem:[#allocation12 + $0x18] sm:$0xff] %v1828
    %1879 = vst [vmem:[#allocation12 + $0x20] sm:$0xff] %v1829
    %1880 = vst [vmem:[#allocation12 + $0x28] sm:$0xff] %v1830
    %1881 = vst [vmem:[#allocation12 + $0x30] sm:$0xff] %v1831
    %1882 = vst [vmem:[#allocation12 + $0x38] sm:$0xff] %v1832
    %1883 = vst [vmem:[#allocation12 + $0x40] sm:$0xff] %v1833
    %1884 = vst [vmem:[#allocation12 + $0x48] sm:$0xff] %v1834
    %1885 = vst [vmem:[#allocation12 + $0x50] sm:$0xff] %v1835
    %1886 = vst [vmem:[#allocation12 + $0x58] sm:$0xff] %v1836
    %1887 = vst [vmem:[#allocation12 + $0x60] sm:$0xff] %v1837
    %1888 = vst [vmem:[#allocation12 + $0x68] sm:$0xff] %v1838
    %1889 = vst [vmem:[#allocation12 + $0x70] sm:$0xff] %v1839
    %1890 = vst [vmem:[#allocation12 + $0x78] sm:$0xff] %v1840
    %1891 = vst [vmem:[#allocation12 + $0x80] sm:$0xff] %v1841
    %1892 = vst [vmem:[#allocation12 + $0x88] sm:$0xff] %v1842
    %1893 = vst [vmem:[#allocation12 + $0x90] sm:$0xff] %v1843
    %1894 = vst [vmem:[#allocation12 + $0x98] sm:$0xff] %v1844
    %1895 = vst [vmem:[#allocation12 + $0xa0] sm:$0xff] %v1845
    %1896 = vst [vmem:[#allocation12 + $0xa8] sm:$0xff] %v1846
    %1897 = vst [vmem:[#allocation12 + $0xb0] sm:$0xff] %v1847
    %1898 = vst [vmem:[#allocation12 + $0xb8] sm:$0xff] %v1848
    %1899 = vst [vmem:[#allocation12 + $0xc0] sm:$0xff] %v1849
    // Predicated region
    $region62: #{tpu_custom_call.1} parent=1 // pred_check
      _
    $region63: #{tpu_custom_call.1} parent=1 // pred_check_branch
      %1901 = sbr.rel (0) target = $region65
    $region64: #{tpu_custom_call.1} parent=1 // pred_region
      %s1903 = ssub.s32 3200, 3200
      %1904 = vsyncadd [#allocation5], %s1903
      %s1905 = sshll.u32 [#allocation12], 4
      %s1906 = int_to_ptr.vmem [resolvable:$true] %s1905
      %1911 = dma.vmem_to_hbm [thread:$0]  %s1906, 3200, %s9, [#allocation5], 128, 128, 8
    $region65: #{tpu_custom_call.1} parent=1 // pred_fallthru
      _
    // Predicated region
    $region66: #{tpu_custom_call.1} parent=1 // pred_check
      _
    $region67: #{tpu_custom_call.1} parent=1 // pred_check_branch
      %1913 = sbr.rel (0) target = $region69
    $region68: #{tpu_custom_call.1} parent=1 // pred_region
      %1914 = dma.done [#allocation5], 3200
    $region69: #{tpu_custom_call.1} parent=1 // pred_fallthru
      _
    %1915 = vsyncpa [#allocation4], 1
    %1916 = vsyncpa [#allocation7], 1
    %1917 = vsyncpa [#allocation10], 1
    %1918 = vsyncpa [#allocation5], 1

</llo_original>
